<compile_context>
chip_gen: v7x
topology: tpu7x:2x2x1
jax: 0.10.0
libtpu: 0.0.40
codegen_flags: <defaults>
</compile_context>

<pallas_src>
import functools

import jax
import jax.numpy as jnp
from jax import lax
from jax.experimental import pallas as pl
from jax.experimental.pallas import tpu as pltpu

_BN_EPS = 1e-5
_LANE = 128
_VMEM_LIMIT = 32 * 1024 * 1024


def _round_up(x, m):
    return (x + m - 1) // m * m


def _cdiv(a, b):
    return (a + b - 1) // b


# ------------------------------ geometry ------------------------------------

def _geometry(B, D, H, W, tile_n_max):
    assert tile_n_max % _LANE == 0 and tile_n_max >= 512
    Dp, Hp, Wp = D + 2, H + 2, W + 2
    n_spatial = B * Dp * Hp * Wp                    # zero-padded voxels, flat
    # aim for >=4 core tiles (v7x megacore + DMA prefetch), cap the tile size
    tile_n = min(tile_n_max, max(512, _round_up(_cdiv(n_spatial, 4), _LANE)))
    nt_raw = _cdiv(n_spatial, tile_n)
    nc = 2 if nt_raw >= 2 else 1                    # "parallel" chunks (v7x TCs)
    tpc = _cdiv(nt_raw, nc)                         # tiles per chunk (sequential)
    nt = nc * tpc
    n_core = nt * tile_n
    maxd = Hp * Wp + Wp + 1                         # largest |tap shift| (3x3x3)
    halo = _round_up(maxd, _LANE)                   # lane-aligned guard / halo
    return dict(B=B, D=D, H=H, W=W, Dp=Dp, Hp=Hp, Wp=Wp,
                n_spatial=n_spatial, tile_n=tile_n, NC=nc, TPC=tpc, NT=nt,
                n_core=n_core, halo=halo, n_total=n_core + 2 * halo,
                count=float(B * D * H * W))


def _tap_offsets(geom):
    """In-window lane offsets of the 27 taps of a 3x3x3 conv."""
    Hp, Wp, halo = geom["Hp"], geom["Wp"], geom["halo"]
    return tuple(halo + dd * Hp * Wp + dh * Wp + dw
                 for dd in (-1, 0, 1) for dh in (-1, 0, 1) for dw in (-1, 0, 1))


def _fold_weight_grouped(w, cin_p, group):
    """(Cout,Cin,kd,kh,kw) -> (K//group, Cout, group*cin_p) bf16, tap-major."""
    cout, cin = w.shape[0], w.shape[1]
    k = w.shape[2] * w.shape[3] * w.shape[4]
    assert k % group == 0
    wt = jnp.transpose(w, (0, 2, 3, 4, 1)).reshape(cout, k, cin)
    if cin_p != cin:
        wt = jnp.pad(wt, ((0, 0), (0, 0), (0, cin_p - cin)))
    wt = wt.reshape(cout, k // group, group * cin_p)
    return jnp.transpose(wt, (1, 0, 2)).astype(jnp.bfloat16)


# ----------------------------- Pallas kernels -------------------------------

def _conv_stats_window_kernel(x_hbm, w_ref, mask_ref, y_ref, st_ref,
                              xh_ref, sem, *, tile_n, halo, offsets, group, tpc):
    """3x3x3 conv tile: double-buffered window DMA, grouped bf16 tap GEMMs,
    f32 conv output + masked per-tile BN partial (sum, sum-of-squares)."""
    c = pl.program_id(0)          # "parallel" chunk (megacore)
    t = pl.program_id(1)          # "arbitrary" tile within chunk (sequential)
    lin = c * tpc + t
    width = tile_n + 2 * halo
    cout = w_ref.shape[1]

    def window_copy(tile_idx, slot):
        start = pl.multiple_of(tile_idx * tile_n, _LANE)
        return pltpu.make_async_copy(
            x_hbm.at[:, pl.ds(start, width)], xh_ref.at[slot], sem.at[slot])

    @pl.when(t == 0)                      # prime slot 0 at each chunk start
    def _():
        window_copy(lin, 0).start()

    slot = t & 1
    window_copy(lin, slot).wait()

    @pl.when(t + 1 < tpc)                 # prefetch next tile of this chunk
    def _():
        window_copy(lin + 1, 1 - slot).start()

    xw = xh_ref[slot]                                        # (cin_p, width) bf16
    acc = jnp.zeros((cout, tile_n), jnp.float32)
    ngroups = w_ref.shape[0]
    for g in range(ngroups):                                 # 3 groups of 9 taps
        offs = offsets[g * group:(g + 1) * group]
        taps = [xw[:, o:o + tile_n] for o in offs]
        xt = taps[0] if len(taps) == 1 else jnp.concatenate(taps, axis=0)
        acc = acc + jnp.dot(w_ref[g], xt, preferred_element_type=jnp.float32)

    y_ref[...] = acc
    interior = mask_ref[...] > 0.5                           # (1, tile_n)
    ym = jnp.where(interior, acc, 0.0)
    s1 = jnp.sum(ym, axis=1, keepdims=True)
    s2 = jnp.sum(ym * ym, axis=1, keepdims=True)
    st_ref[...] = jnp.concatenate([s1, s2], axis=1)[None]    # (1, Cout, 2)


def _conv_stats_1x1_kernel(x_ref, w_ref, mask_ref, y_ref, st_ref):
    """1x1x1 conv tile (plain BlockSpec pipelining) + BN partial stats."""
    y = jnp.dot(w_ref[0], x_ref[...], preferred_element_type=jnp.float32)
    y_ref[...] = y
    interior = mask_ref[...] > 0.5
    ym = jnp.where(interior, y, 0.0)
    s1 = jnp.sum(ym, axis=1, keepdims=True)
    s2 = jnp.sum(ym * ym, axis=1, keepdims=True)
    st_ref[...] = jnp.concatenate([s1, s2], axis=1)[None]


def _bn_elu_kernel(y_ref, scale_ref, shift_ref, mask_ref, *rest,
                   row0, rows, has_residual):
    """Elementwise epilogue: BN (batch stats) + ELU (+ residual) + zero mask."""
    if has_residual:
        res_ref, o_ref = rest
    else:
        (o_ref,) = rest
    y = y_ref[row0:row0 + rows, :]                           # (rows, tile_n) f32
    z = y * scale_ref[...] + shift_ref[...]
    # ELU(alpha=1); exp only on the clamped-negative branch.
    z = jnp.where(z > 0, z, jnp.exp(jnp.minimum(z, 0.0)) - 1.0)
    if has_residual:
        z = z + res_ref[...]
    # zero conv-padding / round-up tail so this is a valid next-layer input
    z = jnp.where(mask_ref[...] > 0.5, z, 0.0)
    o_ref[...] = z.astype(o_ref.dtype)


# --------------------------- pallas_call wrappers ----------------------------

def _conv_stats_window(x_slab, wg, mask, geom):
    cin_p = x_slab.shape[0]
    ngroups, cout, gk = wg.shape
    tile_n, halo = geom["tile_n"], geom["halo"]
    NC, TPC, NT, n_core = geom["NC"], geom["TPC"], geom["NT"], geom["n_core"]
    width = tile_n + 2 * halo
    offsets = _tap_offsets(geom)
    kernel = functools.partial(
        _conv_stats_window_kernel, tile_n=tile_n, halo=halo,
        offsets=offsets, group=len(offsets) // ngroups, tpc=TPC)
    return pl.pallas_call(
        kernel,
        out_shape=(jax.ShapeDtypeStruct((cout, n_core), jnp.float32),
                   jax.ShapeDtypeStruct((NT, cout, 2), jnp.float32)),
        grid_spec=pltpu.PrefetchScalarGridSpec(
            num_scalar_prefetch=0,
            grid=(NC, TPC),
            in_specs=[
                pl.BlockSpec(memory_space=pl.ANY),                       # slab (HBM)
                pl.BlockSpec((ngroups, cout, gk), lambda c, t: (0, 0, 0)),
                pl.BlockSpec((1, tile_n), lambda c, t: (0, c * TPC + t)),
            ],
            out_specs=[
                pl.BlockSpec((cout, tile_n), lambda c, t: (0, c * TPC + t)),
                pl.BlockSpec((1, cout, 2), lambda c, t: (c * TPC + t, 0, 0)),
            ],
            scratch_shapes=[
                pltpu.VMEM((2, cin_p, width), jnp.bfloat16),   # double-buffered window
                pltpu.SemaphoreType.DMA((2,)),
            ],
        ),
        compiler_params=pltpu.CompilerParams(
            dimension_semantics=("parallel", "arbitrary"),
            vmem_limit_bytes=_VMEM_LIMIT),
    )(x_slab, wg, mask)


def _conv_stats_1x1(x_core, w1, mask, geom):
    cin = x_core.shape[0]
    cout = w1.shape[1]
    tile_n, NT, n_core = geom["tile_n"], geom["NT"], geom["n_core"]
    return pl.pallas_call(
        _conv_stats_1x1_kernel,
        out_shape=(jax.ShapeDtypeStruct((cout, n_core), jnp.float32),
                   jax.ShapeDtypeStruct((NT, cout, 2), jnp.float32)),
        grid_spec=pltpu.PrefetchScalarGridSpec(
            num_scalar_prefetch=0,
            grid=(NT,),
            in_specs=[
                pl.BlockSpec((cin, tile_n), lambda i: (0, i)),
                pl.BlockSpec((1, cout, cin), lambda i: (0, 0, 0)),
                pl.BlockSpec((1, tile_n), lambda i: (0, i)),
            ],
            out_specs=[
                pl.BlockSpec((cout, tile_n), lambda i: (0, i)),
                pl.BlockSpec((1, cout, 2), lambda i: (i, 0, 0)),
            ],
        ),
        compiler_params=pltpu.CompilerParams(
            dimension_semantics=("parallel",),
            vmem_limit_bytes=_VMEM_LIMIT),
    )(x_core, w1, mask)


def _bn_elu_apply(y, scale, shift, mask, geom, *, row0=0, rows=None,
                  residual=None, out_dtype=jnp.bfloat16):
    total_rows = y.shape[0]
    rows = total_rows if rows is None else rows
    tile_n, NT, n_core = geom["tile_n"], geom["NT"], geom["n_core"]
    kernel = functools.partial(_bn_elu_kernel, row0=row0, rows=rows,
                               has_residual=residual is not None)
    in_specs = [
        pl.BlockSpec((total_rows, tile_n), lambda i: (0, i)),   # conv output
        pl.BlockSpec((rows, 1), lambda i: (0, 0)),              # gamma * rstd
        pl.BlockSpec((rows, 1), lambda i: (0, 0)),              # beta - mean*scale
        pl.BlockSpec((1, tile_n), lambda i: (0, i)),            # interior mask
    ]
    args = [y, scale, shift, mask]
    if residual is not None:
        in_specs.append(pl.BlockSpec((rows, tile_n), lambda i: (0, i)))
        args.append(residual)
    return pl.pallas_call(
        kernel,
        out_shape=jax.ShapeDtypeStruct((rows, n_core), out_dtype),
        grid_spec=pltpu.PrefetchScalarGridSpec(
            num_scalar_prefetch=0,
            grid=(NT,),
            in_specs=in_specs,
            out_specs=pl.BlockSpec((rows, tile_n), lambda i: (0, i)),
        ),
        compiler_params=pltpu.CompilerParams(
            dimension_semantics=("parallel",),
            vmem_limit_bytes=_VMEM_LIMIT),
    )(*args)


def _bn_affine(stats, gamma, beta, count):
    s = jnp.sum(stats, axis=0)                    # (Cout, 2) = (sum, sum of sq)
    mean = s[:, 0] / count
    var = jnp.maximum(s[:, 1] / count - mean * mean, 0.0)   # biased variance
    rstd = lax.rsqrt(var + _BN_EPS)
    scale = gamma * rstd
    shift = beta - mean * scale
    return (scale.reshape(-1, 1).astype(jnp.float32),
            shift.reshape(-1, 1).astype(jnp.float32))


# ------------------------------- forward -------------------------------------

def voxception_resnet_forward(x_ncdhw, params, *, tile_n_max=2048):
    B, C, D, H, W = x_ncdhw.shape
    assert C % 2 == 0
    half = C // 2
    geom = _geometry(B, D, H, W, tile_n_max)
    n_spatial, n_core, halo = geom["n_spatial"], geom["n_core"], geom["halo"]
    Dp, Hp, Wp, count = geom["Dp"], geom["Hp"], geom["Wp"], geom["count"]
    cin_p = _round_up(C, 8)

    # Channels-first, conv zero padding of 1, flattened, lane-padded to n_core.
    xc = jnp.transpose(x_ncdhw, (1, 0, 2, 3, 4)).astype(jnp.float32)
    xp = jnp.pad(xc, ((0, 0), (0, 0), (1, 1), (1, 1), (1, 1))).reshape(C, n_spatial)
    x32 = jnp.pad(xp, ((0, 0), (0, n_core - n_spatial)))       # residual source
    x16 = x32.astype(jnp.bfloat16)

    # Interior mask: 1 on real voxels, 0 on conv padding / round-up tail.
    mi = jnp.zeros((B, Dp, Hp, Wp), jnp.float32)
    mi = mi.at[:, 1:D + 1, 1:H + 1, 1:W + 1].set(1.0)
    mask = jnp.pad(mi.reshape(1, n_spatial), ((0, 0), (0, n_core - n_spatial)))

    def slab(a):  # (c, n_core) bf16 -> (cin_p, n_core + 2*halo) with zero guards
        return jnp.pad(a, ((0, cin_p - a.shape[0]), (halo, halo)))

    p1, p2 = params["p1"], params["p2"]

    # ---- L0: fused p1[0] (3x3x3) + p2[0] (1x1x1 embedded as centre tap) -----
    w_p20_emb = jnp.zeros((half, C, 3, 3, 3), jnp.float32)
    w_p20_emb = w_p20_emb.at[:, :, 1, 1, 1].set(p2[0]["w"][:, :, 0, 0, 0])
    w_l0 = jnp.concatenate([p1[0]["w"], w_p20_emb], axis=0)        # (C, C, 3,3,3)
    g_l0 = jnp.concatenate([p1[0]["g"], p2[0]["g"]])
    b_l0 = jnp.concatenate([p1[0]["beta"], p2[0]["beta"]])
    y0, st0 = _conv_stats_window(slab(x16), _fold_weight_grouped(w_l0, cin_p, 9),
                                 mask, geom)
    sc0, sh0 = _bn_affine(st0, g_l0, b_l0, count)
    a0 = _bn_elu_apply(y0, sc0, sh0, mask, geom, out_dtype=jnp.bfloat16)

    # ---- L1: fused block-diagonal p1[1] + p2[1] (both 3x3x3) ----------------
    w_l1 = jnp.zeros((C, C, 3, 3, 3), jnp.float32)
    w_l1 = w_l1.at[:half, :half].set(p1[1]["w"])
    w_l1 = w_l1.at[half:, half:].set(p2[1]["w"])
    g_l1 = jnp.concatenate([p1[1]["g"], p2[1]["g"]])
    b_l1 = jnp.concatenate([p1[1]["beta"], p2[1]["beta"]])
    y1, st1 = _conv_stats_window(slab(a0), _fold_weight_grouped(w_l1, cin_p, 9),
                                 mask, geom)
    sc1, sh1 = _bn_affine(st1, g_l1, b_l1, count)
    # path1 final (channels 0:half): BN + ELU + residual x[:half], f32 output.
    p1_out = _bn_elu_apply(y1, sc1[:half], sh1[:half], mask, geom,
                           row0=0, rows=half, residual=x32[:half],
                           out_dtype=jnp.float32)
    # path2 intermediate (channels half:): BN + ELU, bf16 for the next conv.
    a2 = _bn_elu_apply(y1, sc1[half:], sh1[half:], mask, geom,
                       row0=half, rows=half, out_dtype=jnp.bfloat16)

    # ---- L2: p2[2] (1x1x1), BlockSpec-pipelined ----------------------------
    w_l2 = _fold_weight_grouped(p2[2]["w"], half, 1)               # (1, half, half)
    y2, st2 = _conv_stats_1x1(a2, w_l2, mask, geom)
    sc2, sh2 = _bn_affine(st2, p2[2]["g"], p2[2]["beta"], count)
    p2_out = _bn_elu_apply(y2, sc2, sh2, mask, geom,
                           residual=x32[half:], out_dtype=jnp.float32)

    # out = input + concat(path1, path2); residual adds already fused above.
    out = jnp.concatenate([p1_out, p2_out], axis=0)                # (C, n_core)
    out = out[:, :n_spatial].reshape(C, B, Dp, Hp, Wp)
    out = out[:, :, 1:D + 1, 1:H + 1, 1:W + 1]                     # strip conv pad
    # TODO(synk): models.sca_3d.SCA3D(channel=C, reduction=1) source not provided;
    # the attention step is omitted and the pre-attention tensor is returned.
    return jnp.transpose(out, (1, 0, 2, 3, 4))                     # back to NCDHW


# -------------------------------- params --------------------------------------

def _make_layer(key, cin, cout, ksize):
    kw, kg, kb = jax.random.split(key, 3)
    return dict(
        # Conv3d bias omitted: cancelled exactly by training-mode BatchNorm.
        w=0.1 * jax.random.normal(kw, (cout, cin, ksize, ksize, ksize), jnp.float32),
        g=1.0 + 0.1 * jax.random.normal(kg, (cout,), jnp.float32),
        beta=0.01 * jax.random.normal(kb, (cout,), jnp.float32),
    )


def init_params(key, process_channels):
    h = process_channels // 2
    keys = jax.random.split(key, 5)
    return {
        "p1": [_make_layer(keys[0], process_channels, h, 3),
               _make_layer(keys[1], h, h, 3)],
        "p2": [_make_layer(keys[2], process_channels, h, 1),
               _make_layer(keys[3], h, h, 3),
               _make_layer(keys[4], h, h, 1)],
    }


# --------------------------------- main ---------------------------------------

if __name__ == "__main__":
    key = jax.random.PRNGKey(0)
    k_x, k_p = jax.random.split(key)

    B, C, D, H, W = 2, 8, 8, 8, 8            # process_channels = 8
    x = jax.random.normal(k_x, (B, C, D, H, W), jnp.float32)
    params = init_params(k_p, C)

    fwd = jax.jit(functools.partial(voxception_resnet_forward, tile_n_max=2048))
    out = jax.block_until_ready(fwd(x, params))
    assert out.shape == (B, C, D, H, W)
    assert bool(jnp.all(jnp.isfinite(out)))
    print("KERNEL_OK")
</pallas_src>

<mosaic_0001>
module attributes {stable_mosaic.version = 11 : i64} {
  func.func @_conv_stats_window_kernel(%arg0: i32, %arg1: i32, %arg2: memref<8x2304xbf16, #tpu.memory_space<any>>, %arg3: memref<3x8x72xbf16, #tpu.memory_space<vmem>>, %arg4: memref<1x512xf32, #tpu.memory_space<vmem>>, %arg5: memref<8x512xf32, #tpu.memory_space<vmem>>, %arg6: memref<1x8x2xf32, #tpu.memory_space<vmem>>, %arg7: memref<2x8x768xbf16, #tpu.memory_space<vmem>>, %arg8: memref<2x!tpu.dma_semaphore, #tpu.memory_space<semaphore_mem>>) attributes {dimension_semantics = [#tpu.dimension_semantics<parallel>, #tpu.dimension_semantics<arbitrary>], iteration_bounds = array<i64: 2, 2>, scalar_prefetch = 0 : i64, scratch_operands = 2 : i64, tpu.core_type = #tpu.core_type<tc>, window_params = [{}, {pipeline_mode = #tpu.pipeline_mode<synchronous>, transform_indices = @transform_1, window_bounds = array<i64: 3, 8, 72>}, {transform_indices = @transform_2, window_bounds = array<i64: 1, 512>}, {transform_indices = @transform_3, window_bounds = array<i64: 8, 512>}, {transform_indices = @transform_4, window_bounds = array<i64: 1, 8, 2>}]} {
    %c2_i32 = arith.constant 2 : i32
    %0 = arith.muli %arg0, %c2_i32 : i32
    %1 = arith.addi %0, %arg1 : i32
    %c0_i32 = arith.constant 0 : i32
    %2 = arith.cmpi eq, %arg1, %c0_i32 : i32
    %3 = arith.extui %2 : i1 to i32
    %c0_i32_0 = arith.constant 0 : i32
    %4 = arith.cmpi ne, %3, %c0_i32_0 : i32
    scf.if %4 {
      %c512_i32_29 = arith.constant 512 : i32
      %79 = arith.muli %1, %c512_i32_29 : i32
      %80 = tpu.assume_multiple %79, 128 : i32
      %c0_i32_30 = arith.constant 0 : i32
      %c0_i32_31 = arith.constant 0 : i32
      %c0_i32_32 = arith.constant 0 : i32
      %81 = tpu.memref_slice %arg2[%c0_i32_32, %80] : memref<8x2304xbf16, #tpu.memory_space<any>> -> memref<8x768xbf16, #tpu.memory_space<any>>
      %c0_i32_33 = arith.constant 0 : i32
      %c0_i32_34 = arith.constant 0 : i32
      %82 = tpu.memref_slice %arg7[%c0_i32_30, %c0_i32_33, %c0_i32_34] : memref<2x8x768xbf16, #tpu.memory_space<vmem>> -> memref<1x8x768xbf16, #tpu.memory_space<vmem>>
      %83 = tpu.memref_squeeze %82 : memref<1x8x768xbf16, #tpu.memory_space<vmem>> -> memref<8x768xbf16, #tpu.memory_space<vmem>>
      %84 = tpu.memref_slice %arg8[%c0_i32_31] : memref<2x!tpu.dma_semaphore, #tpu.memory_space<semaphore_mem>> -> memref<1x!tpu.dma_semaphore, #tpu.memory_space<semaphore_mem>>
      %85 = tpu.memref_squeeze %84 : memref<1x!tpu.dma_semaphore, #tpu.memory_space<semaphore_mem>> -> memref<!tpu.dma_semaphore, #tpu.memory_space<semaphore_mem>>
      tpu.enqueue_dma source(%81 : memref<8x768xbf16, #tpu.memory_space<any>>) target(%83 : memref<8x768xbf16, #tpu.memory_space<vmem>>) target_semaphore(%85 : memref<!tpu.dma_semaphore, #tpu.memory_space<semaphore_mem>>)
    } else {
    }
    %c1_i32 = arith.constant 1 : i32
    %5 = arith.andi %arg1, %c1_i32 : i32
    %c512_i32 = arith.constant 512 : i32
    %6 = arith.muli %1, %c512_i32 : i32
    %7 = tpu.assume_multiple %6, 128 : i32
    %c0_i32_1 = arith.constant 0 : i32
    %8 = tpu.memref_slice %arg2[%c0_i32_1, %7] : memref<8x2304xbf16, #tpu.memory_space<any>> -> memref<8x768xbf16, #tpu.memory_space<any>>
    %c0_i32_2 = arith.constant 0 : i32
    %c0_i32_3 = arith.constant 0 : i32
    %9 = tpu.memref_slice %arg7[%5, %c0_i32_2, %c0_i32_3] : memref<2x8x768xbf16, #tpu.memory_space<vmem>> -> memref<1x8x768xbf16, #tpu.memory_space<vmem>>
    %10 = tpu.memref_squeeze %9 : memref<1x8x768xbf16, #tpu.memory_space<vmem>> -> memref<8x768xbf16, #tpu.memory_space<vmem>>
    %11 = tpu.memref_slice %arg8[%5] : memref<2x!tpu.dma_semaphore, #tpu.memory_space<semaphore_mem>> -> memref<1x!tpu.dma_semaphore, #tpu.memory_space<semaphore_mem>>
    %12 = tpu.memref_squeeze %11 : memref<1x!tpu.dma_semaphore, #tpu.memory_space<semaphore_mem>> -> memref<!tpu.dma_semaphore, #tpu.memory_space<semaphore_mem>>
    tpu.wait_dma2 semaphore(%12 : memref<!tpu.dma_semaphore, #tpu.memory_space<semaphore_mem>>) src(%8 : memref<8x768xbf16, #tpu.memory_space<any>>) dst(%10 : memref<8x768xbf16, #tpu.memory_space<vmem>>)
    %c1_i32_4 = arith.constant 1 : i32
    %13 = arith.addi %arg1, %c1_i32_4 : i32
    %c2_i32_5 = arith.constant 2 : i32
    %14 = arith.cmpi slt, %13, %c2_i32_5 : i32
    %15 = arith.extui %14 : i1 to i32
    %c0_i32_6 = arith.constant 0 : i32
    %16 = arith.cmpi ne, %15, %c0_i32_6 : i32
    scf.if %16 {
      %c1_i32_29 = arith.constant 1 : i32
      %79 = arith.addi %1, %c1_i32_29 : i32
      %c1_i32_30 = arith.constant 1 : i32
      %80 = arith.subi %c1_i32_30, %5 : i32
      %c512_i32_31 = arith.constant 512 : i32
      %81 = arith.muli %79, %c512_i32_31 : i32
      %82 = tpu.assume_multiple %81, 128 : i32
      %c0_i32_32 = arith.constant 0 : i32
      %83 = tpu.memref_slice %arg2[%c0_i32_32, %82] : memref<8x2304xbf16, #tpu.memory_space<any>> -> memref<8x768xbf16, #tpu.memory_space<any>>
      %c0_i32_33 = arith.constant 0 : i32
      %c0_i32_34 = arith.constant 0 : i32
      %84 = tpu.memref_slice %arg7[%80, %c0_i32_33, %c0_i32_34] : memref<2x8x768xbf16, #tpu.memory_space<vmem>> -> memref<1x8x768xbf16, #tpu.memory_space<vmem>>
      %85 = tpu.memref_squeeze %84 : memref<1x8x768xbf16, #tpu.memory_space<vmem>> -> memref<8x768xbf16, #tpu.memory_space<vmem>>
      %86 = tpu.memref_slice %arg8[%80] : memref<2x!tpu.dma_semaphore, #tpu.memory_space<semaphore_mem>> -> memref<1x!tpu.dma_semaphore, #tpu.memory_space<semaphore_mem>>
      %87 = tpu.memref_squeeze %86 : memref<1x!tpu.dma_semaphore, #tpu.memory_space<semaphore_mem>> -> memref<!tpu.dma_semaphore, #tpu.memory_space<semaphore_mem>>
      tpu.enqueue_dma source(%83 : memref<8x768xbf16, #tpu.memory_space<any>>) target(%85 : memref<8x768xbf16, #tpu.memory_space<vmem>>) target_semaphore(%87 : memref<!tpu.dma_semaphore, #tpu.memory_space<semaphore_mem>>)
    } else {
    }
    %17 = arith.index_cast %5 : i32 to index
    %c0 = arith.constant 0 : index
    %c0_7 = arith.constant 0 : index
    %18 = vector.load %arg7[%17, %c0, %c0_7] : memref<2x8x768xbf16, #tpu.memory_space<vmem>>, vector<1x8x768xbf16>
    %19 = vector.shape_cast %18 : vector<1x8x768xbf16> to vector<8x768xbf16>
    %cst = arith.constant 0.000000e+00 : f32
    %20 = vector.broadcast %cst : f32 to vector<8x512xf32>
    %21 = vector.extract_strided_slice %19 {offsets = [0, 17], sizes = [8, 512], strides = [1, 1]} : vector<8x768xbf16> to vector<8x512xbf16>
    %22 = vector.extract_strided_slice %19 {offsets = [0, 18], sizes = [8, 512], strides = [1, 1]} : vector<8x768xbf16> to vector<8x512xbf16>
    %23 = vector.extract_strided_slice %19 {offsets = [0, 19], sizes = [8, 512], strides = [1, 1]} : vector<8x768xbf16> to vector<8x512xbf16>
    %24 = vector.extract_strided_slice %19 {offsets = [0, 27], sizes = [8, 512], strides = [1, 1]} : vector<8x768xbf16> to vector<8x512xbf16>
    %25 = vector.extract_strided_slice %19 {offsets = [0, 28], sizes = [8, 512], strides = [1, 1]} : vector<8x768xbf16> to vector<8x512xbf16>
    %26 = vector.extract_strided_slice %19 {offsets = [0, 29], sizes = [8, 512], strides = [1, 1]} : vector<8x768xbf16> to vector<8x512xbf16>
    %27 = vector.extract_strided_slice %19 {offsets = [0, 37], sizes = [8, 512], strides = [1, 1]} : vector<8x768xbf16> to vector<8x512xbf16>
    %28 = vector.extract_strided_slice %19 {offsets = [0, 38], sizes = [8, 512], strides = [1, 1]} : vector<8x768xbf16> to vector<8x512xbf16>
    %29 = vector.extract_strided_slice %19 {offsets = [0, 39], sizes = [8, 512], strides = [1, 1]} : vector<8x768xbf16> to vector<8x512xbf16>
    %30 = tpu.concatenate %21, %22, %23, %24, %25, %26, %27, %28, %29 in 0 : vector<8x512xbf16>, vector<8x512xbf16>, vector<8x512xbf16>, vector<8x512xbf16>, vector<8x512xbf16>, vector<8x512xbf16>, vector<8x512xbf16>, vector<8x512xbf16>, vector<8x512xbf16> -> vector<72x512xbf16>
    %c0_8 = arith.constant 0 : index
    %c0_9 = arith.constant 0 : index
    %c0_10 = arith.constant 0 : index
    %31 = vector.load %arg3[%c0_8, %c0_9, %c0_10] : memref<3x8x72xbf16, #tpu.memory_space<vmem>>, vector<1x8x72xbf16>
    %32 = vector.shape_cast %31 : vector<1x8x72xbf16> to vector<8x72xbf16>
    %cst_11 = arith.constant dense<0.000000e+00> : vector<8x512xf32>
    %33 = tpu.matmul %32, %30, %cst_11 {dimension_numbers = #tpu.dot_dimension_numbers<[1], [0], [0], [1], [0, 0, 1, 1], [], []>} : vector<8x72xbf16>, vector<72x512xbf16>, vector<8x512xf32> -> vector<8x512xf32>
    %34 = arith.addf %20, %33 : vector<8x512xf32>
    %35 = vector.extract_strided_slice %19 {offsets = [0, 117], sizes = [8, 512], strides = [1, 1]} : vector<8x768xbf16> to vector<8x512xbf16>
    %36 = vector.extract_strided_slice %19 {offsets = [0, 118], sizes = [8, 512], strides = [1, 1]} : vector<8x768xbf16> to vector<8x512xbf16>
    %37 = vector.extract_strided_slice %19 {offsets = [0, 119], sizes = [8, 512], strides = [1, 1]} : vector<8x768xbf16> to vector<8x512xbf16>
    %38 = vector.extract_strided_slice %19 {offsets = [0, 127], sizes = [8, 512], strides = [1, 1]} : vector<8x768xbf16> to vector<8x512xbf16>
    %39 = vector.extract_strided_slice %19 {offsets = [0, 128], sizes = [8, 512], strides = [1, 1]} : vector<8x768xbf16> to vector<8x512xbf16>
    %40 = vector.extract_strided_slice %19 {offsets = [0, 129], sizes = [8, 512], strides = [1, 1]} : vector<8x768xbf16> to vector<8x512xbf16>
    %41 = vector.extract_strided_slice %19 {offsets = [0, 137], sizes = [8, 512], strides = [1, 1]} : vector<8x768xbf16> to vector<8x512xbf16>
    %42 = vector.extract_strided_slice %19 {offsets = [0, 138], sizes = [8, 512], strides = [1, 1]} : vector<8x768xbf16> to vector<8x512xbf16>
    %43 = vector.extract_strided_slice %19 {offsets = [0, 139], sizes = [8, 512], strides = [1, 1]} : vector<8x768xbf16> to vector<8x512xbf16>
    %44 = tpu.concatenate %35, %36, %37, %38, %39, %40, %41, %42, %43 in 0 : vector<8x512xbf16>, vector<8x512xbf16>, vector<8x512xbf16>, vector<8x512xbf16>, vector<8x512xbf16>, vector<8x512xbf16>, vector<8x512xbf16>, vector<8x512xbf16>, vector<8x512xbf16> -> vector<72x512xbf16>
    %c1 = arith.constant 1 : index
    %c0_12 = arith.constant 0 : index
    %c0_13 = arith.constant 0 : index
    %45 = vector.load %arg3[%c1, %c0_12, %c0_13] : memref<3x8x72xbf16, #tpu.memory_space<vmem>>, vector<1x8x72xbf16>
    %46 = vector.shape_cast %45 : vector<1x8x72xbf16> to vector<8x72xbf16>
    %cst_14 = arith.constant dense<0.000000e+00> : vector<8x512xf32>
    %47 = tpu.matmul %46, %44, %cst_14 {dimension_numbers = #tpu.dot_dimension_numbers<[1], [0], [0], [1], [0, 0, 1, 1], [], []>} : vector<8x72xbf16>, vector<72x512xbf16>, vector<8x512xf32> -> vector<8x512xf32>
    %48 = arith.addf %34, %47 : vector<8x512xf32>
    %49 = vector.extract_strided_slice %19 {offsets = [0, 217], sizes = [8, 512], strides = [1, 1]} : vector<8x768xbf16> to vector<8x512xbf16>
    %50 = vector.extract_strided_slice %19 {offsets = [0, 218], sizes = [8, 512], strides = [1, 1]} : vector<8x768xbf16> to vector<8x512xbf16>
    %51 = vector.extract_strided_slice %19 {offsets = [0, 219], sizes = [8, 512], strides = [1, 1]} : vector<8x768xbf16> to vector<8x512xbf16>
    %52 = vector.extract_strided_slice %19 {offsets = [0, 227], sizes = [8, 512], strides = [1, 1]} : vector<8x768xbf16> to vector<8x512xbf16>
    %53 = vector.extract_strided_slice %19 {offsets = [0, 228], sizes = [8, 512], strides = [1, 1]} : vector<8x768xbf16> to vector<8x512xbf16>
    %54 = vector.extract_strided_slice %19 {offsets = [0, 229], sizes = [8, 512], strides = [1, 1]} : vector<8x768xbf16> to vector<8x512xbf16>
    %55 = vector.extract_strided_slice %19 {offsets = [0, 237], sizes = [8, 512], strides = [1, 1]} : vector<8x768xbf16> to vector<8x512xbf16>
    %56 = vector.extract_strided_slice %19 {offsets = [0, 238], sizes = [8, 512], strides = [1, 1]} : vector<8x768xbf16> to vector<8x512xbf16>
    %57 = vector.extract_strided_slice %19 {offsets = [0, 239], sizes = [8, 512], strides = [1, 1]} : vector<8x768xbf16> to vector<8x512xbf16>
    %58 = tpu.concatenate %49, %50, %51, %52, %53, %54, %55, %56, %57 in 0 : vector<8x512xbf16>, vector<8x512xbf16>, vector<8x512xbf16>, vector<8x512xbf16>, vector<8x512xbf16>, vector<8x512xbf16>, vector<8x512xbf16>, vector<8x512xbf16>, vector<8x512xbf16> -> vector<72x512xbf16>
    %c2 = arith.constant 2 : index
    %c0_15 = arith.constant 0 : index
    %c0_16 = arith.constant 0 : index
    %59 = vector.load %arg3[%c2, %c0_15, %c0_16] : memref<3x8x72xbf16, #tpu.memory_space<vmem>>, vector<1x8x72xbf16>
    %60 = vector.shape_cast %59 : vector<1x8x72xbf16> to vector<8x72xbf16>
    %cst_17 = arith.constant dense<0.000000e+00> : vector<8x512xf32>
    %61 = tpu.matmul %60, %58, %cst_17 {dimension_numbers = #tpu.dot_dimension_numbers<[1], [0], [0], [1], [0, 0, 1, 1], [], []>} : vector<8x72xbf16>, vector<72x512xbf16>, vector<8x512xf32> -> vector<8x512xf32>
    %62 = arith.addf %48, %61 : vector<8x512xf32>
    %c0_18 = arith.constant 0 : index
    %c0_19 = arith.constant 0 : index
    %63 = vector.load %arg5[%c0_18, %c0_19] : memref<8x512xf32, #tpu.memory_space<vmem>>, vector<8x512xf32>
    tpu.vector_store %arg5[%c0_18, %c0_19], %62 {strides = array<i32>} : memref<8x512xf32, #tpu.memory_space<vmem>>, vector<8x512xf32>,
    %c0_20 = arith.constant 0 : index
    %c0_21 = arith.constant 0 : index
    %64 = vector.load %arg4[%c0_20, %c0_21] : memref<1x512xf32, #tpu.memory_space<vmem>>, vector<1x512xf32>
    %cst_22 = arith.constant 5.000000e-01 : f32
    %65 = vector.broadcast %cst_22 : f32 to vector<1x512xf32>
    %66 = arith.cmpf ogt, %64, %65 : vector<1x512xf32>
    %cst_23 = arith.constant 0.000000e+00 : f32
    %67 = vector.shape_cast %66 : vector<1x512xi1> to vector<1x512xi1>
    %68 = vector.broadcast %67 : vector<1x512xi1> to vector<8x512xi1>
    %69 = vector.broadcast %cst_23 : f32 to vector<8x512xf32>
    %70 = arith.select %68, %62, %69 : vector<8x512xi1>, vector<8x512xf32>
    %cst_24 = arith.constant dense<0.000000e+00> : vector<8xf32>
    %71 = vector.multi_reduction <add>, %70, %cst_24 [1] : vector<8x512xf32> to vector<8xf32>
    %72 = vector.shape_cast %71 : vector<8xf32> to vector<8x1xf32>
    %73 = arith.mulf %70, %70 : vector<8x512xf32>
    %cst_25 = arith.constant dense<0.000000e+00> : vector<8xf32>
    %74 = vector.multi_reduction <add>, %73, %cst_25 [1] : vector<8x512xf32> to vector<8xf32>
    %75 = vector.shape_cast %74 : vector<8xf32> to vector<8x1xf32>
    %76 = tpu.concatenate %72, %75 in 1 : vector<8x1xf32>, vector<8x1xf32> -> vector<8x2xf32>
    %77 = vector.shape_cast %76 : vector<8x2xf32> to vector<1x8x2xf32>
    %c0_26 = arith.constant 0 : index
    %c0_27 = arith.constant 0 : index
    %c0_28 = arith.constant 0 : index
    %78 = vector.load %arg6[%c0_26, %c0_27, %c0_28] : memref<1x8x2xf32, #tpu.memory_space<vmem>>, vector<1x8x2xf32>
    tpu.vector_store %arg6[%c0_26, %c0_27, %c0_28], %77 {strides = array<i32>} : memref<1x8x2xf32, #tpu.memory_space<vmem>>, vector<1x8x2xf32>,
    return
  }
  func.func @transform_1(%arg0: i32, %arg1: i32) -> (i32, i32, i32) {
    %c0_i32 = arith.constant 0 : i32
    %c0_i32_0 = arith.constant 0 : i32
    %c0_i32_1 = arith.constant 0 : i32
    %c0_i32_2 = arith.constant 0 : i32
    return %c0_i32, %c0_i32_0, %c0_i32_1 : i32, i32, i32
  }
  func.func @transform_2(%arg0: i32, %arg1: i32) -> (i32, i32) {
    %c2_i32 = arith.constant 2 : i32
    %0 = arith.muli %arg0, %c2_i32 : i32
    %1 = arith.addi %0, %arg1 : i32
    %c0_i32 = arith.constant 0 : i32
    %c0_i32_0 = arith.constant 0 : i32
    return %c0_i32, %1 : i32, i32
  }
  func.func @transform_3(%arg0: i32, %arg1: i32) -> (i32, i32) {
    %c2_i32 = arith.constant 2 : i32
    %0 = arith.muli %arg0, %c2_i32 : i32
    %1 = arith.addi %0, %arg1 : i32
    %c0_i32 = arith.constant 0 : i32
    %c0_i32_0 = arith.constant 0 : i32
    return %c0_i32, %1 : i32, i32
  }
  func.func @transform_4(%arg0: i32, %arg1: i32) -> (i32, i32, i32) {
    %c2_i32 = arith.constant 2 : i32
    %0 = arith.muli %arg0, %c2_i32 : i32
    %1 = arith.addi %0, %arg1 : i32
    %c0_i32 = arith.constant 0 : i32
    %c0_i32_0 = arith.constant 0 : i32
    %c0_i32_1 = arith.constant 0 : i32
    return %1, %c0_i32, %c0_i32_0 : i32, i32, i32
  }
}

module attributes {stable_mosaic.version = 11 : i64} {
  func.func @_bn_elu_kernel(%arg0: i32, %arg1: memref<8x512xf32, #tpu.memory_space<vmem>>, %arg2: memref<8x1xf32, #tpu.memory_space<vmem>>, %arg3: memref<8x1xf32, #tpu.memory_space<vmem>>, %arg4: memref<1x512xf32, #tpu.memory_space<vmem>>, %arg5: memref<8x512xbf16, #tpu.memory_space<vmem>>) attributes {dimension_semantics = [#tpu.dimension_semantics<parallel>], iteration_bounds = array<i64: 4>, scalar_prefetch = 0 : i64, scratch_operands = 0 : i64, tpu.core_type = #tpu.core_type<tc>, window_params = [{transform_indices = @transform_0, window_bounds = array<i64: 8, 512>}, {pipeline_mode = #tpu.pipeline_mode<synchronous>, transform_indices = @transform_1, window_bounds = array<i64: 8, 1>}, {pipeline_mode = #tpu.pipeline_mode<synchronous>, transform_indices = @transform_2, window_bounds = array<i64: 8, 1>}, {transform_indices = @transform_3, window_bounds = array<i64: 1, 512>}, {transform_indices = @transform_4, window_bounds = array<i64: 8, 512>}]} {
    %c0 = arith.constant 0 : index
    %c0_0 = arith.constant 0 : index
    %0 = vector.load %arg1[%c0, %c0_0] : memref<8x512xf32, #tpu.memory_space<vmem>>, vector<8x512xf32>
    %c0_1 = arith.constant 0 : index
    %c0_2 = arith.constant 0 : index
    %1 = vector.load %arg2[%c0_1, %c0_2] : memref<8x1xf32, #tpu.memory_space<vmem>>, vector<8x1xf32>
    %2 = vector.broadcast %1 : vector<8x1xf32> to vector<8x512xf32>
    %3 = arith.mulf %0, %2 : vector<8x512xf32>
    %c0_3 = arith.constant 0 : index
    %c0_4 = arith.constant 0 : index
    %4 = vector.load %arg3[%c0_3, %c0_4] : memref<8x1xf32, #tpu.memory_space<vmem>>, vector<8x1xf32>
    %5 = vector.broadcast %4 : vector<8x1xf32> to vector<8x512xf32>
    %6 = arith.addf %3, %5 : vector<8x512xf32>
    %cst = arith.constant 0.000000e+00 : f32
    %7 = vector.broadcast %cst : f32 to vector<8x512xf32>
    %8 = arith.cmpf ogt, %6, %7 : vector<8x512xf32>
    %cst_5 = arith.constant 0.000000e+00 : f32
    %9 = vector.broadcast %cst_5 : f32 to vector<8x512xf32>
    %10 = arith.minimumf %6, %9 : vector<8x512xf32>
    %11 = math.exp %10 : vector<8x512xf32>
    %cst_6 = arith.constant 1.000000e+00 : f32
    %12 = vector.broadcast %cst_6 : f32 to vector<8x512xf32>
    %13 = arith.subf %11, %12 : vector<8x512xf32>
    %14 = arith.select %8, %6, %13 : vector<8x512xi1>, vector<8x512xf32>
    %c0_7 = arith.constant 0 : index
    %c0_8 = arith.constant 0 : index
    %15 = vector.load %arg4[%c0_7, %c0_8] : memref<1x512xf32, #tpu.memory_space<vmem>>, vector<1x512xf32>
    %cst_9 = arith.constant 5.000000e-01 : f32
    %16 = vector.broadcast %cst_9 : f32 to vector<1x512xf32>
    %17 = arith.cmpf ogt, %15, %16 : vector<1x512xf32>
    %cst_10 = arith.constant 0.000000e+00 : f32
    %18 = vector.shape_cast %17 : vector<1x512xi1> to vector<1x512xi1>
    %19 = vector.broadcast %18 : vector<1x512xi1> to vector<8x512xi1>
    %20 = vector.broadcast %cst_10 : f32 to vector<8x512xf32>
    %21 = arith.select %19, %14, %20 : vector<8x512xi1>, vector<8x512xf32>
    %22 = arith.truncf %21 : vector<8x512xf32> to vector<8x512xbf16>
    %c0_11 = arith.constant 0 : index
    %c0_12 = arith.constant 0 : index
    %23 = vector.load %arg5[%c0_11, %c0_12] : memref<8x512xbf16, #tpu.memory_space<vmem>>, vector<8x512xbf16>
    tpu.vector_store %arg5[%c0_11, %c0_12], %22 {strides = array<i32>} : memref<8x512xbf16, #tpu.memory_space<vmem>>, vector<8x512xbf16>,
    return
  }
  func.func @transform_0(%arg0: i32) -> (i32, i32) {
    %c0_i32 = arith.constant 0 : i32
    %c0_i32_0 = arith.constant 0 : i32
    return %c0_i32, %arg0 : i32, i32
  }
  func.func @transform_1(%arg0: i32) -> (i32, i32) {
    %c0_i32 = arith.constant 0 : i32
    %c0_i32_0 = arith.constant 0 : i32
    %c0_i32_1 = arith.constant 0 : i32
    return %c0_i32, %c0_i32_0 : i32, i32
  }
  func.func @transform_2(%arg0: i32) -> (i32, i32) {
    %c0_i32 = arith.constant 0 : i32
    %c0_i32_0 = arith.constant 0 : i32
    %c0_i32_1 = arith.constant 0 : i32
    return %c0_i32, %c0_i32_0 : i32, i32
  }
  func.func @transform_3(%arg0: i32) -> (i32, i32) {
    %c0_i32 = arith.constant 0 : i32
    %c0_i32_0 = arith.constant 0 : i32
    return %c0_i32, %arg0 : i32, i32
  }
  func.func @transform_4(%arg0: i32) -> (i32, i32) {
    %c0_i32 = arith.constant 0 : i32
    %c0_i32_0 = arith.constant 0 : i32
    return %c0_i32, %arg0 : i32, i32
  }
}

module attributes {stable_mosaic.version = 11 : i64} {
  func.func @_bn_elu_kernel(%arg0: i32, %arg1: memref<8x512xf32, #tpu.memory_space<vmem>>, %arg2: memref<4x1xf32, #tpu.memory_space<vmem>>, %arg3: memref<4x1xf32, #tpu.memory_space<vmem>>, %arg4: memref<1x512xf32, #tpu.memory_space<vmem>>, %arg5: memref<4x512xbf16, #tpu.memory_space<vmem>>) attributes {dimension_semantics = [#tpu.dimension_semantics<parallel>], iteration_bounds = array<i64: 4>, scalar_prefetch = 0 : i64, scratch_operands = 0 : i64, tpu.core_type = #tpu.core_type<tc>, window_params = [{transform_indices = @transform_0, window_bounds = array<i64: 8, 512>}, {pipeline_mode = #tpu.pipeline_mode<synchronous>, transform_indices = @transform_1, window_bounds = array<i64: 4, 1>}, {pipeline_mode = #tpu.pipeline_mode<synchronous>, transform_indices = @transform_2, window_bounds = array<i64: 4, 1>}, {transform_indices = @transform_3, window_bounds = array<i64: 1, 512>}, {transform_indices = @transform_4, window_bounds = array<i64: 4, 512>}]} {
    %c4 = arith.constant 4 : index
    %c0 = arith.constant 0 : index
    %0 = vector.load %arg1[%c4, %c0] : memref<8x512xf32, #tpu.memory_space<vmem>>, vector<4x512xf32>
    %c0_0 = arith.constant 0 : index
    %c0_1 = arith.constant 0 : index
    %1 = vector.load %arg2[%c0_0, %c0_1] : memref<4x1xf32, #tpu.memory_space<vmem>>, vector<4x1xf32>
    %2 = vector.broadcast %1 : vector<4x1xf32> to vector<4x512xf32>
    %3 = arith.mulf %0, %2 : vector<4x512xf32>
    %c0_2 = arith.constant 0 : index
    %c0_3 = arith.constant 0 : index
    %4 = vector.load %arg3[%c0_2, %c0_3] : memref<4x1xf32, #tpu.memory_space<vmem>>, vector<4x1xf32>
    %5 = vector.broadcast %4 : vector<4x1xf32> to vector<4x512xf32>
    %6 = arith.addf %3, %5 : vector<4x512xf32>
    %cst = arith.constant 0.000000e+00 : f32
    %7 = vector.broadcast %cst : f32 to vector<4x512xf32>
    %8 = arith.cmpf ogt, %6, %7 : vector<4x512xf32>
    %cst_4 = arith.constant 0.000000e+00 : f32
    %9 = vector.broadcast %cst_4 : f32 to vector<4x512xf32>
    %10 = arith.minimumf %6, %9 : vector<4x512xf32>
    %11 = math.exp %10 : vector<4x512xf32>
    %cst_5 = arith.constant 1.000000e+00 : f32
    %12 = vector.broadcast %cst_5 : f32 to vector<4x512xf32>
    %13 = arith.subf %11, %12 : vector<4x512xf32>
    %14 = arith.select %8, %6, %13 : vector<4x512xi1>, vector<4x512xf32>
    %c0_6 = arith.constant 0 : index
    %c0_7 = arith.constant 0 : index
    %15 = vector.load %arg4[%c0_6, %c0_7] : memref<1x512xf32, #tpu.memory_space<vmem>>, vector<1x512xf32>
    %cst_8 = arith.constant 5.000000e-01 : f32
    %16 = vector.broadcast %cst_8 : f32 to vector<1x512xf32>
    %17 = arith.cmpf ogt, %15, %16 : vector<1x512xf32>
    %cst_9 = arith.constant 0.000000e+00 : f32
    %18 = vector.shape_cast %17 : vector<1x512xi1> to vector<1x512xi1>
    %19 = vector.broadcast %18 : vector<1x512xi1> to vector<4x512xi1>
    %20 = vector.broadcast %cst_9 : f32 to vector<4x512xf32>
    %21 = arith.select %19, %14, %20 : vector<4x512xi1>, vector<4x512xf32>
    %22 = arith.truncf %21 : vector<4x512xf32> to vector<4x512xbf16>
    %c0_10 = arith.constant 0 : index
    %c0_11 = arith.constant 0 : index
    %23 = vector.load %arg5[%c0_10, %c0_11] : memref<4x512xbf16, #tpu.memory_space<vmem>>, vector<4x512xbf16>
    tpu.vector_store %arg5[%c0_10, %c0_11], %22 {strides = array<i32>} : memref<4x512xbf16, #tpu.memory_space<vmem>>, vector<4x512xbf16>,
    return
  }
  func.func @transform_0(%arg0: i32) -> (i32, i32) {
    %c0_i32 = arith.constant 0 : i32
    %c0_i32_0 = arith.constant 0 : i32
    return %c0_i32, %arg0 : i32, i32
  }
  func.func @transform_1(%arg0: i32) -> (i32, i32) {
    %c0_i32 = arith.constant 0 : i32
    %c0_i32_0 = arith.constant 0 : i32
    %c0_i32_1 = arith.constant 0 : i32
    return %c0_i32, %c0_i32_0 : i32, i32
  }
  func.func @transform_2(%arg0: i32) -> (i32, i32) {
    %c0_i32 = arith.constant 0 : i32
    %c0_i32_0 = arith.constant 0 : i32
    %c0_i32_1 = arith.constant 0 : i32
    return %c0_i32, %c0_i32_0 : i32, i32
  }
  func.func @transform_3(%arg0: i32) -> (i32, i32) {
    %c0_i32 = arith.constant 0 : i32
    %c0_i32_0 = arith.constant 0 : i32
    return %c0_i32, %arg0 : i32, i32
  }
  func.func @transform_4(%arg0: i32) -> (i32, i32) {
    %c0_i32 = arith.constant 0 : i32
    %c0_i32_0 = arith.constant 0 : i32
    return %c0_i32, %arg0 : i32, i32
  }
}

module attributes {stable_mosaic.version = 11 : i64} {
  func.func @_conv_stats_1x1_kernel(%arg0: i32, %arg1: memref<4x512xbf16, #tpu.memory_space<vmem>>, %arg2: memref<1x4x4xbf16, #tpu.memory_space<vmem>>, %arg3: memref<1x512xf32, #tpu.memory_space<vmem>>, %arg4: memref<4x512xf32, #tpu.memory_space<vmem>>, %arg5: memref<1x4x2xf32, #tpu.memory_space<vmem>>) attributes {dimension_semantics = [#tpu.dimension_semantics<parallel>], iteration_bounds = array<i64: 4>, scalar_prefetch = 0 : i64, scratch_operands = 0 : i64, tpu.core_type = #tpu.core_type<tc>, window_params = [{transform_indices = @transform_0, window_bounds = array<i64: 4, 512>}, {pipeline_mode = #tpu.pipeline_mode<synchronous>, transform_indices = @transform_1, window_bounds = array<i64: 1, 4, 4>}, {transform_indices = @transform_2, window_bounds = array<i64: 1, 512>}, {transform_indices = @transform_3, window_bounds = array<i64: 4, 512>}, {transform_indices = @transform_4, window_bounds = array<i64: 1, 4, 2>}]} {
    %c0 = arith.constant 0 : index
    %c0_0 = arith.constant 0 : index
    %c0_1 = arith.constant 0 : index
    %0 = vector.load %arg2[%c0, %c0_0, %c0_1] : memref<1x4x4xbf16, #tpu.memory_space<vmem>>, vector<1x4x4xbf16>
    %1 = vector.shape_cast %0 : vector<1x4x4xbf16> to vector<4x4xbf16>
    %c0_2 = arith.constant 0 : index
    %c0_3 = arith.constant 0 : index
    %2 = vector.load %arg1[%c0_2, %c0_3] : memref<4x512xbf16, #tpu.memory_space<vmem>>, vector<4x512xbf16>
    %cst = arith.constant dense<0.000000e+00> : vector<4x512xf32>
    %3 = tpu.matmul %1, %2, %cst {dimension_numbers = #tpu.dot_dimension_numbers<[1], [0], [0], [1], [0, 0, 1, 1], [], []>} : vector<4x4xbf16>, vector<4x512xbf16>, vector<4x512xf32> -> vector<4x512xf32>
    %c0_4 = arith.constant 0 : index
    %c0_5 = arith.constant 0 : index
    %4 = vector.load %arg4[%c0_4, %c0_5] : memref<4x512xf32, #tpu.memory_space<vmem>>, vector<4x512xf32>
    tpu.vector_store %arg4[%c0_4, %c0_5], %3 {strides = array<i32>} : memref<4x512xf32, #tpu.memory_space<vmem>>, vector<4x512xf32>,
    %c0_6 = arith.constant 0 : index
    %c0_7 = arith.constant 0 : index
    %5 = vector.load %arg3[%c0_6, %c0_7] : memref<1x512xf32, #tpu.memory_space<vmem>>, vector<1x512xf32>
    %cst_8 = arith.constant 5.000000e-01 : f32
    %6 = vector.broadcast %cst_8 : f32 to vector<1x512xf32>
    %7 = arith.cmpf ogt, %5, %6 : vector<1x512xf32>
    %cst_9 = arith.constant 0.000000e+00 : f32
    %8 = vector.shape_cast %7 : vector<1x512xi1> to vector<1x512xi1>
    %9 = vector.broadcast %8 : vector<1x512xi1> to vector<4x512xi1>
    %10 = vector.broadcast %cst_9 : f32 to vector<4x512xf32>
    %11 = arith.select %9, %3, %10 : vector<4x512xi1>, vector<4x512xf32>
    %cst_10 = arith.constant dense<0.000000e+00> : vector<4xf32>
    %12 = vector.multi_reduction <add>, %11, %cst_10 [1] : vector<4x512xf32> to vector<4xf32>
    %13 = vector.shape_cast %12 : vector<4xf32> to vector<4x1xf32>
    %14 = arith.mulf %11, %11 : vector<4x512xf32>
    %cst_11 = arith.constant dense<0.000000e+00> : vector<4xf32>
    %15 = vector.multi_reduction <add>, %14, %cst_11 [1] : vector<4x512xf32> to vector<4xf32>
    %16 = vector.shape_cast %15 : vector<4xf32> to vector<4x1xf32>
    %17 = tpu.concatenate %13, %16 in 1 : vector<4x1xf32>, vector<4x1xf32> -> vector<4x2xf32>
    %18 = vector.shape_cast %17 : vector<4x2xf32> to vector<1x4x2xf32>
    %c0_12 = arith.constant 0 : index
    %c0_13 = arith.constant 0 : index
    %c0_14 = arith.constant 0 : index
    %19 = vector.load %arg5[%c0_12, %c0_13, %c0_14] : memref<1x4x2xf32, #tpu.memory_space<vmem>>, vector<1x4x2xf32>
    tpu.vector_store %arg5[%c0_12, %c0_13, %c0_14], %18 {strides = array<i32>} : memref<1x4x2xf32, #tpu.memory_space<vmem>>, vector<1x4x2xf32>,
    return
  }
  func.func @transform_0(%arg0: i32) -> (i32, i32) {
    %c0_i32 = arith.constant 0 : i32
    %c0_i32_0 = arith.constant 0 : i32
    return %c0_i32, %arg0 : i32, i32
  }
  func.func @transform_1(%arg0: i32) -> (i32, i32, i32) {
    %c0_i32 = arith.constant 0 : i32
    %c0_i32_0 = arith.constant 0 : i32
    %c0_i32_1 = arith.constant 0 : i32
    %c0_i32_2 = arith.constant 0 : i32
    return %c0_i32, %c0_i32_0, %c0_i32_1 : i32, i32, i32
  }
  func.func @transform_2(%arg0: i32) -> (i32, i32) {
    %c0_i32 = arith.constant 0 : i32
    %c0_i32_0 = arith.constant 0 : i32
    return %c0_i32, %arg0 : i32, i32
  }
  func.func @transform_3(%arg0: i32) -> (i32, i32) {
    %c0_i32 = arith.constant 0 : i32
    %c0_i32_0 = arith.constant 0 : i32
    return %c0_i32, %arg0 : i32, i32
  }
  func.func @transform_4(%arg0: i32) -> (i32, i32, i32) {
    %c0_i32 = arith.constant 0 : i32
    %c0_i32_0 = arith.constant 0 : i32
    %c0_i32_1 = arith.constant 0 : i32
    return %arg0, %c0_i32, %c0_i32_0 : i32, i32, i32
  }
}

module attributes {stable_mosaic.version = 11 : i64} {
  func.func @_bn_elu_kernel(%arg0: i32, %arg1: memref<4x512xf32, #tpu.memory_space<vmem>>, %arg2: memref<4x1xf32, #tpu.memory_space<vmem>>, %arg3: memref<4x1xf32, #tpu.memory_space<vmem>>, %arg4: memref<1x512xf32, #tpu.memory_space<vmem>>, %arg5: memref<4x512xf32, #tpu.memory_space<vmem>>, %arg6: memref<4x512xf32, #tpu.memory_space<vmem>>) attributes {dimension_semantics = [#tpu.dimension_semantics<parallel>], iteration_bounds = array<i64: 4>, scalar_prefetch = 0 : i64, scratch_operands = 0 : i64, tpu.core_type = #tpu.core_type<tc>, window_params = [{transform_indices = @transform_0, window_bounds = array<i64: 4, 512>}, {pipeline_mode = #tpu.pipeline_mode<synchronous>, transform_indices = @transform_1, window_bounds = array<i64: 4, 1>}, {pipeline_mode = #tpu.pipeline_mode<synchronous>, transform_indices = @transform_2, window_bounds = array<i64: 4, 1>}, {transform_indices = @transform_3, window_bounds = array<i64: 1, 512>}, {transform_indices = @transform_4, window_bounds = array<i64: 4, 512>}, {transform_indices = @transform_5, window_bounds = array<i64: 4, 512>}]} {
    %c0 = arith.constant 0 : index
    %c0_0 = arith.constant 0 : index
    %0 = vector.load %arg1[%c0, %c0_0] : memref<4x512xf32, #tpu.memory_space<vmem>>, vector<4x512xf32>
    %c0_1 = arith.constant 0 : index
    %c0_2 = arith.constant 0 : index
    %1 = vector.load %arg2[%c0_1, %c0_2] : memref<4x1xf32, #tpu.memory_space<vmem>>, vector<4x1xf32>
    %2 = vector.broadcast %1 : vector<4x1xf32> to vector<4x512xf32>
    %3 = arith.mulf %0, %2 : vector<4x512xf32>
    %c0_3 = arith.constant 0 : index
    %c0_4 = arith.constant 0 : index
    %4 = vector.load %arg3[%c0_3, %c0_4] : memref<4x1xf32, #tpu.memory_space<vmem>>, vector<4x1xf32>
    %5 = vector.broadcast %4 : vector<4x1xf32> to vector<4x512xf32>
    %6 = arith.addf %3, %5 : vector<4x512xf32>
    %cst = arith.constant 0.000000e+00 : f32
    %7 = vector.broadcast %cst : f32 to vector<4x512xf32>
    %8 = arith.cmpf ogt, %6, %7 : vector<4x512xf32>
    %cst_5 = arith.constant 0.000000e+00 : f32
    %9 = vector.broadcast %cst_5 : f32 to vector<4x512xf32>
    %10 = arith.minimumf %6, %9 : vector<4x512xf32>
    %11 = math.exp %10 : vector<4x512xf32>
    %cst_6 = arith.constant 1.000000e+00 : f32
    %12 = vector.broadcast %cst_6 : f32 to vector<4x512xf32>
    %13 = arith.subf %11, %12 : vector<4x512xf32>
    %14 = arith.select %8, %6, %13 : vector<4x512xi1>, vector<4x512xf32>
    %c0_7 = arith.constant 0 : index
    %c0_8 = arith.constant 0 : index
    %15 = vector.load %arg5[%c0_7, %c0_8] : memref<4x512xf32, #tpu.memory_space<vmem>>, vector<4x512xf32>
    %16 = arith.addf %14, %15 : vector<4x512xf32>
    %c0_9 = arith.constant 0 : index
    %c0_10 = arith.constant 0 : index
    %17 = vector.load %arg4[%c0_9, %c0_10] : memref<1x512xf32, #tpu.memory_space<vmem>>, vector<1x512xf32>
    %cst_11 = arith.constant 5.000000e-01 : f32
    %18 = vector.broadcast %cst_11 : f32 to vector<1x512xf32>
    %19 = arith.cmpf ogt, %17, %18 : vector<1x512xf32>
    %cst_12 = arith.constant 0.000000e+00 : f32
    %20 = vector.shape_cast %19 : vector<1x512xi1> to vector<1x512xi1>
    %21 = vector.broadcast %20 : vector<1x512xi1> to vector<4x512xi1>
    %22 = vector.broadcast %cst_12 : f32 to vector<4x512xf32>
    %23 = arith.select %21, %16, %22 : vector<4x512xi1>, vector<4x512xf32>
    %c0_13 = arith.constant 0 : index
    %c0_14 = arith.constant 0 : index
    %24 = vector.load %arg6[%c0_13, %c0_14] : memref<4x512xf32, #tpu.memory_space<vmem>>, vector<4x512xf32>
    tpu.vector_store %arg6[%c0_13, %c0_14], %23 {strides = array<i32>} : memref<4x512xf32, #tpu.memory_space<vmem>>, vector<4x512xf32>,
    return
  }
  func.func @transform_0(%arg0: i32) -> (i32, i32) {
    %c0_i32 = arith.constant 0 : i32
    %c0_i32_0 = arith.constant 0 : i32
    return %c0_i32, %arg0 : i32, i32
  }
  func.func @transform_1(%arg0: i32) -> (i32, i32) {
    %c0_i32 = arith.constant 0 : i32
    %c0_i32_0 = arith.constant 0 : i32
    %c0_i32_1 = arith.constant 0 : i32
    return %c0_i32, %c0_i32_0 : i32, i32
  }
  func.func @transform_2(%arg0: i32) -> (i32, i32) {
    %c0_i32 = arith.constant 0 : i32
    %c0_i32_0 = arith.constant 0 : i32
    %c0_i32_1 = arith.constant 0 : i32
    return %c0_i32, %c0_i32_0 : i32, i32
  }
  func.func @transform_3(%arg0: i32) -> (i32, i32) {
    %c0_i32 = arith.constant 0 : i32
    %c0_i32_0 = arith.constant 0 : i32
    return %c0_i32, %arg0 : i32, i32
  }
  func.func @transform_4(%arg0: i32) -> (i32, i32) {
    %c0_i32 = arith.constant 0 : i32
    %c0_i32_0 = arith.constant 0 : i32
    return %c0_i32, %arg0 : i32, i32
  }
  func.func @transform_5(%arg0: i32) -> (i32, i32) {
    %c0_i32 = arith.constant 0 : i32
    %c0_i32_0 = arith.constant 0 : i32
    return %c0_i32, %arg0 : i32, i32
  }
}

module attributes {stable_mosaic.version = 11 : i64} {
  func.func @_bn_elu_kernel(%arg0: i32, %arg1: memref<8x512xf32, #tpu.memory_space<vmem>>, %arg2: memref<4x1xf32, #tpu.memory_space<vmem>>, %arg3: memref<4x1xf32, #tpu.memory_space<vmem>>, %arg4: memref<1x512xf32, #tpu.memory_space<vmem>>, %arg5: memref<4x512xf32, #tpu.memory_space<vmem>>, %arg6: memref<4x512xf32, #tpu.memory_space<vmem>>) attributes {dimension_semantics = [#tpu.dimension_semantics<parallel>], iteration_bounds = array<i64: 4>, scalar_prefetch = 0 : i64, scratch_operands = 0 : i64, tpu.core_type = #tpu.core_type<tc>, window_params = [{transform_indices = @transform_0, window_bounds = array<i64: 8, 512>}, {pipeline_mode = #tpu.pipeline_mode<synchronous>, transform_indices = @transform_1, window_bounds = array<i64: 4, 1>}, {pipeline_mode = #tpu.pipeline_mode<synchronous>, transform_indices = @transform_2, window_bounds = array<i64: 4, 1>}, {transform_indices = @transform_3, window_bounds = array<i64: 1, 512>}, {transform_indices = @transform_4, window_bounds = array<i64: 4, 512>}, {transform_indices = @transform_5, window_bounds = array<i64: 4, 512>}]} {
    %c0 = arith.constant 0 : index
    %c0_0 = arith.constant 0 : index
    %0 = vector.load %arg1[%c0, %c0_0] : memref<8x512xf32, #tpu.memory_space<vmem>>, vector<4x512xf32>
    %c0_1 = arith.constant 0 : index
    %c0_2 = arith.constant 0 : index
    %1 = vector.load %arg2[%c0_1, %c0_2] : memref<4x1xf32, #tpu.memory_space<vmem>>, vector<4x1xf32>
    %2 = vector.broadcast %1 : vector<4x1xf32> to vector<4x512xf32>
    %3 = arith.mulf %0, %2 : vector<4x512xf32>
    %c0_3 = arith.constant 0 : index
    %c0_4 = arith.constant 0 : index
    %4 = vector.load %arg3[%c0_3, %c0_4] : memref<4x1xf32, #tpu.memory_space<vmem>>, vector<4x1xf32>
    %5 = vector.broadcast %4 : vector<4x1xf32> to vector<4x512xf32>
    %6 = arith.addf %3, %5 : vector<4x512xf32>
    %cst = arith.constant 0.000000e+00 : f32
    %7 = vector.broadcast %cst : f32 to vector<4x512xf32>
    %8 = arith.cmpf ogt, %6, %7 : vector<4x512xf32>
    %cst_5 = arith.constant 0.000000e+00 : f32
    %9 = vector.broadcast %cst_5 : f32 to vector<4x512xf32>
    %10 = arith.minimumf %6, %9 : vector<4x512xf32>
    %11 = math.exp %10 : vector<4x512xf32>
    %cst_6 = arith.constant 1.000000e+00 : f32
    %12 = vector.broadcast %cst_6 : f32 to vector<4x512xf32>
    %13 = arith.subf %11, %12 : vector<4x512xf32>
    %14 = arith.select %8, %6, %13 : vector<4x512xi1>, vector<4x512xf32>
    %c0_7 = arith.constant 0 : index
    %c0_8 = arith.constant 0 : index
    %15 = vector.load %arg5[%c0_7, %c0_8] : memref<4x512xf32, #tpu.memory_space<vmem>>, vector<4x512xf32>
    %16 = arith.addf %14, %15 : vector<4x512xf32>
    %c0_9 = arith.constant 0 : index
    %c0_10 = arith.constant 0 : index
    %17 = vector.load %arg4[%c0_9, %c0_10] : memref<1x512xf32, #tpu.memory_space<vmem>>, vector<1x512xf32>
    %cst_11 = arith.constant 5.000000e-01 : f32
    %18 = vector.broadcast %cst_11 : f32 to vector<1x512xf32>
    %19 = arith.cmpf ogt, %17, %18 : vector<1x512xf32>
    %cst_12 = arith.constant 0.000000e+00 : f32
    %20 = vector.shape_cast %19 : vector<1x512xi1> to vector<1x512xi1>
    %21 = vector.broadcast %20 : vector<1x512xi1> to vector<4x512xi1>
    %22 = vector.broadcast %cst_12 : f32 to vector<4x512xf32>
    %23 = arith.select %21, %16, %22 : vector<4x512xi1>, vector<4x512xf32>
    %c0_13 = arith.constant 0 : index
    %c0_14 = arith.constant 0 : index
    %24 = vector.load %arg6[%c0_13, %c0_14] : memref<4x512xf32, #tpu.memory_space<vmem>>, vector<4x512xf32>
    tpu.vector_store %arg6[%c0_13, %c0_14], %23 {strides = array<i32>} : memref<4x512xf32, #tpu.memory_space<vmem>>, vector<4x512xf32>,
    return
  }
  func.func @transform_0(%arg0: i32) -> (i32, i32) {
    %c0_i32 = arith.constant 0 : i32
    %c0_i32_0 = arith.constant 0 : i32
    return %c0_i32, %arg0 : i32, i32
  }
  func.func @transform_1(%arg0: i32) -> (i32, i32) {
    %c0_i32 = arith.constant 0 : i32
    %c0_i32_0 = arith.constant 0 : i32
    %c0_i32_1 = arith.constant 0 : i32
    return %c0_i32, %c0_i32_0 : i32, i32
  }
  func.func @transform_2(%arg0: i32) -> (i32, i32) {
    %c0_i32 = arith.constant 0 : i32
    %c0_i32_0 = arith.constant 0 : i32
    %c0_i32_1 = arith.constant 0 : i32
    return %c0_i32, %c0_i32_0 : i32, i32
  }
  func.func @transform_3(%arg0: i32) -> (i32, i32) {
    %c0_i32 = arith.constant 0 : i32
    %c0_i32_0 = arith.constant 0 : i32
    return %c0_i32, %arg0 : i32, i32
  }
  func.func @transform_4(%arg0: i32) -> (i32, i32) {
    %c0_i32 = arith.constant 0 : i32
    %c0_i32_0 = arith.constant 0 : i32
    return %c0_i32, %arg0 : i32, i32
  }
  func.func @transform_5(%arg0: i32) -> (i32, i32) {
    %c0_i32 = arith.constant 0 : i32
    %c0_i32_0 = arith.constant 0 : i32
    return %c0_i32, %arg0 : i32, i32
  }
}

</mosaic_0001>

<llo_original>
// kernel: voxception_resnet_forward.8
$region0: #{voxception_resnet_forward.8}
  #allocation0 [shape = 'u32[]', space=smem, size = 0x4, offset = 0x4, fixed_abs, tag = 'smem constant byte address 0x4 - core index']
  #allocation1 [shape = 'u32[144,128]{1,0:T(1,128)}', space=vmem, size = 0x12000, scoped, tag = 'internal scratch']
  %s0 = inlined_call_operand.vmem [shape: f32[8,2048], index: 0, kind: input, shape index: {}]
  %s1 = inlined_call_operand.vmem [shape: f32[8,1], index: 1, kind: input, shape index: {}]
  %s2 = inlined_call_operand.vmem [shape: f32[8,1], index: 2, kind: input, shape index: {}]
  %s3 = inlined_call_operand.vmem [shape: f32[1,2048], index: 3, kind: input, shape index: {}]
  %s4 = inlined_call_operand.vmem [shape: bf16[8,2048], index: 4, kind: output, shape index: {}]
  %s5 = sld [smem:[#allocation0]]
  $region49: #{voxception_resnet_forward.8} parent=0
    _
  %s7 = ssub.s32 1, %s5
  %s8 = scalar_select 0, %s7, %s5
  loop: start=0, step=1, limit=6
  $region2: #{voxception_resnet_forward.8} parent=0 // loop_pre_header
    _
  $region3: #{voxception_resnet_forward.8} parent=0 // loop_header
    %s10 = sphi 0, %s14
    %p11 = scmp.ge.s32.totalorder %s10, 6
    %s20 = sphi 0, %s22
    %s23 = sphi 0, %s20
    %s24 = sphi 0, %s23
    %s40 = sphi 0, %s24
    %s44 = sphi 0, %s44
    %s46 = sphi 0, %s44
    %s47 = sphi 0, %s46
    %s61 = sphi 0, %s47
    %s65 = sphi 0, %s65
    %s67 = sphi 0, %s65
    %s68 = sphi 0, %s67
    %s82 = sphi 0, %s68
    %s88 = sphi 0, %s90
    %s91 = sphi 0, %s88
    %s92 = sphi 0, %s91
    %s108 = sphi 0, %s92
    %s114 = sphi 0, %s116
    %s117 = sphi 0, %s114
    %s118 = sphi 0, %s117
    %s134 = sphi 0, %s118
  $region4: #{voxception_resnet_forward.8} parent=0 // loop_header_branch
    %13 = sbr.rel (%p11) target = $region8
  $region5: #{voxception_resnet_forward.8} parent=0 // loop_body
    %s15 = ssub.s32 %s10, 1
    %s16 = ssub.s32 %s10, 2
    %s17 = sadd.s32 %s10, 1
    %s18 = ssub.s32 %s10, %s17
    %p19 = scmp.eq.s32.totalorder %s18, 0
    %s21 = sadd.s32 %s20, 1
    %s22 = scalar_select %p19, %s20, %s21
    %p25 = pneg %p19
    %p26 = scmp.eq.s32.totalorder %s10, 3
    %p27 = por %p25, %p26
    %p28 = scmp.ne.s32.totalorder %s20, %s23
    %p29 = scmp.eq.s32.totalorder %s10, 0
    %p30 = por %p28, %p29
    %p31 = scmp.ne.s32.totalorder %s20, %s23
    %p32 = scmp.eq.s32.totalorder %s15, 3
    %p33 = por %p31, %p32
    %p34 = scmp.ne.s32.totalorder %s23, %s24
    %p35 = scmp.eq.s32.totalorder %s15, 0
    %p36 = por %p34, %p35
    %p37 = scmp.ne.s32.totalorder %s23, %s24
    %p38 = scmp.eq.s32.totalorder %s16, 3
    %p39 = por %p37, %p38
    %p41 = scmp.ne.s32.totalorder %s24, %s40
    %p42 = scmp.eq.s32.totalorder %s16, 0
    %p43 = por %p41, %p42
    %s45 = sadd.s32 %s44, 1
    %p48 = scmp.eq.s32.totalorder %s10, 3
    %p49 = scmp.ne.s32.totalorder %s44, %s46
    %p50 = scmp.eq.s32.totalorder %s10, 0
    %p51 = por %p49, %p50
    %p52 = scmp.ne.s32.totalorder %s44, %s46
    %p53 = scmp.eq.s32.totalorder %s15, 3
    %p54 = por %p52, %p53
    %p55 = scmp.ne.s32.totalorder %s46, %s47
    %p56 = scmp.eq.s32.totalorder %s15, 0
    %p57 = por %p55, %p56
    %p58 = scmp.ne.s32.totalorder %s46, %s47
    %p59 = scmp.eq.s32.totalorder %s16, 3
    %p60 = por %p58, %p59
    %p62 = scmp.ne.s32.totalorder %s47, %s61
    %p63 = scmp.eq.s32.totalorder %s16, 0
    %p64 = por %p62, %p63
    %s66 = sadd.s32 %s65, 1
    %p69 = scmp.eq.s32.totalorder %s10, 3
    %p70 = scmp.ne.s32.totalorder %s65, %s67
    %p71 = scmp.eq.s32.totalorder %s10, 0
    %p72 = por %p70, %p71
    %p73 = scmp.ne.s32.totalorder %s65, %s67
    %p74 = scmp.eq.s32.totalorder %s15, 3
    %p75 = por %p73, %p74
    %p76 = scmp.ne.s32.totalorder %s67, %s68
    %p77 = scmp.eq.s32.totalorder %s15, 0
    %p78 = por %p76, %p77
    %p79 = scmp.ne.s32.totalorder %s67, %s68
    %p80 = scmp.eq.s32.totalorder %s16, 3
    %p81 = por %p79, %p80
    %p83 = scmp.ne.s32.totalorder %s68, %s82
    %p84 = scmp.eq.s32.totalorder %s16, 0
    %p85 = por %p83, %p84
    %s86 = ssub.s32 %s10, %s17
    %p87 = scmp.eq.s32.totalorder %s86, 0
    %s89 = sadd.s32 %s88, 1
    %s90 = scalar_select %p87, %s88, %s89
    %p93 = pneg %p87
    %p94 = scmp.eq.s32.totalorder %s10, 3
    %p95 = por %p93, %p94
    %p96 = scmp.ne.s32.totalorder %s88, %s91
    %p97 = scmp.eq.s32.totalorder %s10, 0
    %p98 = por %p96, %p97
    %p99 = scmp.ne.s32.totalorder %s88, %s91
    %p100 = scmp.eq.s32.totalorder %s15, 3
    %p101 = por %p99, %p100
    %p102 = scmp.ne.s32.totalorder %s91, %s92
    %p103 = scmp.eq.s32.totalorder %s15, 0
    %p104 = por %p102, %p103
    %p105 = scmp.ne.s32.totalorder %s91, %s92
    %p106 = scmp.eq.s32.totalorder %s16, 3
    %p107 = por %p105, %p106
    %p109 = scmp.ne.s32.totalorder %s92, %s108
    %p110 = scmp.eq.s32.totalorder %s16, 0
    %p111 = por %p109, %p110
    %s112 = ssub.s32 %s10, %s17
    %p113 = scmp.eq.s32.totalorder %s112, 0
    %s115 = sadd.s32 %s114, 1
    %s116 = scalar_select %p113, %s114, %s115
    %p119 = pneg %p113
    %p120 = scmp.eq.s32.totalorder %s10, 3
    %p121 = por %p119, %p120
    %p122 = scmp.ne.s32.totalorder %s114, %s117
    %p123 = scmp.eq.s32.totalorder %s10, 0
    %p124 = por %p122, %p123
    %p125 = scmp.ne.s32.totalorder %s114, %s117
    %p126 = scmp.eq.s32.totalorder %s15, 3
    %p127 = por %p125, %p126
    %p128 = scmp.ne.s32.totalorder %s117, %s118
    %p129 = scmp.eq.s32.totalorder %s15, 0
    %p130 = por %p128, %p129
    %p131 = scmp.ne.s32.totalorder %s117, %s118
    %p132 = scmp.eq.s32.totalorder %s16, 3
    %p133 = por %p131, %p132
    %p135 = scmp.ne.s32.totalorder %s118, %s134
    %p136 = scmp.eq.s32.totalorder %s16, 0
    %p137 = por %p135, %p136
    %p138 = scmp.le.s32.totalorder 1, %s10
    %p139 = scmp.lt.s32.totalorder %s10, 5
    %p140 = pnand %p138, %p139
    %p141 = pneg %p140
    // Predicated region
    $region9: #{voxception_resnet_forward.8} parent=5 // pred_check
      _
    $region10: #{voxception_resnet_forward.8} parent=5 // pred_check_branch
      %143 = sbr.rel (%p140) target = $region12
    $region11: #{voxception_resnet_forward.8} parent=5 // pred_region
      %s144 = ssub.s32 %s10, 1
      // Predicated region
      $region13: #{voxception_resnet_forward.8} parent=11 // pred_check
        %p145 = pneg %p57
      $region14: #{voxception_resnet_forward.8} parent=11 // pred_check_branch
        %147 = sbr.rel (%p145) target = $region16
      $region15: #{voxception_resnet_forward.8} parent=11 // pred_region
        _
      $region16: #{voxception_resnet_forward.8} parent=11 // pred_fallthru
        _
      // Predicated region
      $region17: #{voxception_resnet_forward.8} parent=11 // pred_check
        %p148 = pneg %p78
      $region18: #{voxception_resnet_forward.8} parent=11 // pred_check_branch
        %150 = sbr.rel (%p148) target = $region20
      $region19: #{voxception_resnet_forward.8} parent=11 // pred_region
        _
      $region20: #{voxception_resnet_forward.8} parent=11 // pred_fallthru
        _
    $region12: #{voxception_resnet_forward.8} parent=5 // pred_fallthru
      _
    %p151 = scmp.lt.s32.totalorder %s10, 4
    // Predicated region
    $region21: #{voxception_resnet_forward.8} parent=5 // pred_check
      %p152 = pneg %p151
    $region22: #{voxception_resnet_forward.8} parent=5 // pred_check_branch
      %154 = sbr.rel (%p152) target = $region24
    $region23: #{voxception_resnet_forward.8} parent=5 // pred_region
      // Predicated region
      $region25: #{voxception_resnet_forward.8} parent=23 // pred_check
        %p155 = pneg %p30
      $region26: #{voxception_resnet_forward.8} parent=23 // pred_check_branch
        %157 = sbr.rel (%p155) target = $region28
      $region27: #{voxception_resnet_forward.8} parent=23 // pred_region
        %s158 = smul.u32 4, %s10
        %p159 = scmp.lt.s32.totalorder %s158, 15
        %s160 = scalar_select %p159, %s158, 15
        %s161 = smul.addr %s160, 8
        %s162 = scalar_lea.vmem %s0, %s161
        %s163 = smul.u32 4, %s10
      $region28: #{voxception_resnet_forward.8} parent=23 // pred_fallthru
        _
      // Predicated region
      $region29: #{voxception_resnet_forward.8} parent=23 // pred_check
        %p164 = pneg %p98
      $region30: #{voxception_resnet_forward.8} parent=23 // pred_check_branch
        %166 = sbr.rel (%p164) target = $region32
      $region31: #{voxception_resnet_forward.8} parent=23 // pred_region
        %s167 = smul.u32 4, %s10
        %p168 = scmp.lt.s32.totalorder %s167, 15
        %s169 = scalar_select %p168, %s167, 15
        %s170 = scalar_lea.vmem %s3, %s169
        %s171 = smul.u32 4, %s10
      $region32: #{voxception_resnet_forward.8} parent=23 // pred_fallthru
        _
    $region24: #{voxception_resnet_forward.8} parent=5 // pred_fallthru
      _
    %p172 = scmp.le.s32.totalorder 1, %s10
    %p173 = scmp.lt.s32.totalorder %s10, 5
    %p174 = pnand %p172, %p173
    %p175 = pneg %p174
    // Predicated region
    $region33: #{voxception_resnet_forward.8} parent=5 // pred_check
      _
    $region34: #{voxception_resnet_forward.8} parent=5 // pred_check_branch
      %177 = sbr.rel (%p174) target = $region36
    $region35: #{voxception_resnet_forward.8} parent=5 // pred_region
      %s178 = ssub.s32 %s10, 1
      %s179 = smul.u32 4, %s15
      %p180 = scmp.lt.s32.totalorder %s179, 15
      %s181 = scalar_select %p180, %s179, 15
      %s182 = smul.addr %s181, 8
      %s183 = scalar_lea.vmem %s0, %s182
      %p184 = pneg %p36
      %p185 = pneg %p33
      %p186 = pneg %p57
      %p187 = pneg %p54
      %p188 = pneg %p78
      %p189 = pneg %p75
      %s190 = smul.u32 4, %s15
      %p191 = scmp.lt.s32.totalorder %s190, 15
      %s192 = scalar_select %p191, %s190, 15
      %s193 = scalar_lea.vmem %s3, %s192
      %p194 = pneg %p104
      %p195 = pneg %p101
      %p196 = pneg %p130
      %p197 = pneg %p127
      %s198 = smul.u32 4, %s15
      %p199 = scmp.lt.s32.totalorder %s198, 15
      %s200 = scalar_select %p199, %s198, 15
      %s201 = smul.addr %s200, 4
      %s202 = scalar_lea.vmem %s4, %s201
      %s203 = smul.u32 4, %s15
      %p204 = scmp.lt.s32.totalorder %s203, 15
      %s205 = scalar_select %p204, %s203, 15
      %s206 = smul.addr %s205, 8
      %s207 = scalar_lea.vmem %s0, %s206
      %s208 = smul.u32 4, %s15
      %s209 = smul.u32 4, %s15
      %p210 = scmp.lt.s32.totalorder %s209, 15
      %s211 = scalar_select %p210, %s209, 15
      %s212 = scalar_lea.vmem %s3, %s211
      %s213 = smul.u32 4, %s15
      %s214 = smul.u32 4, %s15
      %p215 = scmp.lt.s32.totalorder %s214, 15
      %s216 = scalar_select %p215, %s214, 15
      %s217 = smul.addr %s216, 4
      %s218 = scalar_lea.vmem %s4, %s217
      %s219 = smul.u32 4, %s15
      %v220 = vld [vmem:[%s207] sm:$0xff]
      %v221 = vld [vmem:[%s207 + $0x8] sm:$0xff]
      %v222 = vld [vmem:[%s207 + $0x10] sm:$0xff]
      %v223 = vld [vmem:[%s207 + $0x18] sm:$0xff]
      %v224 = vld [vmem:[%s1] sm:$0xff]
      %226 = vset.pattern.permute.xlu0 0
      %227 = vperm.xlu0 %226, %v224
      %v228 = vpop.permute.xlu0 %227
      %v230 = vmul.f32 %v220, %v228
      %v231 = vmul.f32 %v221, %v228
      %v232 = vmul.f32 %v222, %v228
      %v233 = vmul.f32 %v223, %v228
      %v234 = vld [vmem:[%s2] sm:$0xff]
      %236 = vset.pattern.permute.xlu0 0
      %237 = vperm.xlu0 %236, %v234
      %v238 = vpop.permute.xlu0 %237
      %v240 = vadd.f32 %v230, %v238
      %v241 = vadd.f32 %v231, %v238
      %v242 = vadd.f32 %v232, %v238
      %v243 = vadd.f32 %v233, %v238
      %vm244 = vcmp.gt.f32.partialorder %v240, 0.0
      %vm245 = vcmp.gt.f32.partialorder %v241, 0.0
      %vm246 = vcmp.gt.f32.partialorder %v242, 0.0
      %vm247 = vcmp.gt.f32.partialorder %v243, 0.0
      %v248 = vmin.f32 %v240, 0.0
      %v249 = vmin.f32 %v241, 0.0
      %v250 = vmin.f32 %v242, 0.0
      %v251 = vmin.f32 %v243, 0.0
      %v252 = vmul.f32 %v248, 1.442695
      %v253 = vpow.pop %v252
      %v254 = vmul.f32 %v249, 1.442695
      %v255 = vpow.pop %v254
      %v256 = vmul.f32 %v250, 1.442695
      %v257 = vpow.pop %v256
      %v258 = vmul.f32 %v251, 1.442695
      %v259 = vpow.pop %v258
      %v260 = vsub.f32 %v253, 1.0
      %v261 = vsub.f32 %v255, 1.0
      %v262 = vsub.f32 %v257, 1.0
      %v263 = vsub.f32 %v259, 1.0
      %v264 = vsel %vm244, %v240, %v260
      %v265 = vsel %vm245, %v241, %v261
      %v266 = vsel %vm246, %v242, %v262
      %v267 = vsel %vm247, %v243, %v263
      %v268 = vld [vmem:[%s212] sm:$0xf]
      %vm269 = vcmp.gt.f32.partialorder %v268, 0.5
      %v270 = vsel %vm269, 1, 0
      %v271 = vlaneseq
      %v272 = vshrl.u32 %v271, 7
      %v273 = vsub.s32 0, %v272
      %v274 = vrot.slane %v270, %v273
      %v275 = vlaneseq
      %v276 = vshrl.u32 %v275, 7
      %v277 = vsub.s32 1, %v276
      %v278 = vrot.slane %v270, %v277
      %v279 = vlaneseq
      %v280 = vshrl.u32 %v279, 7
      %v281 = vsub.s32 2, %v280
      %v282 = vrot.slane %v270, %v281
      %v283 = vlaneseq
      %v284 = vshrl.u32 %v283, 7
      %v285 = vsub.s32 3, %v284
      %v286 = vrot.slane %v270, %v285
      %vm287 = vcmp.eq.s32.totalorder %v274, 1
      %vm288 = vcmp.eq.s32.totalorder %v278, 1
      %vm289 = vcmp.eq.s32.totalorder %v282, 1
      %vm290 = vcmp.eq.s32.totalorder %v286, 1
      %v291 = vsel %vm287, %v264, 0.0
      %v292 = vsel %vm288, %v265, 0.0
      %v293 = vsel %vm289, %v266, 0.0
      %v294 = vsel %vm290, %v267, 0.0
      %v295 = vpack.c.bf16 %v291, %v291
      %v296 = vpack.c.bf16 %v292, %v292
      %v297 = vpack.c.bf16 %v293, %v293
      %v298 = vpack.c.bf16 %v294, %v294
      %v303 = vunpack.c.l.b16 %v295
      %v304 = vunpack.c.l.b16 %v296
      %v305 = vunpack.c.l.b16 %v297
      %v306 = vunpack.c.l.b16 %v298
      %v307 = vpack.c.b16 %v304, %v303
      %v308 = vpack.c.b16 %v306, %v305
      %311 = vst [vmem:[%s218] sm:$0xff] %v307
      %312 = vst [vmem:[%s218 + $0x8] sm:$0xff] %v308
      %s313 = smul.u32 4, %s15
      %p314 = scmp.lt.s32.totalorder %s313, 15
      %s315 = scalar_select %p314, %s313, 15
      %s316 = smul.addr %s315, 4
      %s317 = scalar_lea.vmem %s4, %s316
      // Predicated region
      $region37: #{voxception_resnet_forward.8} parent=35 // pred_check
        %p318 = pneg %p127
      $region38: #{voxception_resnet_forward.8} parent=35 // pred_check_branch
        %320 = sbr.rel (%p318) target = $region40
      $region39: #{voxception_resnet_forward.8} parent=35 // pred_region
        %s321 = smul.u32 4, %s15
      $region40: #{voxception_resnet_forward.8} parent=35 // pred_fallthru
        _
    $region36: #{voxception_resnet_forward.8} parent=5 // pred_fallthru
      _
    %p322 = scmp.le.s32.totalorder 2, %s10
    // Predicated region
    $region41: #{voxception_resnet_forward.8} parent=5 // pred_check
      %p323 = pneg %p322
    $region42: #{voxception_resnet_forward.8} parent=5 // pred_check_branch
      %325 = sbr.rel (%p323) target = $region44
    $region43: #{voxception_resnet_forward.8} parent=5 // pred_region
      %s326 = ssub.s32 %s10, 2
      // Predicated region
      $region45: #{voxception_resnet_forward.8} parent=43 // pred_check
        %p327 = pneg %p133
      $region46: #{voxception_resnet_forward.8} parent=43 // pred_check_branch
        %329 = sbr.rel (%p327) target = $region48
      $region47: #{voxception_resnet_forward.8} parent=43 // pred_region
        %s330 = smul.u32 4, %s16
        %p331 = scmp.lt.s32.totalorder %s330, 15
        %s332 = scalar_select %p331, %s330, 15
        %s333 = smul.addr %s332, 4
        %s334 = scalar_lea.vmem %s4, %s333
      $region48: #{voxception_resnet_forward.8} parent=43 // pred_fallthru
        _
    $region44: #{voxception_resnet_forward.8} parent=5 // pred_fallthru
      _
  $region6: #{voxception_resnet_forward.8} parent=0 // loop_footer
    %s14 = sadd.s32 1, %s10
  $region7: #{voxception_resnet_forward.8} parent=0 // loop_footer_branch
    %9 = sbr.rel target = $region3
  $region8: #{voxception_resnet_forward.8} parent=0 // loop_exit
    _

// kernel: voxception_resnet_forward.7
$region0: #{voxception_resnet_forward.7}
  #allocation0 [shape = 'u32[]', space=smem, size = 0x4, offset = 0x4, fixed_abs, tag = 'smem constant byte address 0x4 - core index']
  #allocation1 [shape = 'u32[144,128]{1,0:T(1,128)}', space=vmem, size = 0x12000, scoped, tag = 'internal scratch']
  #allocation2 [shape = 'bf16[2,8,768]{2,1,0:T(8,128)(2,1)}', space=vmem, size = 0x6000, scoped, tag = 'scratch operand']
  #allocation3 [shape = 's32[2]{0}', space=sflag, size = 0x8, scoped, tag = 'scratch operand']
  #allocation4 [shape = 's32[]', space=sflag, size = 0x4, offset = 0, fixed_abs, tag = 'sflag constant byte address 0x0 - dummy sync flag']
  #allocation5 [shape = 's32[]', space=sflag, size = 0x4, offset = 0, fixed_abs, tag = 'sflag constant byte address 0x0 - dummy sync flag']
  %s0 = inlined_call_operand.vmem [shape: bf16[8,2304], index: 0, kind: input, shape index: {}]
  %s1 = inlined_call_operand.vmem [shape: bf16[3,8,72], index: 1, kind: input, shape index: {}]
  %s2 = inlined_call_operand.vmem [shape: f32[1,2048], index: 2, kind: input, shape index: {}]
  %s3 = inlined_call_operand.vmem [shape: f32[8,2048], index: 3, kind: output, shape index: {0}]
  %s4 = inlined_call_operand.vmem [shape: f32[4,8,2], index: 4, kind: output, shape index: {1}]
  %5 = xla_tuple %s3, %s4
  %s6 = sld [smem:[#allocation0]]
  $region125: #{voxception_resnet_forward.7} parent=0
    _
  %s8 = ssub.s32 1, %s6
  %s9 = scalar_select 0, %s8, %s6
  loop: start=0, step=1, limit=6
  $region2: #{voxception_resnet_forward.7} parent=0 // loop_pre_header
    _
  $region3: #{voxception_resnet_forward.7} parent=0 // loop_header
    %s11 = sphi 0, %s15
    %p12 = scmp.ge.s32.totalorder %s11, 6
    %s18 = sphi 0, %s30
    %s19 = sphi 0, %s26
    %s20 = sphi 0, %s18
    %s21 = sphi 0, %s19
    %s22 = sphi 0, %s20
    %s23 = sphi 0, %s21
    %s31 = sphi 0, %s31
    %s33 = sphi 0, %s31
    %s34 = sphi 0, %s33
    %s48 = sphi 0, %s34
    %s58 = sphi 0, %s60
    %s61 = sphi 0, %s58
    %s62 = sphi 0, %s61
    %s78 = sphi 0, %s62
    %s88 = sphi 0, %s90
    %s91 = sphi 0, %s88
    %s92 = sphi 0, %s91
    %s108 = sphi 0, %s92
    %s118 = sphi 0, %s120
    %s121 = sphi 0, %s118
    %s122 = sphi 0, %s121
    %s138 = sphi 0, %s122
  $region4: #{voxception_resnet_forward.7} parent=0 // loop_header_branch
    %14 = sbr.rel (%p12) target = $region8
  $region5: #{voxception_resnet_forward.7} parent=0 // loop_body
    %s16 = ssub.s32 %s11, 1
    %s17 = ssub.s32 %s11, 2
    %s24 = sadd.s32 1, %s19
    %p25 = scmp.ge.s32.totalorder %s24, 2
    %s26 = scalar_select %p25, 0, %s24
    %s27 = sadd.s32 1, %s18
    %s28 = scalar_select %p25, %s27, %s18
    %p29 = scmp.ge.s32.totalorder %s28, 2
    %s30 = scalar_select %p29, 0, %s28
    %s32 = sadd.s32 %s31, 1
    %p35 = scmp.eq.s32.totalorder %s11, 3
    %p36 = scmp.ne.s32.totalorder %s31, %s33
    %p37 = scmp.eq.s32.totalorder %s11, 0
    %p38 = por %p36, %p37
    %p39 = scmp.ne.s32.totalorder %s31, %s33
    %p40 = scmp.eq.s32.totalorder %s16, 3
    %p41 = por %p39, %p40
    %p42 = scmp.ne.s32.totalorder %s33, %s34
    %p43 = scmp.eq.s32.totalorder %s16, 0
    %p44 = por %p42, %p43
    %p45 = scmp.ne.s32.totalorder %s33, %s34
    %p46 = scmp.eq.s32.totalorder %s17, 3
    %p47 = por %p45, %p46
    %p49 = scmp.ne.s32.totalorder %s34, %s48
    %p50 = scmp.eq.s32.totalorder %s17, 0
    %p51 = por %p49, %p50
    %s52 = smul.u32 %s18, 2
    %s53 = sadd.s32 %s52, %s19
    %s54 = smul.u32 %s30, 2
    %s55 = sadd.s32 %s54, %s26
    %s56 = ssub.s32 %s53, %s55
    %p57 = scmp.eq.s32.totalorder %s56, 0
    %s59 = sadd.s32 %s58, 1
    %s60 = scalar_select %p57, %s58, %s59
    %p63 = pneg %p57
    %p64 = scmp.eq.s32.totalorder %s11, 3
    %p65 = por %p63, %p64
    %p66 = scmp.ne.s32.totalorder %s58, %s61
    %p67 = scmp.eq.s32.totalorder %s11, 0
    %p68 = por %p66, %p67
    %p69 = scmp.ne.s32.totalorder %s58, %s61
    %p70 = scmp.eq.s32.totalorder %s16, 3
    %p71 = por %p69, %p70
    %p72 = scmp.ne.s32.totalorder %s61, %s62
    %p73 = scmp.eq.s32.totalorder %s16, 0
    %p74 = por %p72, %p73
    %p75 = scmp.ne.s32.totalorder %s61, %s62
    %p76 = scmp.eq.s32.totalorder %s17, 3
    %p77 = por %p75, %p76
    %p79 = scmp.ne.s32.totalorder %s62, %s78
    %p80 = scmp.eq.s32.totalorder %s17, 0
    %p81 = por %p79, %p80
    %s82 = smul.u32 %s18, 2
    %s83 = sadd.s32 %s82, %s19
    %s84 = smul.u32 %s30, 2
    %s85 = sadd.s32 %s84, %s26
    %s86 = ssub.s32 %s83, %s85
    %p87 = scmp.eq.s32.totalorder %s86, 0
    %s89 = sadd.s32 %s88, 1
    %s90 = scalar_select %p87, %s88, %s89
    %p93 = pneg %p87
    %p94 = scmp.eq.s32.totalorder %s11, 3
    %p95 = por %p93, %p94
    %p96 = scmp.ne.s32.totalorder %s88, %s91
    %p97 = scmp.eq.s32.totalorder %s11, 0
    %p98 = por %p96, %p97
    %p99 = scmp.ne.s32.totalorder %s88, %s91
    %p100 = scmp.eq.s32.totalorder %s16, 3
    %p101 = por %p99, %p100
    %p102 = scmp.ne.s32.totalorder %s91, %s92
    %p103 = scmp.eq.s32.totalorder %s16, 0
    %p104 = por %p102, %p103
    %p105 = scmp.ne.s32.totalorder %s91, %s92
    %p106 = scmp.eq.s32.totalorder %s17, 3
    %p107 = por %p105, %p106
    %p109 = scmp.ne.s32.totalorder %s92, %s108
    %p110 = scmp.eq.s32.totalorder %s17, 0
    %p111 = por %p109, %p110
    %s112 = smul.u32 %s18, 2
    %s113 = sadd.s32 %s112, %s19
    %s114 = smul.u32 %s30, 2
    %s115 = sadd.s32 %s114, %s26
    %s116 = ssub.s32 %s113, %s115
    %p117 = scmp.eq.s32.totalorder %s116, 0
    %s119 = sadd.s32 %s118, 1
    %s120 = scalar_select %p117, %s118, %s119
    %p123 = pneg %p117
    %p124 = scmp.eq.s32.totalorder %s11, 3
    %p125 = por %p123, %p124
    %p126 = scmp.ne.s32.totalorder %s118, %s121
    %p127 = scmp.eq.s32.totalorder %s11, 0
    %p128 = por %p126, %p127
    %p129 = scmp.ne.s32.totalorder %s118, %s121
    %p130 = scmp.eq.s32.totalorder %s16, 3
    %p131 = por %p129, %p130
    %p132 = scmp.ne.s32.totalorder %s121, %s122
    %p133 = scmp.eq.s32.totalorder %s16, 0
    %p134 = por %p132, %p133
    %p135 = scmp.ne.s32.totalorder %s121, %s122
    %p136 = scmp.eq.s32.totalorder %s17, 3
    %p137 = por %p135, %p136
    %p139 = scmp.ne.s32.totalorder %s122, %s138
    %p140 = scmp.eq.s32.totalorder %s17, 0
    %p141 = por %p139, %p140
    %p142 = scmp.le.s32.totalorder 1, %s11
    %p143 = scmp.lt.s32.totalorder %s11, 5
    %p144 = pnand %p142, %p143
    %p145 = pneg %p144
    // Predicated region
    $region9: #{voxception_resnet_forward.7} parent=5 // pred_check
      _
    $region10: #{voxception_resnet_forward.7} parent=5 // pred_check_branch
      %147 = sbr.rel (%p144) target = $region12
    $region11: #{voxception_resnet_forward.7} parent=5 // pred_region
      %s148 = ssub.s32 %s11, 1
      // Predicated region
      $region13: #{voxception_resnet_forward.7} parent=11 // pred_check
        %p149 = pneg %p44
      $region14: #{voxception_resnet_forward.7} parent=11 // pred_check_branch
        %151 = sbr.rel (%p149) target = $region16
      $region15: #{voxception_resnet_forward.7} parent=11 // pred_region
        _
      $region16: #{voxception_resnet_forward.7} parent=11 // pred_fallthru
        _
    $region12: #{voxception_resnet_forward.7} parent=5 // pred_fallthru
      _
    %p152 = scmp.lt.s32.totalorder %s11, 4
    // Predicated region
    $region17: #{voxception_resnet_forward.7} parent=5 // pred_check
      %p153 = pneg %p152
    $region18: #{voxception_resnet_forward.7} parent=5 // pred_check_branch
      %155 = sbr.rel (%p153) target = $region20
    $region19: #{voxception_resnet_forward.7} parent=5 // pred_region
      // Predicated region
      $region21: #{voxception_resnet_forward.7} parent=19 // pred_check
        %p156 = pneg %p68
      $region22: #{voxception_resnet_forward.7} parent=19 // pred_check_branch
        %158 = sbr.rel (%p156) target = $region24
      $region23: #{voxception_resnet_forward.7} parent=19 // pred_region
        %s159 = smul.u32 %s18, 2
        %s160 = sadd.s32 %s159, %s19
        %s161 = smul.u32 4, %s160
        %p162 = scmp.lt.s32.totalorder %s161, 15
        %s163 = scalar_select %p162, %s161, 15
        %s164 = scalar_lea.vmem %s2, %s163
        %s165 = smul.u32 %s18, 2
        %s166 = sadd.s32 %s165, %s19
        %s167 = smul.u32 4, %s166
      $region24: #{voxception_resnet_forward.7} parent=19 // pred_fallthru
        _
    $region20: #{voxception_resnet_forward.7} parent=5 // pred_fallthru
      _
    %p168 = scmp.le.s32.totalorder 1, %s11
    %p169 = scmp.lt.s32.totalorder %s11, 5
    %p170 = pnand %p168, %p169
    %p171 = pneg %p170
    // Predicated region
    $region25: #{voxception_resnet_forward.7} parent=5 // pred_check
      _
    $region26: #{voxception_resnet_forward.7} parent=5 // pred_check_branch
      %173 = sbr.rel (%p170) target = $region28
    $region27: #{voxception_resnet_forward.7} parent=5 // pred_region
      %s174 = ssub.s32 %s11, 1
      %p175 = pneg %p44
      %p176 = pneg %p41
      %s177 = smul.u32 %s20, 2
      %s178 = sadd.s32 %s177, %s21
      %s179 = smul.u32 4, %s178
      %p180 = scmp.lt.s32.totalorder %s179, 15
      %s181 = scalar_select %p180, %s179, 15
      %s182 = scalar_lea.vmem %s2, %s181
      %p183 = pneg %p74
      %p184 = pneg %p71
      %p185 = pneg %p104
      %p186 = pneg %p101
      %s187 = smul.u32 %s20, 2
      %s188 = sadd.s32 %s187, %s21
      %s189 = smul.u32 4, %s188
      %p190 = scmp.lt.s32.totalorder %s189, 15
      %s191 = scalar_select %p190, %s189, 15
      %s192 = smul.addr %s191, 8
      %s193 = scalar_lea.vmem %s3, %s192
      %p194 = pneg %p134
      %p195 = pneg %p131
      %s196 = smul.u32 %s20, 2
      %s197 = sadd.s32 %s196, %s21
      %p198 = scmp.lt.s32.totalorder %s197, 3
      %s199 = scalar_select %p198, %s197, 3
      %s200 = smul.addr %s199, 8
      %s201 = scalar_lea.vmem %s4, %s200
      %s202 = smul.u32 %s20, 2
      %s203 = sadd.s32 %s202, %s21
      %s204 = smul.u32 4, %s203
      %p205 = scmp.lt.s32.totalorder %s204, 15
      %s206 = scalar_select %p205, %s204, 15
      %s207 = scalar_lea.vmem %s2, %s206
      %s208 = smul.u32 %s20, 2
      %s209 = sadd.s32 %s208, %s21
      %s210 = smul.u32 4, %s209
      %s211 = smul.u32 %s20, 2
      %s212 = sadd.s32 %s211, %s21
      %s213 = smul.u32 4, %s212
      %p214 = scmp.lt.s32.totalorder %s213, 15
      %s215 = scalar_select %p214, %s213, 15
      %s216 = smul.addr %s215, 8
      %s217 = scalar_lea.vmem %s3, %s216
      %s218 = smul.u32 %s20, 2
      %s219 = sadd.s32 %s218, %s21
      %s220 = smul.u32 4, %s219
      %s221 = smul.u32 %s20, 2
      %s222 = sadd.s32 %s221, %s21
      %p223 = scmp.lt.s32.totalorder %s222, 3
      %s224 = scalar_select %p223, %s222, 3
      %s225 = smul.addr %s224, 8
      %s226 = scalar_lea.vmem %s4, %s225
      %s227 = smul.u32 %s20, 2
      %s228 = sadd.s32 %s227, %s21
      %s230 = smul.u32 %s20, 2
      %s231 = sadd.s32 %s230, %s21
      %p232 = scmp.eq.s32.totalorder %s21, 0
      // Predicated region
      $region29: #{voxception_resnet_forward.7} parent=27 // pred_check
        %p233 = pneg %p232
      $region30: #{voxception_resnet_forward.7} parent=27 // pred_check_branch
        %235 = sbr.rel (%p233) target = $region32
      $region31: #{voxception_resnet_forward.7} parent=27 // pred_region
        %s236 = smul.u32 %s231, 512
        %s237 = sshra.s32 %s236, 7
        %s238 = sand.u32 %s236, 127
        %s239 = smul.addr %s237, 4
        %s240 = scalar_lea.vmem %s0, %s239
        %p242 = scmp.lt.u32.totalorder 24, 8
        %p243 = pneg %p242
        // Predicated region
        $region33: #{voxception_resnet_forward.7} parent=31 // pred_check
          _
        $region34: #{voxception_resnet_forward.7} parent=31 // pred_check_branch
          %245 = sbr.rel (%p242) target = $region36
        $region35: #{voxception_resnet_forward.7} parent=31 // pred_region
          %s260 = sand.u32 24, 7
          %p261 = scmp.eq.s32.totalorder %s260, 0
          // Predicated region
          $region48: #{voxception_resnet_forward.7} parent=35 // pred_check
            %p262 = pneg %p261
          $region49: #{voxception_resnet_forward.7} parent=35 // pred_check_branch
            %264 = sbr.rel (%p262) target = $region51
          $region50: #{voxception_resnet_forward.7} parent=35 // pred_region
            loop: start=0, step=1, limit=1
            $region52: #{voxception_resnet_forward.7} parent=50 // loop_pre_header
              _
            $region53: #{voxception_resnet_forward.7} parent=50 // loop_header
              %s266 = sphi 0, %s270
              %p267 = scmp.ge.s32.totalorder %s266, 1
              %s271 = sphi %s240, %s240
              %s272 = sphi [#allocation2], [#allocation2]
            $region54: #{voxception_resnet_forward.7} parent=50 // loop_header_branch
              %269 = sbr.rel (%p267) target = $region58
            $region55: #{voxception_resnet_forward.7} parent=50 // loop_body
              %v273 = vld [vmem:[%s271] sm:$0xff]
              %274 = vst [vmem:[%s272] sm:$0xff] %v273
              %v275 = vld [vmem:[%s271 + $0x8] sm:$0xff]
              %276 = vst [vmem:[%s272 + $0x8] sm:$0xff] %v275
              %v277 = vld [vmem:[%s271 + $0x10] sm:$0xff]
              %278 = vst [vmem:[%s272 + $0x10] sm:$0xff] %v277
            $region56: #{voxception_resnet_forward.7} parent=50 // loop_footer
              %s270 = sadd.s32 1, %s266
            $region57: #{voxception_resnet_forward.7} parent=50 // loop_footer_branch
              %265 = sbr.rel target = $region53
            $region58: #{voxception_resnet_forward.7} parent=50 // loop_exit
              _
          $region51: #{voxception_resnet_forward.7} parent=35 // pred_fallthru
            _
          %p279 = pneg %p261
          // Predicated region
          $region59: #{voxception_resnet_forward.7} parent=35 // pred_check
            _
          $region60: #{voxception_resnet_forward.7} parent=35 // pred_check_branch
            %281 = sbr.rel (%p261) target = $region62
          $region61: #{voxception_resnet_forward.7} parent=35 // pred_region
            %s282 = sand.u32 24, 7
          $region62: #{voxception_resnet_forward.7} parent=35 // pred_fallthru
            _
        $region36: #{voxception_resnet_forward.7} parent=31 // pred_fallthru
          _
        // Predicated region
        $region37: #{voxception_resnet_forward.7} parent=31 // pred_check
          %p246 = pneg %p242
        $region38: #{voxception_resnet_forward.7} parent=31 // pred_check_branch
          %248 = sbr.rel (%p246) target = $region40
        $region39: #{voxception_resnet_forward.7} parent=31 // pred_region
          %s249 = sshllo.u32 0, 24
          loop: start=0, step=1, limit=1
          $region41: #{voxception_resnet_forward.7} parent=39 // loop_pre_header
            _
          $region42: #{voxception_resnet_forward.7} parent=39 // loop_header
            %s251 = sphi 0, %s255
            %p252 = scmp.ge.s32.totalorder %s251, 1
            %s256 = sphi %s240, %s240
            %s257 = sphi [#allocation2], [#allocation2]
          $region43: #{voxception_resnet_forward.7} parent=39 // loop_header_branch
            %254 = sbr.rel (%p252) target = $region47
          $region44: #{voxception_resnet_forward.7} parent=39 // loop_body
            %v258 = vld [vmem:[%s256] sm:%s249]
            %259 = vst [vmem:[%s257] sm:%s249] %v258
          $region45: #{voxception_resnet_forward.7} parent=39 // loop_footer
            %s255 = sadd.s32 1, %s251
          $region46: #{voxception_resnet_forward.7} parent=39 // loop_footer_branch
            %250 = sbr.rel target = $region42
          $region47: #{voxception_resnet_forward.7} parent=39 // loop_exit
            _
        $region40: #{voxception_resnet_forward.7} parent=31 // pred_fallthru
          _
        // Predicated region
        $region63: #{voxception_resnet_forward.7} parent=31 // pred_check
          _
        $region64: #{voxception_resnet_forward.7} parent=31 // pred_check_branch
          %285 = sbr.rel (0) target = $region66
        $region65: #{voxception_resnet_forward.7} parent=31 // pred_region
          %286 = vsyncadd [#allocation3], 384
        $region66: #{voxception_resnet_forward.7} parent=31 // pred_fallthru
          _
      $region32: #{voxception_resnet_forward.7} parent=27 // pred_fallthru
        _
      %s287 = sand.u32 %s21, 1
      %s288 = smul.u32 %s231, 512
      %s289 = smul.u32 %s287, 6
      %s290 = smul.addr %s289, 4
      %s291 = scalar_lea.vmem [#allocation2], %s290
      %s292 = scalar_lea.sflag [#allocation3], %s287
      %s293 = smul.u32 4, 1
      %s294 = smul.u32 %s293, 6
      %s295 = sshll.u32 %s294, 4
      %296 = dma.done %s292, %s295
      %s297 = sadd.s32 %s21, 1
      %p298 = scmp.lt.s32.totalorder %s297, 2
      // Predicated region
      $region67: #{voxception_resnet_forward.7} parent=27 // pred_check
        %p299 = pneg %p298
      $region68: #{voxception_resnet_forward.7} parent=27 // pred_check_branch
        %301 = sbr.rel (%p299) target = $region70
      $region69: #{voxception_resnet_forward.7} parent=27 // pred_region
        %s302 = sadd.s32 %s231, 1
        %s303 = ssub.s32 1, %s287
        %s304 = smul.u32 %s302, 512
        %s305 = sshra.s32 %s304, 7
        %s306 = sand.u32 %s304, 127
        %s307 = smul.addr %s305, 4
        %s308 = scalar_lea.vmem %s0, %s307
        %s309 = smul.u32 %s303, 6
        %s310 = smul.addr %s309, 4
        %s311 = scalar_lea.vmem [#allocation2], %s310
        %s312 = scalar_lea.sflag [#allocation3], %s303
        %p314 = scmp.lt.u32.totalorder 24, 8
        %p315 = pneg %p314
        // Predicated region
        $region71: #{voxception_resnet_forward.7} parent=69 // pred_check
          _
        $region72: #{voxception_resnet_forward.7} parent=69 // pred_check_branch
          %317 = sbr.rel (%p314) target = $region74
        $region73: #{voxception_resnet_forward.7} parent=69 // pred_region
          %s332 = sand.u32 24, 7
          %p333 = scmp.eq.s32.totalorder %s332, 0
          // Predicated region
          $region86: #{voxception_resnet_forward.7} parent=73 // pred_check
            %p334 = pneg %p333
          $region87: #{voxception_resnet_forward.7} parent=73 // pred_check_branch
            %336 = sbr.rel (%p334) target = $region89
          $region88: #{voxception_resnet_forward.7} parent=73 // pred_region
            loop: start=0, step=1, limit=1
            $region90: #{voxception_resnet_forward.7} parent=88 // loop_pre_header
              _
            $region91: #{voxception_resnet_forward.7} parent=88 // loop_header
              %s338 = sphi 0, %s342
              %p339 = scmp.ge.s32.totalorder %s338, 1
              %s343 = sphi %s308, %s308
              %s344 = sphi %s311, %s311
            $region92: #{voxception_resnet_forward.7} parent=88 // loop_header_branch
              %341 = sbr.rel (%p339) target = $region96
            $region93: #{voxception_resnet_forward.7} parent=88 // loop_body
              %v345 = vld [vmem:[%s343] sm:$0xff]
              %346 = vst [vmem:[%s344] sm:$0xff] %v345
              %v347 = vld [vmem:[%s343 + $0x8] sm:$0xff]
              %348 = vst [vmem:[%s344 + $0x8] sm:$0xff] %v347
              %v349 = vld [vmem:[%s343 + $0x10] sm:$0xff]
              %350 = vst [vmem:[%s344 + $0x10] sm:$0xff] %v349
            $region94: #{voxception_resnet_forward.7} parent=88 // loop_footer
              %s342 = sadd.s32 1, %s338
            $region95: #{voxception_resnet_forward.7} parent=88 // loop_footer_branch
              %337 = sbr.rel target = $region91
            $region96: #{voxception_resnet_forward.7} parent=88 // loop_exit
              _
          $region89: #{voxception_resnet_forward.7} parent=73 // pred_fallthru
            _
          %p351 = pneg %p333
          // Predicated region
          $region97: #{voxception_resnet_forward.7} parent=73 // pred_check
            _
          $region98: #{voxception_resnet_forward.7} parent=73 // pred_check_branch
            %353 = sbr.rel (%p333) target = $region100
          $region99: #{voxception_resnet_forward.7} parent=73 // pred_region
            %s354 = sand.u32 24, 7
          $region100: #{voxception_resnet_forward.7} parent=73 // pred_fallthru
            _
        $region74: #{voxception_resnet_forward.7} parent=69 // pred_fallthru
          _
        // Predicated region
        $region75: #{voxception_resnet_forward.7} parent=69 // pred_check
          %p318 = pneg %p314
        $region76: #{voxception_resnet_forward.7} parent=69 // pred_check_branch
          %320 = sbr.rel (%p318) target = $region78
        $region77: #{voxception_resnet_forward.7} parent=69 // pred_region
          %s321 = sshllo.u32 0, 24
          loop: start=0, step=1, limit=1
          $region79: #{voxception_resnet_forward.7} parent=77 // loop_pre_header
            _
          $region80: #{voxception_resnet_forward.7} parent=77 // loop_header
            %s323 = sphi 0, %s327
            %p324 = scmp.ge.s32.totalorder %s323, 1
            %s328 = sphi %s308, %s308
            %s329 = sphi %s311, %s311
          $region81: #{voxception_resnet_forward.7} parent=77 // loop_header_branch
            %326 = sbr.rel (%p324) target = $region85
          $region82: #{voxception_resnet_forward.7} parent=77 // loop_body
            %v330 = vld [vmem:[%s328] sm:%s321]
            %331 = vst [vmem:[%s329] sm:%s321] %v330
          $region83: #{voxception_resnet_forward.7} parent=77 // loop_footer
            %s327 = sadd.s32 1, %s323
          $region84: #{voxception_resnet_forward.7} parent=77 // loop_footer_branch
            %322 = sbr.rel target = $region80
          $region85: #{voxception_resnet_forward.7} parent=77 // loop_exit
            _
        $region78: #{voxception_resnet_forward.7} parent=69 // pred_fallthru
          _
        // Predicated region
        $region101: #{voxception_resnet_forward.7} parent=69 // pred_check
          _
        $region102: #{voxception_resnet_forward.7} parent=69 // pred_check_branch
          %357 = sbr.rel (0) target = $region104
        $region103: #{voxception_resnet_forward.7} parent=69 // pred_region
          %358 = vsyncadd %s312, 384
        $region104: #{voxception_resnet_forward.7} parent=69 // pred_fallthru
          _
      $region70: #{voxception_resnet_forward.7} parent=27 // pred_fallthru
        _
      %v359 = vld [vmem:[%s291] sm:$0xff]
      %v360 = vld [vmem:[%s291 + $0x8] sm:$0xff]
      %v361 = vld [vmem:[%s291 + $0x10] sm:$0xff]
      %v365 = vunpack.c.l.b16 %v359
      %v366 = vunpack.c.h.b16 %v359
      %v367 = vunpack.c.l.b16 %v360
      %v368 = vunpack.c.h.b16 %v360
      %v369 = vunpack.c.l.b16 %v361
      %v370 = vpack.c.b16 %v365, %v365
      %v371 = vpack.c.b16 %v366, %v366
      %v372 = vpack.c.b16 %v367, %v367
      %v373 = vpack.c.b16 %v368, %v368
      %v374 = vpack.c.b16 %v369, %v369
      %375 = vrot.lane.b32.xlu0 %v370, 127
      %v376 = vpop.permute.xlu0 %375
      %377 = vrot.lane.b32.xlu0 %v371, 127
      %v378 = vpop.permute.xlu0 %377
      %379 = vrot.lane.b32.xlu0 %v372, 127
      %v380 = vpop.permute.xlu0 %379
      %381 = vrot.lane.b32.xlu0 %v373, 127
      %v382 = vpop.permute.xlu0 %381
      %383 = vrot.lane.b32.xlu0 %v374, 127
      %v384 = vpop.permute.xlu0 %383
      %vm385 = vcmask 1039360
      %v386 = vsel %vm385, %v376, %v378
      %v387 = vsel %vm385, %v378, %v380
      %v388 = vsel %vm385, %v380, %v382
      %v389 = vsel %vm385, %v382, %v384
      %390 = vrot.lane.b32.xlu0 %v370, 126
      %v391 = vpop.permute.xlu0 %390
      %392 = vrot.lane.b32.xlu0 %v371, 126
      %v393 = vpop.permute.xlu0 %392
      %394 = vrot.lane.b32.xlu0 %v372, 126
      %v395 = vpop.permute.xlu0 %394
      %396 = vrot.lane.b32.xlu0 %v373, 126
      %v397 = vpop.permute.xlu0 %396
      %398 = vrot.lane.b32.xlu0 %v374, 126
      %v399 = vpop.permute.xlu0 %398
      %vm400 = vcmask 1031168
      %v401 = vsel %vm400, %v391, %v393
      %v402 = vsel %vm400, %v393, %v395
      %v403 = vsel %vm400, %v395, %v397
      %v404 = vsel %vm400, %v397, %v399
      %405 = vrot.lane.b32.xlu0 %v370, 118
      %v406 = vpop.permute.xlu0 %405
      %407 = vrot.lane.b32.xlu0 %v371, 118
      %v408 = vpop.permute.xlu0 %407
      %409 = vrot.lane.b32.xlu0 %v372, 118
      %v410 = vpop.permute.xlu0 %409
      %411 = vrot.lane.b32.xlu0 %v373, 118
      %v412 = vpop.permute.xlu0 %411
      %413 = vrot.lane.b32.xlu0 %v374, 118
      %v414 = vpop.permute.xlu0 %413
      %vm415 = vcmask 965632
      %v416 = vsel %vm415, %v406, %v408
      %v417 = vsel %vm415, %v408, %v410
      %v418 = vsel %vm415, %v410, %v412
      %v419 = vsel %vm415, %v412, %v414
      %420 = vrot.lane.b32.xlu0 %v370, 117
      %v421 = vpop.permute.xlu0 %420
      %422 = vrot.lane.b32.xlu0 %v371, 117
      %v423 = vpop.permute.xlu0 %422
      %424 = vrot.lane.b32.xlu0 %v372, 117
      %v425 = vpop.permute.xlu0 %424
      %426 = vrot.lane.b32.xlu0 %v373, 117
      %v427 = vpop.permute.xlu0 %426
      %428 = vrot.lane.b32.xlu0 %v374, 117
      %v429 = vpop.permute.xlu0 %428
      %vm430 = vcmask 957440
      %v431 = vsel %vm430, %v421, %v423
      %v432 = vsel %vm430, %v423, %v425
      %v433 = vsel %vm430, %v425, %v427
      %v434 = vsel %vm430, %v427, %v429
      %435 = vrot.lane.b32.xlu0 %v370, 116
      %v436 = vpop.permute.xlu0 %435
      %437 = vrot.lane.b32.xlu0 %v371, 116
      %v438 = vpop.permute.xlu0 %437
      %439 = vrot.lane.b32.xlu0 %v372, 116
      %v440 = vpop.permute.xlu0 %439
      %441 = vrot.lane.b32.xlu0 %v373, 116
      %v442 = vpop.permute.xlu0 %441
      %443 = vrot.lane.b32.xlu0 %v374, 116
      %v444 = vpop.permute.xlu0 %443
      %vm445 = vcmask 949248
      %v446 = vsel %vm445, %v436, %v438
      %v447 = vsel %vm445, %v438, %v440
      %v448 = vsel %vm445, %v440, %v442
      %v449 = vsel %vm445, %v442, %v444
      %450 = vrot.lane.b32.xlu0 %v370, 108
      %v451 = vpop.permute.xlu0 %450
      %452 = vrot.lane.b32.xlu0 %v371, 108
      %v453 = vpop.permute.xlu0 %452
      %454 = vrot.lane.b32.xlu0 %v372, 108
      %v455 = vpop.permute.xlu0 %454
      %456 = vrot.lane.b32.xlu0 %v373, 108
      %v457 = vpop.permute.xlu0 %456
      %458 = vrot.lane.b32.xlu0 %v374, 108
      %v459 = vpop.permute.xlu0 %458
      %vm460 = vcmask 883712
      %v461 = vsel %vm460, %v451, %v453
      %v462 = vsel %vm460, %v453, %v455
      %v463 = vsel %vm460, %v455, %v457
      %v464 = vsel %vm460, %v457, %v459
      %465 = vrot.lane.b32.xlu0 %v370, 107
      %v466 = vpop.permute.xlu0 %465
      %467 = vrot.lane.b32.xlu0 %v371, 107
      %v468 = vpop.permute.xlu0 %467
      %469 = vrot.lane.b32.xlu0 %v372, 107
      %v470 = vpop.permute.xlu0 %469
      %471 = vrot.lane.b32.xlu0 %v373, 107
      %v472 = vpop.permute.xlu0 %471
      %473 = vrot.lane.b32.xlu0 %v374, 107
      %v474 = vpop.permute.xlu0 %473
      %vm475 = vcmask 875520
      %v476 = vsel %vm475, %v466, %v468
      %v477 = vsel %vm475, %v468, %v470
      %v478 = vsel %vm475, %v470, %v472
      %v479 = vsel %vm475, %v472, %v474
      %480 = vrot.lane.b32.xlu0 %v370, 106
      %v481 = vpop.permute.xlu0 %480
      %482 = vrot.lane.b32.xlu0 %v371, 106
      %v483 = vpop.permute.xlu0 %482
      %484 = vrot.lane.b32.xlu0 %v372, 106
      %v485 = vpop.permute.xlu0 %484
      %486 = vrot.lane.b32.xlu0 %v373, 106
      %v487 = vpop.permute.xlu0 %486
      %488 = vrot.lane.b32.xlu0 %v374, 106
      %v489 = vpop.permute.xlu0 %488
      %vm490 = vcmask 867328
      %v491 = vsel %vm490, %v481, %v483
      %v492 = vsel %vm490, %v483, %v485
      %v493 = vsel %vm490, %v485, %v487
      %v494 = vsel %vm490, %v487, %v489
      %vm495 = vcmask 1043456
      %v498 = vsel %vm495, %v370, %v386
      %v501 = vsel %vm495, %v371, %v387
      %v504 = vsel %vm495, %v372, %v388
      %v507 = vsel %vm495, %v373, %v389
      %v510 = vsel %vm495, %v374, %v384
      %v513 = vsel %vm495, %v401, %v416
      %v516 = vsel %vm495, %v402, %v417
      %v519 = vsel %vm495, %v403, %v418
      %v522 = vsel %vm495, %v404, %v419
      %v525 = vsel %vm495, %v399, %v414
      %v528 = vsel %vm495, %v431, %v446
      %v531 = vsel %vm495, %v432, %v447
      %v534 = vsel %vm495, %v433, %v448
      %v537 = vsel %vm495, %v434, %v449
      %v540 = vsel %vm495, %v429, %v444
      %v543 = vsel %vm495, %v461, %v476
      %v546 = vsel %vm495, %v462, %v477
      %v549 = vsel %vm495, %v463, %v478
      %v552 = vsel %vm495, %v464, %v479
      %v555 = vsel %vm495, %v459, %v474
      %v556 = vld [vmem:[%s1] sm:$0xf]
      %v557 = vunpack.c.h.b16 %v361
      %v558 = vpack.c.b16 %v557, %v557
      %559 = vrot.lane.b32.xlu0 %v558, 116
      %v560 = vpop.permute.xlu0 %559
      %v561 = vsel %vm445, %v444, %v560
      %562 = vrot.lane.b32.xlu0 %v558, 108
      %v563 = vpop.permute.xlu0 %562
      %v564 = vsel %vm460, %v459, %v563
      %565 = vrot.lane.b32.xlu0 %v558, 107
      %v566 = vpop.permute.xlu0 %565
      %v567 = vsel %vm475, %v474, %v566
      %568 = vrot.lane.b32.xlu0 %v558, 106
      %v569 = vpop.permute.xlu0 %568
      %v570 = vsel %vm490, %v489, %v569
      %v573 = vsel %vm495, %v423, %v438
      %v575 = vsel %vm495, %v429, %v561
      %v578 = vsel %vm495, %v453, %v468
      %v581 = vsel %vm495, %v564, %v567
      %s582 = scalar_lea.vmem %s1, 4
      %v583 = vld [vmem:[%s582] sm:$0xf]
      %604 = vrot.lane.b32.xlu0 %v498, 11
      %v605 = vpop.permute.xlu0 %604
      %606 = vrot.lane.b32.xlu0 %v501, 11
      %v607 = vpop.permute.xlu0 %606
      %608 = vrot.lane.b32.xlu0 %v504, 11
      %v609 = vpop.permute.xlu0 %608
      %610 = vrot.lane.b32.xlu0 %v507, 11
      %v611 = vpop.permute.xlu0 %610
      %612 = vrot.lane.b32.xlu0 %v510, 11
      %v613 = vpop.permute.xlu0 %612
      %614 = vrot.lane.b32.xlu0 %v513, 11
      %v615 = vpop.permute.xlu0 %614
      %616 = vrot.lane.b32.xlu0 %v516, 11
      %v617 = vpop.permute.xlu0 %616
      %618 = vrot.lane.b32.xlu0 %v519, 11
      %v619 = vpop.permute.xlu0 %618
      %620 = vrot.lane.b32.xlu0 %v522, 11
      %v621 = vpop.permute.xlu0 %620
      %622 = vrot.lane.b32.xlu0 %v525, 11
      %v623 = vpop.permute.xlu0 %622
      %624 = vrot.lane.b32.xlu0 %v573, 11
      %v625 = vpop.permute.xlu0 %624
      %626 = vrot.lane.b32.xlu0 %v531, 11
      %v627 = vpop.permute.xlu0 %626
      %628 = vrot.lane.b32.xlu0 %v534, 11
      %v629 = vpop.permute.xlu0 %628
      %630 = vrot.lane.b32.xlu0 %v537, 11
      %v631 = vpop.permute.xlu0 %630
      %632 = vrot.lane.b32.xlu0 %v575, 11
      %v633 = vpop.permute.xlu0 %632
      %634 = vrot.lane.b32.xlu0 %v578, 11
      %v635 = vpop.permute.xlu0 %634
      %636 = vrot.lane.b32.xlu0 %v546, 11
      %v637 = vpop.permute.xlu0 %636
      %638 = vrot.lane.b32.xlu0 %v549, 11
      %v639 = vpop.permute.xlu0 %638
      %640 = vrot.lane.b32.xlu0 %v552, 11
      %v641 = vpop.permute.xlu0 %640
      %642 = vrot.lane.b32.xlu0 %v581, 11
      %v643 = vpop.permute.xlu0 %642
      %644 = vrot.lane.b32.xlu0 %v483, 11
      %v645 = vpop.permute.xlu0 %644
      %646 = vrot.lane.b32.xlu0 %v492, 11
      %v647 = vpop.permute.xlu0 %646
      %648 = vrot.lane.b32.xlu0 %v493, 11
      %v649 = vpop.permute.xlu0 %648
      %650 = vrot.lane.b32.xlu0 %v494, 11
      %v651 = vpop.permute.xlu0 %650
      %652 = vrot.lane.b32.xlu0 %v570, 11
      %v653 = vpop.permute.xlu0 %652
      %vm654 = vcmask 89088
      %v655 = vsel %vm654, %v605, %v607
      %v656 = vsel %vm654, %v607, %v609
      %v657 = vsel %vm654, %v609, %v611
      %v658 = vsel %vm654, %v611, %v613
      %v659 = vsel %vm654, %v615, %v617
      %v660 = vsel %vm654, %v617, %v619
      %v661 = vsel %vm654, %v619, %v621
      %v662 = vsel %vm654, %v621, %v623
      %v663 = vsel %vm654, %v625, %v627
      %v664 = vsel %vm654, %v627, %v629
      %v665 = vsel %vm654, %v629, %v631
      %v666 = vsel %vm654, %v631, %v633
      %v667 = vsel %vm654, %v635, %v637
      %v668 = vsel %vm654, %v637, %v639
      %v669 = vsel %vm654, %v639, %v641
      %v670 = vsel %vm654, %v641, %v643
      %v671 = vsel %vm654, %v645, %v647
      %v672 = vsel %vm654, %v647, %v649
      %v673 = vsel %vm654, %v649, %v651
      %v674 = vsel %vm654, %v651, %v653
      %vm691 = vcmask 588800
      %v693 = vsel %vm691, %v583, 0
      %v696 = vsel %vm495, %v671, 0
      %v699 = vsel %vm495, %v672, 0
      %v702 = vsel %vm495, %v673, 0
      %v705 = vsel %vm495, %v674, 0
      %707 = vmatprep.subr.bf16.mxu0 %v656
      %708 = vmatpush1.bf16.msra.mxu0 %v655
      %709 = vmatprep.subr.bf16.mxu0 %v660
      %710 = vmatpush1.bf16.msra.mxu0 %v659
      %711 = vmatprep.subr.bf16.mxu0 %v664
      %712 = vmatpush1.bf16.msra.mxu0 %v663
      %713 = vmatprep.subr.bf16.mxu0 %v668
      %714 = vmatpush1.bf16.msra.mxu0 %v667
      %715 = vmatprep.subr.bf16.mxu0 %v699
      %716 = vmatpush1.bf16.msra.mxu0 %v696
      %717 = vmatprep.subr.bf16.mxu0 0
      %718 = vmatpush1.bf16.msra.mxu0 0
      %719 = vmatprep.subr.bf16.mxu0 0
      %720 = vmatpush1.bf16.msra.mxu0 0
      %721 = vmatprep.subr.bf16.mxu0 0
      %722 = vmatpush1.bf16.msra.mxu0 0
      %723 = vmatprep.subr.bf16.mxu0 0
      %724 = vmatpush1.bf16.msra.mxu0 0
      %725 = vmatprep.subr.bf16.mxu0 0
      %726 = vmatpush1.bf16.msra.mxu0 0
      %727 = vmatprep.subr.bf16.mxu0 0
      %728 = vmatpush1.bf16.msra.mxu0 0
      %729 = vmatprep.subr.bf16.mxu0 0
      %730 = vmatpush1.bf16.msra.mxu0 0
      %731 = vmatprep.subr.bf16.mxu0 0
      %732 = vmatpush1.bf16.msra.mxu0 0
      %733 = vmatprep.subr.bf16.mxu0 0
      %734 = vmatpush1.bf16.msra.mxu0 0
      %735 = vmatprep.subr.bf16.mxu0 0
      %736 = vmatpush1.bf16.msra.mxu0 0
      %737 = vmatprep.subr.bf16.mxu0 0
      %738 = vmatpush1.bf16.msra.mxu0 0
      %739 = vmatprep.mubr.bf16.mxu0 0
      %740 = vmatmul.mubr.bf16.gmra.mrb[0].mxu0 %v693
      %v741 = vpop.f32.mrb[0].mxu0
      %v742 = vadd.f32 0.0, %v741
      %v743 = vpop.f32.mrb[0].mxu0
      %v744 = vadd.f32 0.0, %v743
      %v745 = vpop.f32.mrb[0].mxu0
      %v746 = vpop.f32.mrb[0].mxu0
      %747 = vdwg.mxu0
      %748 = vmatprep.subr.bf16.mxu0 %v658
      %749 = vmatpush1.bf16.msra.mxu0 %v657
      %750 = vmatprep.subr.bf16.mxu0 %v662
      %751 = vmatpush1.bf16.msra.mxu0 %v661
      %752 = vmatprep.subr.bf16.mxu0 %v666
      %753 = vmatpush1.bf16.msra.mxu0 %v665
      %754 = vmatprep.subr.bf16.mxu0 %v670
      %755 = vmatpush1.bf16.msra.mxu0 %v669
      %756 = vmatprep.subr.bf16.mxu0 %v705
      %757 = vmatpush1.bf16.msra.mxu0 %v702
      %758 = vmatprep.subr.bf16.mxu0 0
      %759 = vmatpush1.bf16.msra.mxu0 0
      %760 = vmatprep.subr.bf16.mxu0 0
      %761 = vmatpush1.bf16.msra.mxu0 0
      %762 = vmatprep.subr.bf16.mxu0 0
      %763 = vmatpush1.bf16.msra.mxu0 0
      %764 = vmatprep.subr.bf16.mxu0 0
      %765 = vmatpush1.bf16.msra.mxu0 0
      %766 = vmatprep.subr.bf16.mxu0 0
      %767 = vmatpush1.bf16.msra.mxu0 0
      %768 = vmatprep.subr.bf16.mxu0 0
      %769 = vmatpush1.bf16.msra.mxu0 0
      %770 = vmatprep.subr.bf16.mxu0 0
      %771 = vmatpush1.bf16.msra.mxu0 0
      %772 = vmatprep.subr.bf16.mxu0 0
      %773 = vmatpush1.bf16.msra.mxu0 0
      %774 = vmatprep.subr.bf16.mxu0 0
      %775 = vmatpush1.bf16.msra.mxu0 0
      %776 = vmatprep.subr.bf16.mxu0 0
      %777 = vmatpush1.bf16.msra.mxu0 0
      %778 = vmatprep.subr.bf16.mxu0 0
      %779 = vmatpush1.bf16.msra.mxu0 0
      %780 = vmatprep.mubr.bf16.mxu0 0
      %781 = vmatmul.mubr.bf16.gmra.mrb[0].mxu0 %v693
      %v782 = vpop.f32.mrb[0].mxu0
      %v783 = vadd.f32 0.0, %v782
      %v784 = vpop.f32.mrb[0].mxu0
      %v785 = vadd.f32 0.0, %v784
      %v786 = vpop.f32.mrb[0].mxu0
      %v787 = vpop.f32.mrb[0].mxu0
      %788 = vdwg.mxu0
      %793 = vrot.lane.b32.xlu0 %v498, 111
      %v794 = vpop.permute.xlu0 %793
      %795 = vrot.lane.b32.xlu0 %v501, 111
      %v796 = vpop.permute.xlu0 %795
      %797 = vrot.lane.b32.xlu0 %v504, 111
      %v798 = vpop.permute.xlu0 %797
      %799 = vrot.lane.b32.xlu0 %v507, 111
      %v800 = vpop.permute.xlu0 %799
      %801 = vrot.lane.b32.xlu0 %v510, 111
      %v802 = vpop.permute.xlu0 %801
      %803 = vrot.lane.b32.xlu0 %v513, 111
      %v804 = vpop.permute.xlu0 %803
      %805 = vrot.lane.b32.xlu0 %v516, 111
      %v806 = vpop.permute.xlu0 %805
      %807 = vrot.lane.b32.xlu0 %v519, 111
      %v808 = vpop.permute.xlu0 %807
      %809 = vrot.lane.b32.xlu0 %v522, 111
      %v810 = vpop.permute.xlu0 %809
      %811 = vrot.lane.b32.xlu0 %v525, 111
      %v812 = vpop.permute.xlu0 %811
      %813 = vrot.lane.b32.xlu0 %v528, 111
      %v814 = vpop.permute.xlu0 %813
      %815 = vrot.lane.b32.xlu0 %v531, 111
      %v816 = vpop.permute.xlu0 %815
      %817 = vrot.lane.b32.xlu0 %v534, 111
      %v818 = vpop.permute.xlu0 %817
      %819 = vrot.lane.b32.xlu0 %v537, 111
      %v820 = vpop.permute.xlu0 %819
      %821 = vrot.lane.b32.xlu0 %v540, 111
      %v822 = vpop.permute.xlu0 %821
      %823 = vrot.lane.b32.xlu0 %v543, 111
      %v824 = vpop.permute.xlu0 %823
      %825 = vrot.lane.b32.xlu0 %v546, 111
      %v826 = vpop.permute.xlu0 %825
      %827 = vrot.lane.b32.xlu0 %v549, 111
      %v828 = vpop.permute.xlu0 %827
      %829 = vrot.lane.b32.xlu0 %v552, 111
      %v830 = vpop.permute.xlu0 %829
      %831 = vrot.lane.b32.xlu0 %v555, 111
      %v832 = vpop.permute.xlu0 %831
      %833 = vrot.lane.b32.xlu0 %v491, 111
      %v834 = vpop.permute.xlu0 %833
      %835 = vrot.lane.b32.xlu0 %v492, 111
      %v836 = vpop.permute.xlu0 %835
      %837 = vrot.lane.b32.xlu0 %v493, 111
      %v838 = vpop.permute.xlu0 %837
      %839 = vrot.lane.b32.xlu0 %v494, 111
      %v840 = vpop.permute.xlu0 %839
      %841 = vrot.lane.b32.xlu0 %v489, 111
      %v842 = vpop.permute.xlu0 %841
      %vm843 = vcmask 908288
      %v844 = vsel %vm843, %v794, %v796
      %v845 = vsel %vm843, %v796, %v798
      %v846 = vsel %vm843, %v798, %v800
      %v847 = vsel %vm843, %v800, %v802
      %v848 = vsel %vm843, %v804, %v806
      %v849 = vsel %vm843, %v806, %v808
      %v850 = vsel %vm843, %v808, %v810
      %v851 = vsel %vm843, %v810, %v812
      %v852 = vsel %vm843, %v814, %v816
      %v853 = vsel %vm843, %v816, %v818
      %v854 = vsel %vm843, %v818, %v820
      %v855 = vsel %vm843, %v820, %v822
      %v856 = vsel %vm843, %v824, %v826
      %v857 = vsel %vm843, %v826, %v828
      %v858 = vsel %vm843, %v828, %v830
      %v859 = vsel %vm843, %v830, %v832
      %v860 = vsel %vm843, %v834, %v836
      %v861 = vsel %vm843, %v836, %v838
      %v862 = vsel %vm843, %v838, %v840
      %v863 = vsel %vm843, %v840, %v842
      %v881 = vsel %vm691, %v556, 0
      %v884 = vsel %vm495, %v860, 0
      %v887 = vsel %vm495, %v861, 0
      %v890 = vsel %vm495, %v862, 0
      %v893 = vsel %vm495, %v863, 0
      %895 = vmatprep.subr.bf16.mxu0 %v845
      %896 = vmatpush1.bf16.msra.mxu0 %v844
      %897 = vmatprep.subr.bf16.mxu0 %v849
      %898 = vmatpush1.bf16.msra.mxu0 %v848
      %899 = vmatprep.subr.bf16.mxu0 %v853
      %900 = vmatpush1.bf16.msra.mxu0 %v852
      %901 = vmatprep.subr.bf16.mxu0 %v857
      %902 = vmatpush1.bf16.msra.mxu0 %v856
      %903 = vmatprep.subr.bf16.mxu0 %v887
      %904 = vmatpush1.bf16.msra.mxu0 %v884
      %905 = vmatprep.subr.bf16.mxu0 0
      %906 = vmatpush1.bf16.msra.mxu0 0
      %907 = vmatprep.subr.bf16.mxu0 0
      %908 = vmatpush1.bf16.msra.mxu0 0
      %909 = vmatprep.subr.bf16.mxu0 0
      %910 = vmatpush1.bf16.msra.mxu0 0
      %911 = vmatprep.subr.bf16.mxu0 0
      %912 = vmatpush1.bf16.msra.mxu0 0
      %913 = vmatprep.subr.bf16.mxu0 0
      %914 = vmatpush1.bf16.msra.mxu0 0
      %915 = vmatprep.subr.bf16.mxu0 0
      %916 = vmatpush1.bf16.msra.mxu0 0
      %917 = vmatprep.subr.bf16.mxu0 0
      %918 = vmatpush1.bf16.msra.mxu0 0
      %919 = vmatprep.subr.bf16.mxu0 0
      %920 = vmatpush1.bf16.msra.mxu0 0
      %921 = vmatprep.subr.bf16.mxu0 0
      %922 = vmatpush1.bf16.msra.mxu0 0
      %923 = vmatprep.subr.bf16.mxu0 0
      %924 = vmatpush1.bf16.msra.mxu0 0
      %925 = vmatprep.subr.bf16.mxu0 0
      %926 = vmatpush1.bf16.msra.mxu0 0
      %927 = vmatprep.mubr.bf16.mxu0 0
      %928 = vmatmul.mubr.bf16.gmra.mrb[0].mxu0 %v881
      %v929 = vpop.f32.mrb[0].mxu0
      %v930 = vadd.f32 %v742, %v929
      %v931 = vpop.f32.mrb[0].mxu0
      %v932 = vadd.f32 %v744, %v931
      %v933 = vpop.f32.mrb[0].mxu0
      %v934 = vpop.f32.mrb[0].mxu0
      %935 = vdwg.mxu0
      %936 = vmatprep.subr.bf16.mxu0 %v847
      %937 = vmatpush1.bf16.msra.mxu0 %v846
      %938 = vmatprep.subr.bf16.mxu0 %v851
      %939 = vmatpush1.bf16.msra.mxu0 %v850
      %940 = vmatprep.subr.bf16.mxu0 %v855
      %941 = vmatpush1.bf16.msra.mxu0 %v854
      %942 = vmatprep.subr.bf16.mxu0 %v859
      %943 = vmatpush1.bf16.msra.mxu0 %v858
      %944 = vmatprep.subr.bf16.mxu0 %v893
      %945 = vmatpush1.bf16.msra.mxu0 %v890
      %946 = vmatprep.subr.bf16.mxu0 0
      %947 = vmatpush1.bf16.msra.mxu0 0
      %948 = vmatprep.subr.bf16.mxu0 0
      %949 = vmatpush1.bf16.msra.mxu0 0
      %950 = vmatprep.subr.bf16.mxu0 0
      %951 = vmatpush1.bf16.msra.mxu0 0
      %952 = vmatprep.subr.bf16.mxu0 0
      %953 = vmatpush1.bf16.msra.mxu0 0
      %954 = vmatprep.subr.bf16.mxu0 0
      %955 = vmatpush1.bf16.msra.mxu0 0
      %956 = vmatprep.subr.bf16.mxu0 0
      %957 = vmatpush1.bf16.msra.mxu0 0
      %958 = vmatprep.subr.bf16.mxu0 0
      %959 = vmatpush1.bf16.msra.mxu0 0
      %960 = vmatprep.subr.bf16.mxu0 0
      %961 = vmatpush1.bf16.msra.mxu0 0
      %962 = vmatprep.subr.bf16.mxu0 0
      %963 = vmatpush1.bf16.msra.mxu0 0
      %964 = vmatprep.subr.bf16.mxu0 0
      %965 = vmatpush1.bf16.msra.mxu0 0
      %966 = vmatprep.subr.bf16.mxu0 0
      %967 = vmatpush1.bf16.msra.mxu0 0
      %968 = vmatprep.mubr.bf16.mxu0 0
      %969 = vmatmul.mubr.bf16.gmra.mrb[0].mxu0 %v881
      %v970 = vpop.f32.mrb[0].mxu0
      %v971 = vadd.f32 %v783, %v970
      %v972 = vpop.f32.mrb[0].mxu0
      %v973 = vadd.f32 %v785, %v972
      %v974 = vpop.f32.mrb[0].mxu0
      %v975 = vpop.f32.mrb[0].mxu0
      %976 = vdwg.mxu0
      %977 = vrot.lane.b32.xlu0 %v371, 39
      %v978 = vpop.permute.xlu0 %977
      %979 = vrot.lane.b32.xlu0 %v372, 39
      %v980 = vpop.permute.xlu0 %979
      %981 = vrot.lane.b32.xlu0 %v373, 39
      %v982 = vpop.permute.xlu0 %981
      %983 = vrot.lane.b32.xlu0 %v374, 39
      %v984 = vpop.permute.xlu0 %983
      %985 = vrot.lane.b32.xlu0 %v558, 39
      %v986 = vpop.permute.xlu0 %985
      %vm987 = vcmask 318464
      %v988 = vsel %vm987, %v978, %v980
      %v989 = vsel %vm987, %v980, %v982
      %v990 = vsel %vm987, %v982, %v984
      %v991 = vsel %vm987, %v984, %v986
      %992 = vrot.lane.b32.xlu0 %v371, 38
      %v993 = vpop.permute.xlu0 %992
      %994 = vrot.lane.b32.xlu0 %v372, 38
      %v995 = vpop.permute.xlu0 %994
      %996 = vrot.lane.b32.xlu0 %v373, 38
      %v997 = vpop.permute.xlu0 %996
      %998 = vrot.lane.b32.xlu0 %v374, 38
      %v999 = vpop.permute.xlu0 %998
      %1000 = vrot.lane.b32.xlu0 %v558, 38
      %v1001 = vpop.permute.xlu0 %1000
      %vm1002 = vcmask 310272
      %v1003 = vsel %vm1002, %v993, %v995
      %v1004 = vsel %vm1002, %v995, %v997
      %v1005 = vsel %vm1002, %v997, %v999
      %v1006 = vsel %vm1002, %v999, %v1001
      %1007 = vrot.lane.b32.xlu0 %v371, 37
      %v1008 = vpop.permute.xlu0 %1007
      %1009 = vrot.lane.b32.xlu0 %v372, 37
      %v1010 = vpop.permute.xlu0 %1009
      %1011 = vrot.lane.b32.xlu0 %v373, 37
      %v1012 = vpop.permute.xlu0 %1011
      %1013 = vrot.lane.b32.xlu0 %v374, 37
      %v1014 = vpop.permute.xlu0 %1013
      %1015 = vrot.lane.b32.xlu0 %v558, 37
      %v1016 = vpop.permute.xlu0 %1015
      %vm1017 = vcmask 302080
      %v1018 = vsel %vm1017, %v1008, %v1010
      %v1019 = vsel %vm1017, %v1010, %v1012
      %v1020 = vsel %vm1017, %v1012, %v1014
      %v1021 = vsel %vm1017, %v1014, %v1016
      %1022 = vrot.lane.b32.xlu0 %v371, 29
      %v1023 = vpop.permute.xlu0 %1022
      %1024 = vrot.lane.b32.xlu0 %v372, 29
      %v1025 = vpop.permute.xlu0 %1024
      %1026 = vrot.lane.b32.xlu0 %v373, 29
      %v1027 = vpop.permute.xlu0 %1026
      %1028 = vrot.lane.b32.xlu0 %v374, 29
      %v1029 = vpop.permute.xlu0 %1028
      %1030 = vrot.lane.b32.xlu0 %v558, 29
      %v1031 = vpop.permute.xlu0 %1030
      %vm1032 = vcmask 236544
      %v1033 = vsel %vm1032, %v1023, %v1025
      %v1034 = vsel %vm1032, %v1025, %v1027
      %v1035 = vsel %vm1032, %v1027, %v1029
      %v1036 = vsel %vm1032, %v1029, %v1031
      %1037 = vrot.lane.b32.xlu0 %v371, 28
      %v1038 = vpop.permute.xlu0 %1037
      %1039 = vrot.lane.b32.xlu0 %v372, 28
      %v1040 = vpop.permute.xlu0 %1039
      %1041 = vrot.lane.b32.xlu0 %v373, 28
      %v1042 = vpop.permute.xlu0 %1041
      %1043 = vrot.lane.b32.xlu0 %v374, 28
      %v1044 = vpop.permute.xlu0 %1043
      %1045 = vrot.lane.b32.xlu0 %v558, 28
      %v1046 = vpop.permute.xlu0 %1045
      %vm1047 = vcmask 228352
      %v1048 = vsel %vm1047, %v1038, %v1040
      %v1049 = vsel %vm1047, %v1040, %v1042
      %v1050 = vsel %vm1047, %v1042, %v1044
      %v1051 = vsel %vm1047, %v1044, %v1046
      %1052 = vrot.lane.b32.xlu0 %v371, 27
      %v1053 = vpop.permute.xlu0 %1052
      %1054 = vrot.lane.b32.xlu0 %v372, 27
      %v1055 = vpop.permute.xlu0 %1054
      %1056 = vrot.lane.b32.xlu0 %v373, 27
      %v1057 = vpop.permute.xlu0 %1056
      %1058 = vrot.lane.b32.xlu0 %v374, 27
      %v1059 = vpop.permute.xlu0 %1058
      %1060 = vrot.lane.b32.xlu0 %v558, 27
      %v1061 = vpop.permute.xlu0 %1060
      %vm1062 = vcmask 220160
      %v1063 = vsel %vm1062, %v1053, %v1055
      %v1064 = vsel %vm1062, %v1055, %v1057
      %v1065 = vsel %vm1062, %v1057, %v1059
      %v1066 = vsel %vm1062, %v1059, %v1061
      %1067 = vrot.lane.b32.xlu0 %v371, 19
      %v1068 = vpop.permute.xlu0 %1067
      %1069 = vrot.lane.b32.xlu0 %v372, 19
      %v1070 = vpop.permute.xlu0 %1069
      %1071 = vrot.lane.b32.xlu0 %v373, 19
      %v1072 = vpop.permute.xlu0 %1071
      %1073 = vrot.lane.b32.xlu0 %v374, 19
      %v1074 = vpop.permute.xlu0 %1073
      %1075 = vrot.lane.b32.xlu0 %v558, 19
      %v1076 = vpop.permute.xlu0 %1075
      %vm1077 = vcmask 154624
      %v1078 = vsel %vm1077, %v1068, %v1070
      %v1079 = vsel %vm1077, %v1070, %v1072
      %v1080 = vsel %vm1077, %v1072, %v1074
      %v1081 = vsel %vm1077, %v1074, %v1076
      %1082 = vrot.lane.b32.xlu0 %v371, 18
      %v1083 = vpop.permute.xlu0 %1082
      %1084 = vrot.lane.b32.xlu0 %v372, 18
      %v1085 = vpop.permute.xlu0 %1084
      %1086 = vrot.lane.b32.xlu0 %v373, 18
      %v1087 = vpop.permute.xlu0 %1086
      %1088 = vrot.lane.b32.xlu0 %v374, 18
      %v1089 = vpop.permute.xlu0 %1088
      %1090 = vrot.lane.b32.xlu0 %v558, 18
      %v1091 = vpop.permute.xlu0 %1090
      %vm1092 = vcmask 146432
      %v1093 = vsel %vm1092, %v1083, %v1085
      %v1094 = vsel %vm1092, %v1085, %v1087
      %v1095 = vsel %vm1092, %v1087, %v1089
      %v1096 = vsel %vm1092, %v1089, %v1091
      %1097 = vrot.lane.b32.xlu0 %v371, 17
      %v1098 = vpop.permute.xlu0 %1097
      %1099 = vrot.lane.b32.xlu0 %v372, 17
      %v1100 = vpop.permute.xlu0 %1099
      %1101 = vrot.lane.b32.xlu0 %v373, 17
      %v1102 = vpop.permute.xlu0 %1101
      %1103 = vrot.lane.b32.xlu0 %v374, 17
      %v1104 = vpop.permute.xlu0 %1103
      %1105 = vrot.lane.b32.xlu0 %v558, 17
      %v1106 = vpop.permute.xlu0 %1105
      %vm1107 = vcmask 138240
      %v1108 = vsel %vm1107, %v1098, %v1100
      %v1109 = vsel %vm1107, %v1100, %v1102
      %v1110 = vsel %vm1107, %v1102, %v1104
      %v1111 = vsel %vm1107, %v1104, %v1106
      %v1114 = vsel %vm495, %v988, %v1003
      %v1118 = vsel %vm495, %v989, %v1004
      %v1122 = vsel %vm495, %v990, %v1005
      %v1126 = vsel %vm495, %v991, %v1006
      %v1130 = vsel %vm495, %v1018, %v1033
      %v1134 = vsel %vm495, %v1019, %v1034
      %v1138 = vsel %vm495, %v1020, %v1035
      %v1142 = vsel %vm495, %v1021, %v1036
      %v1146 = vsel %vm495, %v1048, %v1063
      %v1150 = vsel %vm495, %v1049, %v1064
      %v1154 = vsel %vm495, %v1050, %v1065
      %v1158 = vsel %vm495, %v1051, %v1066
      %v1162 = vsel %vm495, %v1078, %v1093
      %v1166 = vsel %vm495, %v1079, %v1094
      %v1170 = vsel %vm495, %v1080, %v1095
      %v1174 = vsel %vm495, %v1081, %v1096
      %s1176 = scalar_lea.vmem %s1, 8
      %v1177 = vld [vmem:[%s1176] sm:$0xf]
      %v1179 = vsel %vm691, %v1177, 0
      %v1182 = vsel %vm495, %v1108, 0
      %v1185 = vsel %vm495, %v1109, 0
      %v1188 = vsel %vm495, %v1110, 0
      %v1191 = vsel %vm495, %v1111, 0
      %1193 = vmatprep.subr.bf16.mxu0 %v1118
      %1194 = vmatpush1.bf16.msra.mxu0 %v1114
      %1195 = vmatprep.subr.bf16.mxu0 %v1134
      %1196 = vmatpush1.bf16.msra.mxu0 %v1130
      %1197 = vmatprep.subr.bf16.mxu0 %v1150
      %1198 = vmatpush1.bf16.msra.mxu0 %v1146
      %1199 = vmatprep.subr.bf16.mxu0 %v1166
      %1200 = vmatpush1.bf16.msra.mxu0 %v1162
      %1201 = vmatprep.subr.bf16.mxu0 %v1185
      %1202 = vmatpush1.bf16.msra.mxu0 %v1182
      %1203 = vmatprep.subr.bf16.mxu0 0
      %1204 = vmatpush1.bf16.msra.mxu0 0
      %1205 = vmatprep.subr.bf16.mxu0 0
      %1206 = vmatpush1.bf16.msra.mxu0 0
      %1207 = vmatprep.subr.bf16.mxu0 0
      %1208 = vmatpush1.bf16.msra.mxu0 0
      %1209 = vmatprep.subr.bf16.mxu0 0
      %1210 = vmatpush1.bf16.msra.mxu0 0
      %1211 = vmatprep.subr.bf16.mxu0 0
      %1212 = vmatpush1.bf16.msra.mxu0 0
      %1213 = vmatprep.subr.bf16.mxu0 0
      %1214 = vmatpush1.bf16.msra.mxu0 0
      %1215 = vmatprep.subr.bf16.mxu0 0
      %1216 = vmatpush1.bf16.msra.mxu0 0
      %1217 = vmatprep.subr.bf16.mxu0 0
      %1218 = vmatpush1.bf16.msra.mxu0 0
      %1219 = vmatprep.subr.bf16.mxu0 0
      %1220 = vmatpush1.bf16.msra.mxu0 0
      %1221 = vmatprep.subr.bf16.mxu0 0
      %1222 = vmatpush1.bf16.msra.mxu0 0
      %1223 = vmatprep.subr.bf16.mxu0 0
      %1224 = vmatpush1.bf16.msra.mxu0 0
      %1225 = vmatprep.mubr.bf16.mxu0 0
      %1226 = vmatmul.mubr.bf16.gmra.mrb[0].mxu0 %v1179
      %v1227 = vpop.f32.mrb[0].mxu0
      %v1228 = vadd.f32 0.0, %v1227
      %v1229 = vpop.f32.mrb[0].mxu0
      %v1230 = vadd.f32 0.0, %v1229
      %v1231 = vpop.f32.mrb[0].mxu0
      %v1232 = vpop.f32.mrb[0].mxu0
      %1233 = vdwg.mxu0
      %1234 = vmatprep.subr.bf16.mxu0 %v1126
      %1235 = vmatpush1.bf16.msra.mxu0 %v1122
      %1236 = vmatprep.subr.bf16.mxu0 %v1142
      %1237 = vmatpush1.bf16.msra.mxu0 %v1138
      %1238 = vmatprep.subr.bf16.mxu0 %v1158
      %1239 = vmatpush1.bf16.msra.mxu0 %v1154
      %1240 = vmatprep.subr.bf16.mxu0 %v1174
      %1241 = vmatpush1.bf16.msra.mxu0 %v1170
      %1242 = vmatprep.subr.bf16.mxu0 %v1191
      %1243 = vmatpush1.bf16.msra.mxu0 %v1188
      %1244 = vmatprep.subr.bf16.mxu0 0
      %1245 = vmatpush1.bf16.msra.mxu0 0
      %1246 = vmatprep.subr.bf16.mxu0 0
      %1247 = vmatpush1.bf16.msra.mxu0 0
      %1248 = vmatprep.subr.bf16.mxu0 0
      %1249 = vmatpush1.bf16.msra.mxu0 0
      %1250 = vmatprep.subr.bf16.mxu0 0
      %1251 = vmatpush1.bf16.msra.mxu0 0
      %1252 = vmatprep.subr.bf16.mxu0 0
      %1253 = vmatpush1.bf16.msra.mxu0 0
      %1254 = vmatprep.subr.bf16.mxu0 0
      %1255 = vmatpush1.bf16.msra.mxu0 0
      %1256 = vmatprep.subr.bf16.mxu0 0
      %1257 = vmatpush1.bf16.msra.mxu0 0
      %1258 = vmatprep.subr.bf16.mxu0 0
      %1259 = vmatpush1.bf16.msra.mxu0 0
      %1260 = vmatprep.subr.bf16.mxu0 0
      %1261 = vmatpush1.bf16.msra.mxu0 0
      %1262 = vmatprep.subr.bf16.mxu0 0
      %1263 = vmatpush1.bf16.msra.mxu0 0
      %1264 = vmatprep.subr.bf16.mxu0 0
      %1265 = vmatpush1.bf16.msra.mxu0 0
      %1266 = vmatprep.mubr.bf16.mxu0 0
      %1267 = vmatmul.mubr.bf16.gmra.mrb[0].mxu0 %v1179
      %v1268 = vpop.f32.mrb[0].mxu0
      %v1269 = vadd.f32 0.0, %v1268
      %v1270 = vpop.f32.mrb[0].mxu0
      %v1271 = vadd.f32 0.0, %v1270
      %v1272 = vpop.f32.mrb[0].mxu0
      %v1273 = vpop.f32.mrb[0].mxu0
      %1274 = vdwg.mxu0
      %v1275 = vadd.f32 %v930, %v1228
      %v1276 = vadd.f32 %v932, %v1230
      %v1277 = vadd.f32 %v971, %v1269
      %v1278 = vadd.f32 %v973, %v1271
      %1279 = vst [vmem:[%s217] sm:$0xff] %v1275
      %1280 = vst [vmem:[%s217 + $0x8] sm:$0xff] %v1276
      %1281 = vst [vmem:[%s217 + $0x10] sm:$0xff] %v1277
      %1282 = vst [vmem:[%s217 + $0x18] sm:$0xff] %v1278
      %v1283 = vld [vmem:[%s207] sm:$0xf]
      %vm1284 = vcmp.gt.f32.partialorder %v1283, 0.5
      %v1285 = vsel %vm1284, 1, 0
      %v1286 = vlaneseq
      %v1287 = vshrl.u32 %v1286, 7
      %v1288 = vsub.s32 0, %v1287
      %v1289 = vrot.slane %v1285, %v1288
      %v1290 = vlaneseq
      %v1291 = vshrl.u32 %v1290, 7
      %v1292 = vsub.s32 1, %v1291
      %v1293 = vrot.slane %v1285, %v1292
      %v1294 = vlaneseq
      %v1295 = vshrl.u32 %v1294, 7
      %v1296 = vsub.s32 2, %v1295
      %v1297 = vrot.slane %v1285, %v1296
      %v1298 = vlaneseq
      %v1299 = vshrl.u32 %v1298, 7
      %v1300 = vsub.s32 3, %v1299
      %v1301 = vrot.slane %v1285, %v1300
      %vm1302 = vcmp.eq.s32.totalorder %v1289, 1
      %vm1303 = vcmp.eq.s32.totalorder %v1293, 1
      %vm1304 = vcmp.eq.s32.totalorder %v1297, 1
      %vm1305 = vcmp.eq.s32.totalorder %v1301, 1
      %v1306 = vsel %vm1302, %v1275, 0.0
      %v1307 = vsel %vm1303, %v1276, 0.0
      %v1308 = vsel %vm1304, %v1277, 0.0
      %v1309 = vsel %vm1305, %v1278, 0.0
      %v1310 = vadd.f32 %v1306, %v1307
      %v1311 = vadd.f32 %v1310, %v1308
      %v1312 = vadd.f32 %v1311, %v1309
      %1313 = vadd.xlane.f32.xlu0 %v1312
      %v1314 = vpop.xlane.xlu0 %1313
      %v1315 = vmul.f32 %v1306, %v1306
      %v1316 = vmul.f32 %v1307, %v1307
      %v1317 = vmul.f32 %v1308, %v1308
      %v1318 = vmul.f32 %v1309, %v1309
      %v1319 = vadd.f32 %v1315, %v1316
      %v1320 = vadd.f32 %v1319, %v1317
      %v1321 = vadd.f32 %v1320, %v1318
      %1322 = vadd.xlane.f32.xlu0 %v1321
      %v1323 = vpop.xlane.xlu0 %1322
      %vm1324 = vcmask 7168
      %v1325 = vsel %vm1324, %v1314, %v1323
      %vm1326 = vcmask 15360
      %1327 = vst.msk [vmem:[%s226] sm:$0xff] %vm1326, %v1325
      %s1328 = smul.u32 %s20, 2
      %s1329 = sadd.s32 %s1328, %s21
      %s1330 = smul.u32 4, %s1329
      %p1331 = scmp.lt.s32.totalorder %s1330, 15
      %s1332 = scalar_select %p1331, %s1330, 15
      %s1333 = smul.addr %s1332, 8
      %s1334 = scalar_lea.vmem %s3, %s1333
      %s1335 = smul.u32 %s20, 2
      %s1336 = sadd.s32 %s1335, %s21
      %p1337 = scmp.lt.s32.totalorder %s1336, 3
      %s1338 = scalar_select %p1337, %s1336, 3
      %s1339 = smul.addr %s1338, 8
      %s1340 = scalar_lea.vmem %s4, %s1339
      // Predicated region
      $region105: #{voxception_resnet_forward.7} parent=27 // pred_check
        %p1341 = pneg %p101
      $region106: #{voxception_resnet_forward.7} parent=27 // pred_check_branch
        %1343 = sbr.rel (%p1341) target = $region108
      $region107: #{voxception_resnet_forward.7} parent=27 // pred_region
        %s1344 = smul.u32 %s20, 2
        %s1345 = sadd.s32 %s1344, %s21
        %s1346 = smul.u32 4, %s1345
      $region108: #{voxception_resnet_forward.7} parent=27 // pred_fallthru
        _
      // Predicated region
      $region109: #{voxception_resnet_forward.7} parent=27 // pred_check
        %p1347 = pneg %p131
      $region110: #{voxception_resnet_forward.7} parent=27 // pred_check_branch
        %1349 = sbr.rel (%p1347) target = $region112
      $region111: #{voxception_resnet_forward.7} parent=27 // pred_region
        %s1350 = smul.u32 %s20, 2
        %s1351 = sadd.s32 %s1350, %s21
      $region112: #{voxception_resnet_forward.7} parent=27 // pred_fallthru
        _
    $region28: #{voxception_resnet_forward.7} parent=5 // pred_fallthru
      _
    %p1352 = scmp.le.s32.totalorder 2, %s11
    // Predicated region
    $region113: #{voxception_resnet_forward.7} parent=5 // pred_check
      %p1353 = pneg %p1352
    $region114: #{voxception_resnet_forward.7} parent=5 // pred_check_branch
      %1355 = sbr.rel (%p1353) target = $region116
    $region115: #{voxception_resnet_forward.7} parent=5 // pred_region
      %s1356 = ssub.s32 %s11, 2
      // Predicated region
      $region117: #{voxception_resnet_forward.7} parent=115 // pred_check
        %p1357 = pneg %p107
      $region118: #{voxception_resnet_forward.7} parent=115 // pred_check_branch
        %1359 = sbr.rel (%p1357) target = $region120
      $region119: #{voxception_resnet_forward.7} parent=115 // pred_region
        %s1360 = smul.u32 %s22, 2
        %s1361 = sadd.s32 %s1360, %s23
        %s1362 = smul.u32 4, %s1361
        %p1363 = scmp.lt.s32.totalorder %s1362, 15
        %s1364 = scalar_select %p1363, %s1362, 15
        %s1365 = smul.addr %s1364, 8
        %s1366 = scalar_lea.vmem %s3, %s1365
      $region120: #{voxception_resnet_forward.7} parent=115 // pred_fallthru
        _
      // Predicated region
      $region121: #{voxception_resnet_forward.7} parent=115 // pred_check
        %p1367 = pneg %p137
      $region122: #{voxception_resnet_forward.7} parent=115 // pred_check_branch
        %1369 = sbr.rel (%p1367) target = $region124
      $region123: #{voxception_resnet_forward.7} parent=115 // pred_region
        %s1370 = smul.u32 %s22, 2
        %s1371 = sadd.s32 %s1370, %s23
        %p1372 = scmp.lt.s32.totalorder %s1371, 3
        %s1373 = scalar_select %p1372, %s1371, 3
        %s1374 = smul.addr %s1373, 8
        %s1375 = scalar_lea.vmem %s4, %s1374
      $region124: #{voxception_resnet_forward.7} parent=115 // pred_fallthru
        _
    $region116: #{voxception_resnet_forward.7} parent=5 // pred_fallthru
      _
  $region6: #{voxception_resnet_forward.7} parent=0 // loop_footer
    %s15 = sadd.s32 1, %s11
  $region7: #{voxception_resnet_forward.7} parent=0 // loop_footer_branch
    %10 = sbr.rel target = $region3
  $region8: #{voxception_resnet_forward.7} parent=0 // loop_exit
    _
  %1376 = vsyncmov [#allocation3]
  %s1377 = vpop.sfrf %1376
  %p1378 = scmp.eq.s32.totalorder %s1377, 0
  %p1379 = pneg %p1378
  %1381 = shalt.err (%p1379)
  %s1382 = scalar_lea.sflag [#allocation3], 1
  %1383 = vsyncmov %s1382
  %s1384 = vpop.sfrf %1383
  %p1385 = scmp.eq.s32.totalorder %s1384, 0
  %p1386 = pneg %p1385
  %1388 = shalt.err (%p1386)

// kernel: voxception_resnet_forward.11
$region0: #{voxception_resnet_forward.11}
  #allocation0 [shape = 'u32[]', space=smem, size = 0x4, offset = 0x4, fixed_abs, tag = 'smem constant byte address 0x4 - core index']
  #allocation1 [shape = 'u32[144,128]{1,0:T(1,128)}', space=vmem, size = 0x12000, scoped, tag = 'internal scratch']
  %s0 = inlined_call_operand.vmem [shape: f32[8,2048], index: 0, kind: input, shape index: {}]
  %s1 = inlined_call_operand.vmem [shape: f32[4,1], index: 1, kind: input, shape index: {}]
  %s2 = inlined_call_operand.vmem [shape: f32[4,1], index: 2, kind: input, shape index: {}]
  %s3 = inlined_call_operand.vmem [shape: f32[1,2048], index: 3, kind: input, shape index: {}]
  %s4 = inlined_call_operand.vmem [shape: bf16[4,2048], index: 4, kind: output, shape index: {}]
  %s5 = sld [smem:[#allocation0]]
  $region49: #{voxception_resnet_forward.11} parent=0
    _
  %s7 = ssub.s32 1, %s5
  %s8 = scalar_select 0, %s7, %s5
  loop: start=0, step=1, limit=6
  $region2: #{voxception_resnet_forward.11} parent=0 // loop_pre_header
    _
  $region3: #{voxception_resnet_forward.11} parent=0 // loop_header
    %s10 = sphi 0, %s14
    %p11 = scmp.ge.s32.totalorder %s10, 6
    %s20 = sphi 0, %s22
    %s23 = sphi 0, %s20
    %s24 = sphi 0, %s23
    %s40 = sphi 0, %s24
    %s44 = sphi 0, %s44
    %s46 = sphi 0, %s44
    %s47 = sphi 0, %s46
    %s61 = sphi 0, %s47
    %s65 = sphi 0, %s65
    %s67 = sphi 0, %s65
    %s68 = sphi 0, %s67
    %s82 = sphi 0, %s68
    %s88 = sphi 0, %s90
    %s91 = sphi 0, %s88
    %s92 = sphi 0, %s91
    %s108 = sphi 0, %s92
    %s114 = sphi 0, %s116
    %s117 = sphi 0, %s114
    %s118 = sphi 0, %s117
    %s134 = sphi 0, %s118
  $region4: #{voxception_resnet_forward.11} parent=0 // loop_header_branch
    %13 = sbr.rel (%p11) target = $region8
  $region5: #{voxception_resnet_forward.11} parent=0 // loop_body
    %s15 = ssub.s32 %s10, 1
    %s16 = ssub.s32 %s10, 2
    %s17 = sadd.s32 %s10, 1
    %s18 = ssub.s32 %s10, %s17
    %p19 = scmp.eq.s32.totalorder %s18, 0
    %s21 = sadd.s32 %s20, 1
    %s22 = scalar_select %p19, %s20, %s21
    %p25 = pneg %p19
    %p26 = scmp.eq.s32.totalorder %s10, 3
    %p27 = por %p25, %p26
    %p28 = scmp.ne.s32.totalorder %s20, %s23
    %p29 = scmp.eq.s32.totalorder %s10, 0
    %p30 = por %p28, %p29
    %p31 = scmp.ne.s32.totalorder %s20, %s23
    %p32 = scmp.eq.s32.totalorder %s15, 3
    %p33 = por %p31, %p32
    %p34 = scmp.ne.s32.totalorder %s23, %s24
    %p35 = scmp.eq.s32.totalorder %s15, 0
    %p36 = por %p34, %p35
    %p37 = scmp.ne.s32.totalorder %s23, %s24
    %p38 = scmp.eq.s32.totalorder %s16, 3
    %p39 = por %p37, %p38
    %p41 = scmp.ne.s32.totalorder %s24, %s40
    %p42 = scmp.eq.s32.totalorder %s16, 0
    %p43 = por %p41, %p42
    %s45 = sadd.s32 %s44, 1
    %p48 = scmp.eq.s32.totalorder %s10, 3
    %p49 = scmp.ne.s32.totalorder %s44, %s46
    %p50 = scmp.eq.s32.totalorder %s10, 0
    %p51 = por %p49, %p50
    %p52 = scmp.ne.s32.totalorder %s44, %s46
    %p53 = scmp.eq.s32.totalorder %s15, 3
    %p54 = por %p52, %p53
    %p55 = scmp.ne.s32.totalorder %s46, %s47
    %p56 = scmp.eq.s32.totalorder %s15, 0
    %p57 = por %p55, %p56
    %p58 = scmp.ne.s32.totalorder %s46, %s47
    %p59 = scmp.eq.s32.totalorder %s16, 3
    %p60 = por %p58, %p59
    %p62 = scmp.ne.s32.totalorder %s47, %s61
    %p63 = scmp.eq.s32.totalorder %s16, 0
    %p64 = por %p62, %p63
    %s66 = sadd.s32 %s65, 1
    %p69 = scmp.eq.s32.totalorder %s10, 3
    %p70 = scmp.ne.s32.totalorder %s65, %s67
    %p71 = scmp.eq.s32.totalorder %s10, 0
    %p72 = por %p70, %p71
    %p73 = scmp.ne.s32.totalorder %s65, %s67
    %p74 = scmp.eq.s32.totalorder %s15, 3
    %p75 = por %p73, %p74
    %p76 = scmp.ne.s32.totalorder %s67, %s68
    %p77 = scmp.eq.s32.totalorder %s15, 0
    %p78 = por %p76, %p77
    %p79 = scmp.ne.s32.totalorder %s67, %s68
    %p80 = scmp.eq.s32.totalorder %s16, 3
    %p81 = por %p79, %p80
    %p83 = scmp.ne.s32.totalorder %s68, %s82
    %p84 = scmp.eq.s32.totalorder %s16, 0
    %p85 = por %p83, %p84
    %s86 = ssub.s32 %s10, %s17
    %p87 = scmp.eq.s32.totalorder %s86, 0
    %s89 = sadd.s32 %s88, 1
    %s90 = scalar_select %p87, %s88, %s89
    %p93 = pneg %p87
    %p94 = scmp.eq.s32.totalorder %s10, 3
    %p95 = por %p93, %p94
    %p96 = scmp.ne.s32.totalorder %s88, %s91
    %p97 = scmp.eq.s32.totalorder %s10, 0
    %p98 = por %p96, %p97
    %p99 = scmp.ne.s32.totalorder %s88, %s91
    %p100 = scmp.eq.s32.totalorder %s15, 3
    %p101 = por %p99, %p100
    %p102 = scmp.ne.s32.totalorder %s91, %s92
    %p103 = scmp.eq.s32.totalorder %s15, 0
    %p104 = por %p102, %p103
    %p105 = scmp.ne.s32.totalorder %s91, %s92
    %p106 = scmp.eq.s32.totalorder %s16, 3
    %p107 = por %p105, %p106
    %p109 = scmp.ne.s32.totalorder %s92, %s108
    %p110 = scmp.eq.s32.totalorder %s16, 0
    %p111 = por %p109, %p110
    %s112 = ssub.s32 %s10, %s17
    %p113 = scmp.eq.s32.totalorder %s112, 0
    %s115 = sadd.s32 %s114, 1
    %s116 = scalar_select %p113, %s114, %s115
    %p119 = pneg %p113
    %p120 = scmp.eq.s32.totalorder %s10, 3
    %p121 = por %p119, %p120
    %p122 = scmp.ne.s32.totalorder %s114, %s117
    %p123 = scmp.eq.s32.totalorder %s10, 0
    %p124 = por %p122, %p123
    %p125 = scmp.ne.s32.totalorder %s114, %s117
    %p126 = scmp.eq.s32.totalorder %s15, 3
    %p127 = por %p125, %p126
    %p128 = scmp.ne.s32.totalorder %s117, %s118
    %p129 = scmp.eq.s32.totalorder %s15, 0
    %p130 = por %p128, %p129
    %p131 = scmp.ne.s32.totalorder %s117, %s118
    %p132 = scmp.eq.s32.totalorder %s16, 3
    %p133 = por %p131, %p132
    %p135 = scmp.ne.s32.totalorder %s118, %s134
    %p136 = scmp.eq.s32.totalorder %s16, 0
    %p137 = por %p135, %p136
    %p138 = scmp.le.s32.totalorder 1, %s10
    %p139 = scmp.lt.s32.totalorder %s10, 5
    %p140 = pnand %p138, %p139
    %p141 = pneg %p140
    // Predicated region
    $region9: #{voxception_resnet_forward.11} parent=5 // pred_check
      _
    $region10: #{voxception_resnet_forward.11} parent=5 // pred_check_branch
      %143 = sbr.rel (%p140) target = $region12
    $region11: #{voxception_resnet_forward.11} parent=5 // pred_region
      %s144 = ssub.s32 %s10, 1
      // Predicated region
      $region13: #{voxception_resnet_forward.11} parent=11 // pred_check
        %p145 = pneg %p57
      $region14: #{voxception_resnet_forward.11} parent=11 // pred_check_branch
        %147 = sbr.rel (%p145) target = $region16
      $region15: #{voxception_resnet_forward.11} parent=11 // pred_region
        _
      $region16: #{voxception_resnet_forward.11} parent=11 // pred_fallthru
        _
      // Predicated region
      $region17: #{voxception_resnet_forward.11} parent=11 // pred_check
        %p148 = pneg %p78
      $region18: #{voxception_resnet_forward.11} parent=11 // pred_check_branch
        %150 = sbr.rel (%p148) target = $region20
      $region19: #{voxception_resnet_forward.11} parent=11 // pred_region
        _
      $region20: #{voxception_resnet_forward.11} parent=11 // pred_fallthru
        _
    $region12: #{voxception_resnet_forward.11} parent=5 // pred_fallthru
      _
    %p151 = scmp.lt.s32.totalorder %s10, 4
    // Predicated region
    $region21: #{voxception_resnet_forward.11} parent=5 // pred_check
      %p152 = pneg %p151
    $region22: #{voxception_resnet_forward.11} parent=5 // pred_check_branch
      %154 = sbr.rel (%p152) target = $region24
    $region23: #{voxception_resnet_forward.11} parent=5 // pred_region
      // Predicated region
      $region25: #{voxception_resnet_forward.11} parent=23 // pred_check
        %p155 = pneg %p30
      $region26: #{voxception_resnet_forward.11} parent=23 // pred_check_branch
        %157 = sbr.rel (%p155) target = $region28
      $region27: #{voxception_resnet_forward.11} parent=23 // pred_region
        %s158 = smul.u32 4, %s10
        %p159 = scmp.lt.s32.totalorder %s158, 15
        %s160 = scalar_select %p159, %s158, 15
        %s161 = smul.addr %s160, 8
        %s162 = scalar_lea.vmem %s0, %s161
        %s163 = smul.u32 4, %s10
      $region28: #{voxception_resnet_forward.11} parent=23 // pred_fallthru
        _
      // Predicated region
      $region29: #{voxception_resnet_forward.11} parent=23 // pred_check
        %p164 = pneg %p98
      $region30: #{voxception_resnet_forward.11} parent=23 // pred_check_branch
        %166 = sbr.rel (%p164) target = $region32
      $region31: #{voxception_resnet_forward.11} parent=23 // pred_region
        %s167 = smul.u32 4, %s10
        %p168 = scmp.lt.s32.totalorder %s167, 15
        %s169 = scalar_select %p168, %s167, 15
        %s170 = scalar_lea.vmem %s3, %s169
        %s171 = smul.u32 4, %s10
      $region32: #{voxception_resnet_forward.11} parent=23 // pred_fallthru
        _
    $region24: #{voxception_resnet_forward.11} parent=5 // pred_fallthru
      _
    %p172 = scmp.le.s32.totalorder 1, %s10
    %p173 = scmp.lt.s32.totalorder %s10, 5
    %p174 = pnand %p172, %p173
    %p175 = pneg %p174
    // Predicated region
    $region33: #{voxception_resnet_forward.11} parent=5 // pred_check
      _
    $region34: #{voxception_resnet_forward.11} parent=5 // pred_check_branch
      %177 = sbr.rel (%p174) target = $region36
    $region35: #{voxception_resnet_forward.11} parent=5 // pred_region
      %s178 = ssub.s32 %s10, 1
      %s179 = smul.u32 4, %s15
      %p180 = scmp.lt.s32.totalorder %s179, 15
      %s181 = scalar_select %p180, %s179, 15
      %s182 = smul.addr %s181, 8
      %s183 = scalar_lea.vmem %s0, %s182
      %p184 = pneg %p36
      %p185 = pneg %p33
      %p186 = pneg %p57
      %p187 = pneg %p54
      %p188 = pneg %p78
      %p189 = pneg %p75
      %s190 = smul.u32 4, %s15
      %p191 = scmp.lt.s32.totalorder %s190, 15
      %s192 = scalar_select %p191, %s190, 15
      %s193 = scalar_lea.vmem %s3, %s192
      %p194 = pneg %p104
      %p195 = pneg %p101
      %p196 = pneg %p130
      %p197 = pneg %p127
      %s198 = smul.u32 4, %s15
      %p199 = scmp.lt.s32.totalorder %s198, 15
      %s200 = scalar_select %p199, %s198, 15
      %s201 = smul.addr %s200, 2
      %s202 = scalar_lea.vmem %s4, %s201
      %s203 = smul.u32 4, %s15
      %p204 = scmp.lt.s32.totalorder %s203, 15
      %s205 = scalar_select %p204, %s203, 15
      %s206 = smul.addr %s205, 8
      %s207 = scalar_lea.vmem %s0, %s206
      %s208 = smul.u32 4, %s15
      %s209 = smul.u32 4, %s15
      %p210 = scmp.lt.s32.totalorder %s209, 15
      %s211 = scalar_select %p210, %s209, 15
      %s212 = scalar_lea.vmem %s3, %s211
      %s213 = smul.u32 4, %s15
      %s214 = smul.u32 4, %s15
      %p215 = scmp.lt.s32.totalorder %s214, 15
      %s216 = scalar_select %p215, %s214, 15
      %s217 = smul.addr %s216, 2
      %s218 = scalar_lea.vmem %s4, %s217
      %s219 = smul.u32 4, %s15
      %v220 = vld [vmem:[%s207] sm:$0xf0]
      %v221 = vld [vmem:[%s207 + $0x8] sm:$0xf0]
      %v222 = vld [vmem:[%s207 + $0x10] sm:$0xf0]
      %v223 = vld [vmem:[%s207 + $0x18] sm:$0xf0]
      %v224 = vld [vmem:[%s1] sm:$0xf]
      %226 = vset.pattern.permute.xlu0 0
      %227 = vperm.xlu0 %226, %v224
      %v228 = vpop.permute.xlu0 %227
      %v229 = vrot.slane %v228, 4
      %v231 = vmul.f32 %v220, %v229
      %v232 = vmul.f32 %v221, %v229
      %v233 = vmul.f32 %v222, %v229
      %v234 = vmul.f32 %v223, %v229
      %v235 = vld [vmem:[%s2] sm:$0xf]
      %237 = vset.pattern.permute.xlu0 0
      %238 = vperm.xlu0 %237, %v235
      %v239 = vpop.permute.xlu0 %238
      %v240 = vrot.slane %v239, 4
      %v242 = vadd.f32 %v231, %v240
      %v243 = vadd.f32 %v232, %v240
      %v244 = vadd.f32 %v233, %v240
      %v245 = vadd.f32 %v234, %v240
      %vm246 = vcmp.gt.f32.partialorder %v242, 0.0
      %vm247 = vcmp.gt.f32.partialorder %v243, 0.0
      %vm248 = vcmp.gt.f32.partialorder %v244, 0.0
      %vm249 = vcmp.gt.f32.partialorder %v245, 0.0
      %v250 = vmin.f32 %v242, 0.0
      %v251 = vmin.f32 %v243, 0.0
      %v252 = vmin.f32 %v244, 0.0
      %v253 = vmin.f32 %v245, 0.0
      %v254 = vmul.f32 %v250, 1.442695
      %v255 = vpow.pop %v254
      %v256 = vmul.f32 %v251, 1.442695
      %v257 = vpow.pop %v256
      %v258 = vmul.f32 %v252, 1.442695
      %v259 = vpow.pop %v258
      %v260 = vmul.f32 %v253, 1.442695
      %v261 = vpow.pop %v260
      %v262 = vsub.f32 %v255, 1.0
      %v263 = vsub.f32 %v257, 1.0
      %v264 = vsub.f32 %v259, 1.0
      %v265 = vsub.f32 %v261, 1.0
      %v266 = vsel %vm246, %v242, %v262
      %v267 = vsel %vm247, %v243, %v263
      %v268 = vsel %vm248, %v244, %v264
      %v269 = vsel %vm249, %v245, %v265
      %v270 = vld [vmem:[%s212] sm:$0xf]
      %vm271 = vcmp.gt.f32.partialorder %v270, 0.5
      %v272 = vsel %vm271, 1, 0
      %v273 = vlaneseq
      %v274 = vshrl.u32 %v273, 7
      %v275 = vsub.s32 0, %v274
      %v276 = vrot.slane %v272, %v275
      %v277 = vlaneseq
      %v278 = vshrl.u32 %v277, 7
      %v279 = vsub.s32 1, %v278
      %v280 = vrot.slane %v272, %v279
      %v281 = vlaneseq
      %v282 = vshrl.u32 %v281, 7
      %v283 = vsub.s32 2, %v282
      %v284 = vrot.slane %v272, %v283
      %v285 = vlaneseq
      %v286 = vshrl.u32 %v285, 7
      %v287 = vsub.s32 3, %v286
      %v288 = vrot.slane %v272, %v287
      %vm289 = vcmp.eq.s32.totalorder %v276, 1
      %vm290 = vcmp.eq.s32.totalorder %v280, 1
      %vm291 = vcmp.eq.s32.totalorder %v284, 1
      %vm292 = vcmp.eq.s32.totalorder %v288, 1
      %v293 = vsel %vm289, %v266, 0.0
      %v294 = vsel %vm290, %v267, 0.0
      %v295 = vsel %vm291, %v268, 0.0
      %v296 = vsel %vm292, %v269, 0.0
      %v297 = vpack.c.bf16 %v293, %v293
      %v298 = vpack.c.bf16 %v294, %v294
      %v299 = vpack.c.bf16 %v295, %v295
      %v300 = vpack.c.bf16 %v296, %v296
      %v305 = vcombine.low %v297, %v298
      %v306 = vcombine.low %v299, %v300
      %v308 = vunpack.c.l.s4 1983009808
      %v309 = vunpack.c.0.s8 %v308
      %v310 = vlaneseq
      %v311 = vshrl.u32 %v310, 7
      %v312 = vsub.s32 %v309, %v311
      %v313 = vrot.slane %v305, %v312
      %v315 = vunpack.c.l.s4 1983009808
      %v316 = vunpack.c.0.s8 %v315
      %v317 = vlaneseq
      %v318 = vshrl.u32 %v317, 7
      %v319 = vsub.s32 %v316, %v318
      %v320 = vrot.slane %v306, %v319
      %v321 = vcombine.high %v313, %v320
      %323 = vst [vmem:[%s218] sm:$0xff] %v321
      %s324 = smul.u32 4, %s15
      %p325 = scmp.lt.s32.totalorder %s324, 15
      %s326 = scalar_select %p325, %s324, 15
      %s327 = smul.addr %s326, 2
      %s328 = scalar_lea.vmem %s4, %s327
      // Predicated region
      $region37: #{voxception_resnet_forward.11} parent=35 // pred_check
        %p329 = pneg %p127
      $region38: #{voxception_resnet_forward.11} parent=35 // pred_check_branch
        %331 = sbr.rel (%p329) target = $region40
      $region39: #{voxception_resnet_forward.11} parent=35 // pred_region
        %s332 = smul.u32 4, %s15
      $region40: #{voxception_resnet_forward.11} parent=35 // pred_fallthru
        _
    $region36: #{voxception_resnet_forward.11} parent=5 // pred_fallthru
      _
    %p333 = scmp.le.s32.totalorder 2, %s10
    // Predicated region
    $region41: #{voxception_resnet_forward.11} parent=5 // pred_check
      %p334 = pneg %p333
    $region42: #{voxception_resnet_forward.11} parent=5 // pred_check_branch
      %336 = sbr.rel (%p334) target = $region44
    $region43: #{voxception_resnet_forward.11} parent=5 // pred_region
      %s337 = ssub.s32 %s10, 2
      // Predicated region
      $region45: #{voxception_resnet_forward.11} parent=43 // pred_check
        %p338 = pneg %p133
      $region46: #{voxception_resnet_forward.11} parent=43 // pred_check_branch
        %340 = sbr.rel (%p338) target = $region48
      $region47: #{voxception_resnet_forward.11} parent=43 // pred_region
        %s341 = smul.u32 4, %s16
        %p342 = scmp.lt.s32.totalorder %s341, 15
        %s343 = scalar_select %p342, %s341, 15
        %s344 = smul.addr %s343, 2
        %s345 = scalar_lea.vmem %s4, %s344
      $region48: #{voxception_resnet_forward.11} parent=43 // pred_fallthru
        _
    $region44: #{voxception_resnet_forward.11} parent=5 // pred_fallthru
      _
  $region6: #{voxception_resnet_forward.11} parent=0 // loop_footer
    %s14 = sadd.s32 1, %s10
  $region7: #{voxception_resnet_forward.11} parent=0 // loop_footer_branch
    %9 = sbr.rel target = $region3
  $region8: #{voxception_resnet_forward.11} parent=0 // loop_exit
    _

// kernel: voxception_resnet_forward.12
$region0: #{voxception_resnet_forward.12}
  #allocation0 [shape = 'u32[]', space=smem, size = 0x4, offset = 0x4, fixed_abs, tag = 'smem constant byte address 0x4 - core index']
  #allocation1 [shape = 'u32[144,128]{1,0:T(1,128)}', space=vmem, size = 0x12000, scoped, tag = 'internal scratch']
  %s0 = inlined_call_operand.vmem [shape: bf16[4,2048], index: 0, kind: input, shape index: {}]
  %s1 = inlined_call_operand.vmem [shape: bf16[1,4,4], index: 1, kind: input, shape index: {}]
  %s2 = inlined_call_operand.vmem [shape: f32[1,2048], index: 2, kind: input, shape index: {}]
  %s3 = inlined_call_operand.vmem [shape: f32[4,2048], index: 3, kind: output, shape index: {0}]
  %s4 = inlined_call_operand.vmem [shape: f32[4,4,2], index: 4, kind: output, shape index: {1}]
  %5 = xla_tuple %s3, %s4
  %s6 = sld [smem:[#allocation0]]
  $region53: #{voxception_resnet_forward.12} parent=0
    _
  %s8 = ssub.s32 1, %s6
  %s9 = scalar_select 0, %s8, %s6
  loop: start=0, step=1, limit=6
  $region2: #{voxception_resnet_forward.12} parent=0 // loop_pre_header
    _
  $region3: #{voxception_resnet_forward.12} parent=0 // loop_header
    %s11 = sphi 0, %s15
    %p12 = scmp.ge.s32.totalorder %s11, 6
    %s21 = sphi 0, %s23
    %s24 = sphi 0, %s21
    %s25 = sphi 0, %s24
    %s41 = sphi 0, %s25
    %s45 = sphi 0, %s45
    %s47 = sphi 0, %s45
    %s48 = sphi 0, %s47
    %s62 = sphi 0, %s48
    %s68 = sphi 0, %s70
    %s71 = sphi 0, %s68
    %s72 = sphi 0, %s71
    %s88 = sphi 0, %s72
    %s94 = sphi 0, %s96
    %s97 = sphi 0, %s94
    %s98 = sphi 0, %s97
    %s114 = sphi 0, %s98
    %s120 = sphi 0, %s122
    %s123 = sphi 0, %s120
    %s124 = sphi 0, %s123
    %s140 = sphi 0, %s124
  $region4: #{voxception_resnet_forward.12} parent=0 // loop_header_branch
    %14 = sbr.rel (%p12) target = $region8
  $region5: #{voxception_resnet_forward.12} parent=0 // loop_body
    %s16 = ssub.s32 %s11, 1
    %s17 = ssub.s32 %s11, 2
    %s18 = sadd.s32 %s11, 1
    %s19 = ssub.s32 %s11, %s18
    %p20 = scmp.eq.s32.totalorder %s19, 0
    %s22 = sadd.s32 %s21, 1
    %s23 = scalar_select %p20, %s21, %s22
    %p26 = pneg %p20
    %p27 = scmp.eq.s32.totalorder %s11, 3
    %p28 = por %p26, %p27
    %p29 = scmp.ne.s32.totalorder %s21, %s24
    %p30 = scmp.eq.s32.totalorder %s11, 0
    %p31 = por %p29, %p30
    %p32 = scmp.ne.s32.totalorder %s21, %s24
    %p33 = scmp.eq.s32.totalorder %s16, 3
    %p34 = por %p32, %p33
    %p35 = scmp.ne.s32.totalorder %s24, %s25
    %p36 = scmp.eq.s32.totalorder %s16, 0
    %p37 = por %p35, %p36
    %p38 = scmp.ne.s32.totalorder %s24, %s25
    %p39 = scmp.eq.s32.totalorder %s17, 3
    %p40 = por %p38, %p39
    %p42 = scmp.ne.s32.totalorder %s25, %s41
    %p43 = scmp.eq.s32.totalorder %s17, 0
    %p44 = por %p42, %p43
    %s46 = sadd.s32 %s45, 1
    %p49 = scmp.eq.s32.totalorder %s11, 3
    %p50 = scmp.ne.s32.totalorder %s45, %s47
    %p51 = scmp.eq.s32.totalorder %s11, 0
    %p52 = por %p50, %p51
    %p53 = scmp.ne.s32.totalorder %s45, %s47
    %p54 = scmp.eq.s32.totalorder %s16, 3
    %p55 = por %p53, %p54
    %p56 = scmp.ne.s32.totalorder %s47, %s48
    %p57 = scmp.eq.s32.totalorder %s16, 0
    %p58 = por %p56, %p57
    %p59 = scmp.ne.s32.totalorder %s47, %s48
    %p60 = scmp.eq.s32.totalorder %s17, 3
    %p61 = por %p59, %p60
    %p63 = scmp.ne.s32.totalorder %s48, %s62
    %p64 = scmp.eq.s32.totalorder %s17, 0
    %p65 = por %p63, %p64
    %s66 = ssub.s32 %s11, %s18
    %p67 = scmp.eq.s32.totalorder %s66, 0
    %s69 = sadd.s32 %s68, 1
    %s70 = scalar_select %p67, %s68, %s69
    %p73 = pneg %p67
    %p74 = scmp.eq.s32.totalorder %s11, 3
    %p75 = por %p73, %p74
    %p76 = scmp.ne.s32.totalorder %s68, %s71
    %p77 = scmp.eq.s32.totalorder %s11, 0
    %p78 = por %p76, %p77
    %p79 = scmp.ne.s32.totalorder %s68, %s71
    %p80 = scmp.eq.s32.totalorder %s16, 3
    %p81 = por %p79, %p80
    %p82 = scmp.ne.s32.totalorder %s71, %s72
    %p83 = scmp.eq.s32.totalorder %s16, 0
    %p84 = por %p82, %p83
    %p85 = scmp.ne.s32.totalorder %s71, %s72
    %p86 = scmp.eq.s32.totalorder %s17, 3
    %p87 = por %p85, %p86
    %p89 = scmp.ne.s32.totalorder %s72, %s88
    %p90 = scmp.eq.s32.totalorder %s17, 0
    %p91 = por %p89, %p90
    %s92 = ssub.s32 %s11, %s18
    %p93 = scmp.eq.s32.totalorder %s92, 0
    %s95 = sadd.s32 %s94, 1
    %s96 = scalar_select %p93, %s94, %s95
    %p99 = pneg %p93
    %p100 = scmp.eq.s32.totalorder %s11, 3
    %p101 = por %p99, %p100
    %p102 = scmp.ne.s32.totalorder %s94, %s97
    %p103 = scmp.eq.s32.totalorder %s11, 0
    %p104 = por %p102, %p103
    %p105 = scmp.ne.s32.totalorder %s94, %s97
    %p106 = scmp.eq.s32.totalorder %s16, 3
    %p107 = por %p105, %p106
    %p108 = scmp.ne.s32.totalorder %s97, %s98
    %p109 = scmp.eq.s32.totalorder %s16, 0
    %p110 = por %p108, %p109
    %p111 = scmp.ne.s32.totalorder %s97, %s98
    %p112 = scmp.eq.s32.totalorder %s17, 3
    %p113 = por %p111, %p112
    %p115 = scmp.ne.s32.totalorder %s98, %s114
    %p116 = scmp.eq.s32.totalorder %s17, 0
    %p117 = por %p115, %p116
    %s118 = ssub.s32 %s11, %s18
    %p119 = scmp.eq.s32.totalorder %s118, 0
    %s121 = sadd.s32 %s120, 1
    %s122 = scalar_select %p119, %s120, %s121
    %p125 = pneg %p119
    %p126 = scmp.eq.s32.totalorder %s11, 3
    %p127 = por %p125, %p126
    %p128 = scmp.ne.s32.totalorder %s120, %s123
    %p129 = scmp.eq.s32.totalorder %s11, 0
    %p130 = por %p128, %p129
    %p131 = scmp.ne.s32.totalorder %s120, %s123
    %p132 = scmp.eq.s32.totalorder %s16, 3
    %p133 = por %p131, %p132
    %p134 = scmp.ne.s32.totalorder %s123, %s124
    %p135 = scmp.eq.s32.totalorder %s16, 0
    %p136 = por %p134, %p135
    %p137 = scmp.ne.s32.totalorder %s123, %s124
    %p138 = scmp.eq.s32.totalorder %s17, 3
    %p139 = por %p137, %p138
    %p141 = scmp.ne.s32.totalorder %s124, %s140
    %p142 = scmp.eq.s32.totalorder %s17, 0
    %p143 = por %p141, %p142
    %p144 = scmp.le.s32.totalorder 1, %s11
    %p145 = scmp.lt.s32.totalorder %s11, 5
    %p146 = pnand %p144, %p145
    %p147 = pneg %p146
    // Predicated region
    $region9: #{voxception_resnet_forward.12} parent=5 // pred_check
      _
    $region10: #{voxception_resnet_forward.12} parent=5 // pred_check_branch
      %149 = sbr.rel (%p146) target = $region12
    $region11: #{voxception_resnet_forward.12} parent=5 // pred_region
      %s150 = ssub.s32 %s11, 1
      // Predicated region
      $region13: #{voxception_resnet_forward.12} parent=11 // pred_check
        %p151 = pneg %p58
      $region14: #{voxception_resnet_forward.12} parent=11 // pred_check_branch
        %153 = sbr.rel (%p151) target = $region16
      $region15: #{voxception_resnet_forward.12} parent=11 // pred_region
        _
      $region16: #{voxception_resnet_forward.12} parent=11 // pred_fallthru
        _
    $region12: #{voxception_resnet_forward.12} parent=5 // pred_fallthru
      _
    %p154 = scmp.lt.s32.totalorder %s11, 4
    // Predicated region
    $region17: #{voxception_resnet_forward.12} parent=5 // pred_check
      %p155 = pneg %p154
    $region18: #{voxception_resnet_forward.12} parent=5 // pred_check_branch
      %157 = sbr.rel (%p155) target = $region20
    $region19: #{voxception_resnet_forward.12} parent=5 // pred_region
      // Predicated region
      $region21: #{voxception_resnet_forward.12} parent=19 // pred_check
        %p158 = pneg %p31
      $region22: #{voxception_resnet_forward.12} parent=19 // pred_check_branch
        %160 = sbr.rel (%p158) target = $region24
      $region23: #{voxception_resnet_forward.12} parent=19 // pred_region
        %s161 = smul.u32 4, %s11
        %p162 = scmp.lt.s32.totalorder %s161, 15
        %s163 = scalar_select %p162, %s161, 15
        %s164 = smul.addr %s163, 2
        %s165 = scalar_lea.vmem %s0, %s164
        %s166 = smul.u32 4, %s11
      $region24: #{voxception_resnet_forward.12} parent=19 // pred_fallthru
        _
      // Predicated region
      $region25: #{voxception_resnet_forward.12} parent=19 // pred_check
        %p167 = pneg %p78
      $region26: #{voxception_resnet_forward.12} parent=19 // pred_check_branch
        %169 = sbr.rel (%p167) target = $region28
      $region27: #{voxception_resnet_forward.12} parent=19 // pred_region
        %s170 = smul.u32 4, %s11
        %p171 = scmp.lt.s32.totalorder %s170, 15
        %s172 = scalar_select %p171, %s170, 15
        %s173 = scalar_lea.vmem %s2, %s172
        %s174 = smul.u32 4, %s11
      $region28: #{voxception_resnet_forward.12} parent=19 // pred_fallthru
        _
    $region20: #{voxception_resnet_forward.12} parent=5 // pred_fallthru
      _
    %p175 = scmp.le.s32.totalorder 1, %s11
    %p176 = scmp.lt.s32.totalorder %s11, 5
    %p177 = pnand %p175, %p176
    %p178 = pneg %p177
    // Predicated region
    $region29: #{voxception_resnet_forward.12} parent=5 // pred_check
      _
    $region30: #{voxception_resnet_forward.12} parent=5 // pred_check_branch
      %180 = sbr.rel (%p177) target = $region32
    $region31: #{voxception_resnet_forward.12} parent=5 // pred_region
      %s181 = ssub.s32 %s11, 1
      %s182 = smul.u32 4, %s16
      %p183 = scmp.lt.s32.totalorder %s182, 15
      %s184 = scalar_select %p183, %s182, 15
      %s185 = smul.addr %s184, 2
      %s186 = scalar_lea.vmem %s0, %s185
      %p187 = pneg %p37
      %p188 = pneg %p34
      %p189 = pneg %p58
      %p190 = pneg %p55
      %s191 = smul.u32 4, %s16
      %p192 = scmp.lt.s32.totalorder %s191, 15
      %s193 = scalar_select %p192, %s191, 15
      %s194 = scalar_lea.vmem %s2, %s193
      %p195 = pneg %p84
      %p196 = pneg %p81
      %p197 = pneg %p110
      %p198 = pneg %p107
      %s199 = smul.u32 4, %s16
      %p200 = scmp.lt.s32.totalorder %s199, 15
      %s201 = scalar_select %p200, %s199, 15
      %s202 = smul.addr %s201, 4
      %s203 = scalar_lea.vmem %s3, %s202
      %p204 = pneg %p136
      %p205 = pneg %p133
      %p206 = scmp.lt.s32.totalorder %s16, 3
      %s207 = scalar_select %p206, %s16, 3
      %s208 = smul.addr %s207, 4
      %s209 = scalar_lea.vmem %s4, %s208
      %s210 = smul.u32 4, %s16
      %p211 = scmp.lt.s32.totalorder %s210, 15
      %s212 = scalar_select %p211, %s210, 15
      %s213 = smul.addr %s212, 2
      %s214 = scalar_lea.vmem %s0, %s213
      %s215 = smul.u32 4, %s16
      %s216 = smul.u32 4, %s16
      %p217 = scmp.lt.s32.totalorder %s216, 15
      %s218 = scalar_select %p217, %s216, 15
      %s219 = scalar_lea.vmem %s2, %s218
      %s220 = smul.u32 4, %s16
      %s221 = smul.u32 4, %s16
      %p222 = scmp.lt.s32.totalorder %s221, 15
      %s223 = scalar_select %p222, %s221, 15
      %s224 = smul.addr %s223, 4
      %s225 = scalar_lea.vmem %s3, %s224
      %s226 = smul.u32 4, %s16
      %p227 = scmp.lt.s32.totalorder %s16, 3
      %s228 = scalar_select %p227, %s16, 3
      %s229 = smul.addr %s228, 4
      %s230 = scalar_lea.vmem %s4, %s229
      %v232 = vld [vmem:[%s1] sm:$0x3]
      %v233 = vld [vmem:[%s214] sm:$0xff]
      %v235 = vcombine.high %v233, %v233
      %v237 = vunpack.c.l.s4 1983009808
      %v238 = vunpack.c.0.s8 %v237
      %v239 = vlaneseq
      %v240 = vshrl.u32 %v239, 7
      %v241 = vsub.s32 %v238, %v240
      %v242 = vrot.slane %v233, %v241
      %v244 = vunpack.c.l.s4 1983009808
      %v245 = vunpack.c.0.s8 %v244
      %v246 = vlaneseq
      %v247 = vshrl.u32 %v246, 7
      %v248 = vsub.s32 %v245, %v247
      %v249 = vrot.slane %v235, %v248
      %v250 = vcombine.high %v242, %v242
      %v251 = vcombine.high %v249, %v249
      %vm252 = vcmask 31744
      %v254 = vsel %vm252, %v232, 0
      %vm256 = vcmask 1041408
      %v258 = vsel %vm256, %v242, 0
      %v261 = vsel %vm256, %v250, 0
      %v264 = vsel %vm256, %v249, 0
      %v267 = vsel %vm256, %v251, 0
      %269 = vmatprep.subr.bf16.mxu0 %v261
      %270 = vmatpush1.bf16.msra.mxu0 %v258
      %271 = vmatprep.subr.bf16.mxu0 0
      %272 = vmatpush1.bf16.msra.mxu0 0
      %273 = vmatprep.subr.bf16.mxu0 0
      %274 = vmatpush1.bf16.msra.mxu0 0
      %275 = vmatprep.subr.bf16.mxu0 0
      %276 = vmatpush1.bf16.msra.mxu0 0
      %277 = vmatprep.subr.bf16.mxu0 0
      %278 = vmatpush1.bf16.msra.mxu0 0
      %279 = vmatprep.subr.bf16.mxu0 0
      %280 = vmatpush1.bf16.msra.mxu0 0
      %281 = vmatprep.subr.bf16.mxu0 0
      %282 = vmatpush1.bf16.msra.mxu0 0
      %283 = vmatprep.subr.bf16.mxu0 0
      %284 = vmatpush1.bf16.msra.mxu0 0
      %285 = vmatprep.subr.bf16.mxu0 0
      %286 = vmatpush1.bf16.msra.mxu0 0
      %287 = vmatprep.subr.bf16.mxu0 0
      %288 = vmatpush1.bf16.msra.mxu0 0
      %289 = vmatprep.subr.bf16.mxu0 0
      %290 = vmatpush1.bf16.msra.mxu0 0
      %291 = vmatprep.subr.bf16.mxu0 0
      %292 = vmatpush1.bf16.msra.mxu0 0
      %293 = vmatprep.subr.bf16.mxu0 0
      %294 = vmatpush1.bf16.msra.mxu0 0
      %295 = vmatprep.subr.bf16.mxu0 0
      %296 = vmatpush1.bf16.msra.mxu0 0
      %297 = vmatprep.subr.bf16.mxu0 0
      %298 = vmatpush1.bf16.msra.mxu0 0
      %299 = vmatprep.subr.bf16.mxu0 0
      %300 = vmatpush1.bf16.msra.mxu0 0
      %301 = vmatprep.mubr.bf16.mxu0 0
      %302 = vmatmul.mubr.bf16.gmra.mrb[0].mxu0 %v254
      %v303 = vpop.f32.mrb[0].mxu0
      %v304 = vadd.f32 0.0, %v303
      %v305 = vpop.f32.mrb[0].mxu0
      %v306 = vadd.f32 0.0, %v305
      %v307 = vpop.f32.mrb[0].mxu0
      %v308 = vpop.f32.mrb[0].mxu0
      %309 = vdwg.mxu0
      %310 = vmatprep.subr.bf16.mxu0 %v267
      %311 = vmatpush1.bf16.msra.mxu0 %v264
      %312 = vmatprep.subr.bf16.mxu0 0
      %313 = vmatpush1.bf16.msra.mxu0 0
      %314 = vmatprep.subr.bf16.mxu0 0
      %315 = vmatpush1.bf16.msra.mxu0 0
      %316 = vmatprep.subr.bf16.mxu0 0
      %317 = vmatpush1.bf16.msra.mxu0 0
      %318 = vmatprep.subr.bf16.mxu0 0
      %319 = vmatpush1.bf16.msra.mxu0 0
      %320 = vmatprep.subr.bf16.mxu0 0
      %321 = vmatpush1.bf16.msra.mxu0 0
      %322 = vmatprep.subr.bf16.mxu0 0
      %323 = vmatpush1.bf16.msra.mxu0 0
      %324 = vmatprep.subr.bf16.mxu0 0
      %325 = vmatpush1.bf16.msra.mxu0 0
      %326 = vmatprep.subr.bf16.mxu0 0
      %327 = vmatpush1.bf16.msra.mxu0 0
      %328 = vmatprep.subr.bf16.mxu0 0
      %329 = vmatpush1.bf16.msra.mxu0 0
      %330 = vmatprep.subr.bf16.mxu0 0
      %331 = vmatpush1.bf16.msra.mxu0 0
      %332 = vmatprep.subr.bf16.mxu0 0
      %333 = vmatpush1.bf16.msra.mxu0 0
      %334 = vmatprep.subr.bf16.mxu0 0
      %335 = vmatpush1.bf16.msra.mxu0 0
      %336 = vmatprep.subr.bf16.mxu0 0
      %337 = vmatpush1.bf16.msra.mxu0 0
      %338 = vmatprep.subr.bf16.mxu0 0
      %339 = vmatpush1.bf16.msra.mxu0 0
      %340 = vmatprep.subr.bf16.mxu0 0
      %341 = vmatpush1.bf16.msra.mxu0 0
      %342 = vmatprep.mubr.bf16.mxu0 0
      %343 = vmatmul.mubr.bf16.gmra.mrb[0].mxu0 %v254
      %v344 = vpop.f32.mrb[0].mxu0
      %v345 = vadd.f32 0.0, %v344
      %v346 = vpop.f32.mrb[0].mxu0
      %v347 = vadd.f32 0.0, %v346
      %v348 = vpop.f32.mrb[0].mxu0
      %v349 = vpop.f32.mrb[0].mxu0
      %350 = vdwg.mxu0
      %v355 = vcombine.low %v304, %v306
      %v356 = vcombine.low %v345, %v347
      %359 = vst [vmem:[%s225] sm:$0xff] %v355
      %360 = vst [vmem:[%s225 + $0x8] sm:$0xff] %v356
      %v361 = vld [vmem:[%s219] sm:$0xf]
      %vm362 = vcmp.gt.f32.partialorder %v361, 0.5
      %v363 = vsel %vm362, 1, 0
      %v364 = vlaneseq
      %v365 = vshrl.u32 %v364, 7
      %v366 = vsub.s32 0, %v365
      %v367 = vrot.slane %v363, %v366
      %v368 = vlaneseq
      %v369 = vshrl.u32 %v368, 7
      %v370 = vsub.s32 1, %v369
      %v371 = vrot.slane %v363, %v370
      %v372 = vlaneseq
      %v373 = vshrl.u32 %v372, 7
      %v374 = vsub.s32 2, %v373
      %v375 = vrot.slane %v363, %v374
      %v376 = vlaneseq
      %v377 = vshrl.u32 %v376, 7
      %v378 = vsub.s32 3, %v377
      %v379 = vrot.slane %v363, %v378
      %vm380 = vcmp.eq.s32.totalorder %v367, 1
      %vm381 = vcmp.eq.s32.totalorder %v371, 1
      %vm382 = vcmp.eq.s32.totalorder %v375, 1
      %vm383 = vcmp.eq.s32.totalorder %v379, 1
      %v384 = vsel %vm380, %v304, 0.0
      %v385 = vsel %vm381, %v306, 0.0
      %v386 = vsel %vm382, %v345, 0.0
      %v387 = vsel %vm383, %v347, 0.0
      %vm388 = vcmask 1043456
      %v389 = vsel %vm388, %v384, 0.0
      %v390 = vsel %vm388, %v385, 0.0
      %v391 = vadd.f32 %v389, %v390
      %v392 = vsel %vm388, %v386, 0.0
      %v393 = vadd.f32 %v391, %v392
      %v394 = vsel %vm388, %v387, 0.0
      %v395 = vadd.f32 %v393, %v394
      %396 = vadd.xlane.f32.xlu0 %v395
      %v397 = vpop.xlane.xlu0 %396
      %v398 = vmul.f32 %v384, %v384
      %v399 = vmul.f32 %v385, %v385
      %v400 = vmul.f32 %v386, %v386
      %v401 = vmul.f32 %v387, %v387
      %v402 = vsel %vm388, %v398, 0.0
      %v403 = vsel %vm388, %v399, 0.0
      %v404 = vadd.f32 %v402, %v403
      %v405 = vsel %vm388, %v400, 0.0
      %v406 = vadd.f32 %v404, %v405
      %v407 = vsel %vm388, %v401, 0.0
      %v408 = vadd.f32 %v406, %v407
      %409 = vadd.xlane.f32.xlu0 %v408
      %v410 = vpop.xlane.xlu0 %409
      %vm411 = vcmask 7168
      %v412 = vsel %vm411, %v397, %v410
      %vm413 = vcmask 11264
      %414 = vst.msk [vmem:[%s230] sm:$0xf] %vm413, %v412
      %s415 = smul.u32 4, %s16
      %p416 = scmp.lt.s32.totalorder %s415, 15
      %s417 = scalar_select %p416, %s415, 15
      %s418 = smul.addr %s417, 4
      %s419 = scalar_lea.vmem %s3, %s418
      %p420 = scmp.lt.s32.totalorder %s16, 3
      %s421 = scalar_select %p420, %s16, 3
      %s422 = smul.addr %s421, 4
      %s423 = scalar_lea.vmem %s4, %s422
      // Predicated region
      $region33: #{voxception_resnet_forward.12} parent=31 // pred_check
        %p424 = pneg %p107
      $region34: #{voxception_resnet_forward.12} parent=31 // pred_check_branch
        %426 = sbr.rel (%p424) target = $region36
      $region35: #{voxception_resnet_forward.12} parent=31 // pred_region
        %s427 = smul.u32 4, %s16
      $region36: #{voxception_resnet_forward.12} parent=31 // pred_fallthru
        _
      // Predicated region
      $region37: #{voxception_resnet_forward.12} parent=31 // pred_check
        %p428 = pneg %p133
      $region38: #{voxception_resnet_forward.12} parent=31 // pred_check_branch
        %430 = sbr.rel (%p428) target = $region40
      $region39: #{voxception_resnet_forward.12} parent=31 // pred_region
        _
      $region40: #{voxception_resnet_forward.12} parent=31 // pred_fallthru
        _
    $region32: #{voxception_resnet_forward.12} parent=5 // pred_fallthru
      _
    %p431 = scmp.le.s32.totalorder 2, %s11
    // Predicated region
    $region41: #{voxception_resnet_forward.12} parent=5 // pred_check
      %p432 = pneg %p431
    $region42: #{voxception_resnet_forward.12} parent=5 // pred_check_branch
      %434 = sbr.rel (%p432) target = $region44
    $region43: #{voxception_resnet_forward.12} parent=5 // pred_region
      %s435 = ssub.s32 %s11, 2
      // Predicated region
      $region45: #{voxception_resnet_forward.12} parent=43 // pred_check
        %p436 = pneg %p113
      $region46: #{voxception_resnet_forward.12} parent=43 // pred_check_branch
        %438 = sbr.rel (%p436) target = $region48
      $region47: #{voxception_resnet_forward.12} parent=43 // pred_region
        %s439 = smul.u32 4, %s17
        %p440 = scmp.lt.s32.totalorder %s439, 15
        %s441 = scalar_select %p440, %s439, 15
        %s442 = smul.addr %s441, 4
        %s443 = scalar_lea.vmem %s3, %s442
      $region48: #{voxception_resnet_forward.12} parent=43 // pred_fallthru
        _
      // Predicated region
      $region49: #{voxception_resnet_forward.12} parent=43 // pred_check
        %p444 = pneg %p139
      $region50: #{voxception_resnet_forward.12} parent=43 // pred_check_branch
        %446 = sbr.rel (%p444) target = $region52
      $region51: #{voxception_resnet_forward.12} parent=43 // pred_region
        %p447 = scmp.lt.s32.totalorder %s17, 3
        %s448 = scalar_select %p447, %s17, 3
        %s449 = smul.addr %s448, 4
        %s450 = scalar_lea.vmem %s4, %s449
      $region52: #{voxception_resnet_forward.12} parent=43 // pred_fallthru
        _
    $region44: #{voxception_resnet_forward.12} parent=5 // pred_fallthru
      _
  $region6: #{voxception_resnet_forward.12} parent=0 // loop_footer
    %s15 = sadd.s32 1, %s11
  $region7: #{voxception_resnet_forward.12} parent=0 // loop_footer_branch
    %10 = sbr.rel target = $region3
  $region8: #{voxception_resnet_forward.12} parent=0 // loop_exit
    _

// kernel: voxception_resnet_forward.13
$region0: #{voxception_resnet_forward.13}
  #allocation0 [shape = 'u32[]', space=smem, size = 0x4, offset = 0x4, fixed_abs, tag = 'smem constant byte address 0x4 - core index']
  #allocation1 [shape = 'u32[144,128]{1,0:T(1,128)}', space=vmem, size = 0x12000, scoped, tag = 'internal scratch']
  %s0 = inlined_call_operand.vmem [shape: f32[4,2048], index: 0, kind: input, shape index: {}]
  %s1 = inlined_call_operand.vmem [shape: f32[4,1], index: 1, kind: input, shape index: {}]
  %s2 = inlined_call_operand.vmem [shape: f32[4,1], index: 2, kind: input, shape index: {}]
  %s3 = inlined_call_operand.vmem [shape: f32[1,2048], index: 3, kind: input, shape index: {}]
  %s4 = inlined_call_operand.vmem [shape: f32[4,2048], index: 4, kind: input, shape index: {}]
  %s5 = inlined_call_operand.vmem [shape: f32[4,2048], index: 5, kind: output, shape index: {}]
  %s6 = sld [smem:[#allocation0]]
  $region53: #{voxception_resnet_forward.13} parent=0
    _
  %s8 = ssub.s32 1, %s6
  %s9 = scalar_select 0, %s8, %s6
  loop: start=0, step=1, limit=6
  $region2: #{voxception_resnet_forward.13} parent=0 // loop_pre_header
    _
  $region3: #{voxception_resnet_forward.13} parent=0 // loop_header
    %s11 = sphi 0, %s15
    %p12 = scmp.ge.s32.totalorder %s11, 6
    %s21 = sphi 0, %s23
    %s24 = sphi 0, %s21
    %s25 = sphi 0, %s24
    %s41 = sphi 0, %s25
    %s45 = sphi 0, %s45
    %s47 = sphi 0, %s45
    %s48 = sphi 0, %s47
    %s62 = sphi 0, %s48
    %s66 = sphi 0, %s66
    %s68 = sphi 0, %s66
    %s69 = sphi 0, %s68
    %s83 = sphi 0, %s69
    %s89 = sphi 0, %s91
    %s92 = sphi 0, %s89
    %s93 = sphi 0, %s92
    %s109 = sphi 0, %s93
    %s115 = sphi 0, %s117
    %s118 = sphi 0, %s115
    %s119 = sphi 0, %s118
    %s135 = sphi 0, %s119
    %s141 = sphi 0, %s143
    %s144 = sphi 0, %s141
    %s145 = sphi 0, %s144
    %s161 = sphi 0, %s145
  $region4: #{voxception_resnet_forward.13} parent=0 // loop_header_branch
    %14 = sbr.rel (%p12) target = $region8
  $region5: #{voxception_resnet_forward.13} parent=0 // loop_body
    %s16 = ssub.s32 %s11, 1
    %s17 = ssub.s32 %s11, 2
    %s18 = sadd.s32 %s11, 1
    %s19 = ssub.s32 %s11, %s18
    %p20 = scmp.eq.s32.totalorder %s19, 0
    %s22 = sadd.s32 %s21, 1
    %s23 = scalar_select %p20, %s21, %s22
    %p26 = pneg %p20
    %p27 = scmp.eq.s32.totalorder %s11, 3
    %p28 = por %p26, %p27
    %p29 = scmp.ne.s32.totalorder %s21, %s24
    %p30 = scmp.eq.s32.totalorder %s11, 0
    %p31 = por %p29, %p30
    %p32 = scmp.ne.s32.totalorder %s21, %s24
    %p33 = scmp.eq.s32.totalorder %s16, 3
    %p34 = por %p32, %p33
    %p35 = scmp.ne.s32.totalorder %s24, %s25
    %p36 = scmp.eq.s32.totalorder %s16, 0
    %p37 = por %p35, %p36
    %p38 = scmp.ne.s32.totalorder %s24, %s25
    %p39 = scmp.eq.s32.totalorder %s17, 3
    %p40 = por %p38, %p39
    %p42 = scmp.ne.s32.totalorder %s25, %s41
    %p43 = scmp.eq.s32.totalorder %s17, 0
    %p44 = por %p42, %p43
    %s46 = sadd.s32 %s45, 1
    %p49 = scmp.eq.s32.totalorder %s11, 3
    %p50 = scmp.ne.s32.totalorder %s45, %s47
    %p51 = scmp.eq.s32.totalorder %s11, 0
    %p52 = por %p50, %p51
    %p53 = scmp.ne.s32.totalorder %s45, %s47
    %p54 = scmp.eq.s32.totalorder %s16, 3
    %p55 = por %p53, %p54
    %p56 = scmp.ne.s32.totalorder %s47, %s48
    %p57 = scmp.eq.s32.totalorder %s16, 0
    %p58 = por %p56, %p57
    %p59 = scmp.ne.s32.totalorder %s47, %s48
    %p60 = scmp.eq.s32.totalorder %s17, 3
    %p61 = por %p59, %p60
    %p63 = scmp.ne.s32.totalorder %s48, %s62
    %p64 = scmp.eq.s32.totalorder %s17, 0
    %p65 = por %p63, %p64
    %s67 = sadd.s32 %s66, 1
    %p70 = scmp.eq.s32.totalorder %s11, 3
    %p71 = scmp.ne.s32.totalorder %s66, %s68
    %p72 = scmp.eq.s32.totalorder %s11, 0
    %p73 = por %p71, %p72
    %p74 = scmp.ne.s32.totalorder %s66, %s68
    %p75 = scmp.eq.s32.totalorder %s16, 3
    %p76 = por %p74, %p75
    %p77 = scmp.ne.s32.totalorder %s68, %s69
    %p78 = scmp.eq.s32.totalorder %s16, 0
    %p79 = por %p77, %p78
    %p80 = scmp.ne.s32.totalorder %s68, %s69
    %p81 = scmp.eq.s32.totalorder %s17, 3
    %p82 = por %p80, %p81
    %p84 = scmp.ne.s32.totalorder %s69, %s83
    %p85 = scmp.eq.s32.totalorder %s17, 0
    %p86 = por %p84, %p85
    %s87 = ssub.s32 %s11, %s18
    %p88 = scmp.eq.s32.totalorder %s87, 0
    %s90 = sadd.s32 %s89, 1
    %s91 = scalar_select %p88, %s89, %s90
    %p94 = pneg %p88
    %p95 = scmp.eq.s32.totalorder %s11, 3
    %p96 = por %p94, %p95
    %p97 = scmp.ne.s32.totalorder %s89, %s92
    %p98 = scmp.eq.s32.totalorder %s11, 0
    %p99 = por %p97, %p98
    %p100 = scmp.ne.s32.totalorder %s89, %s92
    %p101 = scmp.eq.s32.totalorder %s16, 3
    %p102 = por %p100, %p101
    %p103 = scmp.ne.s32.totalorder %s92, %s93
    %p104 = scmp.eq.s32.totalorder %s16, 0
    %p105 = por %p103, %p104
    %p106 = scmp.ne.s32.totalorder %s92, %s93
    %p107 = scmp.eq.s32.totalorder %s17, 3
    %p108 = por %p106, %p107
    %p110 = scmp.ne.s32.totalorder %s93, %s109
    %p111 = scmp.eq.s32.totalorder %s17, 0
    %p112 = por %p110, %p111
    %s113 = ssub.s32 %s11, %s18
    %p114 = scmp.eq.s32.totalorder %s113, 0
    %s116 = sadd.s32 %s115, 1
    %s117 = scalar_select %p114, %s115, %s116
    %p120 = pneg %p114
    %p121 = scmp.eq.s32.totalorder %s11, 3
    %p122 = por %p120, %p121
    %p123 = scmp.ne.s32.totalorder %s115, %s118
    %p124 = scmp.eq.s32.totalorder %s11, 0
    %p125 = por %p123, %p124
    %p126 = scmp.ne.s32.totalorder %s115, %s118
    %p127 = scmp.eq.s32.totalorder %s16, 3
    %p128 = por %p126, %p127
    %p129 = scmp.ne.s32.totalorder %s118, %s119
    %p130 = scmp.eq.s32.totalorder %s16, 0
    %p131 = por %p129, %p130
    %p132 = scmp.ne.s32.totalorder %s118, %s119
    %p133 = scmp.eq.s32.totalorder %s17, 3
    %p134 = por %p132, %p133
    %p136 = scmp.ne.s32.totalorder %s119, %s135
    %p137 = scmp.eq.s32.totalorder %s17, 0
    %p138 = por %p136, %p137
    %s139 = ssub.s32 %s11, %s18
    %p140 = scmp.eq.s32.totalorder %s139, 0
    %s142 = sadd.s32 %s141, 1
    %s143 = scalar_select %p140, %s141, %s142
    %p146 = pneg %p140
    %p147 = scmp.eq.s32.totalorder %s11, 3
    %p148 = por %p146, %p147
    %p149 = scmp.ne.s32.totalorder %s141, %s144
    %p150 = scmp.eq.s32.totalorder %s11, 0
    %p151 = por %p149, %p150
    %p152 = scmp.ne.s32.totalorder %s141, %s144
    %p153 = scmp.eq.s32.totalorder %s16, 3
    %p154 = por %p152, %p153
    %p155 = scmp.ne.s32.totalorder %s144, %s145
    %p156 = scmp.eq.s32.totalorder %s16, 0
    %p157 = por %p155, %p156
    %p158 = scmp.ne.s32.totalorder %s144, %s145
    %p159 = scmp.eq.s32.totalorder %s17, 3
    %p160 = por %p158, %p159
    %p162 = scmp.ne.s32.totalorder %s145, %s161
    %p163 = scmp.eq.s32.totalorder %s17, 0
    %p164 = por %p162, %p163
    %p165 = scmp.le.s32.totalorder 1, %s11
    %p166 = scmp.lt.s32.totalorder %s11, 5
    %p167 = pnand %p165, %p166
    %p168 = pneg %p167
    // Predicated region
    $region9: #{voxception_resnet_forward.13} parent=5 // pred_check
      _
    $region10: #{voxception_resnet_forward.13} parent=5 // pred_check_branch
      %170 = sbr.rel (%p167) target = $region12
    $region11: #{voxception_resnet_forward.13} parent=5 // pred_region
      %s171 = ssub.s32 %s11, 1
      // Predicated region
      $region13: #{voxception_resnet_forward.13} parent=11 // pred_check
        %p172 = pneg %p58
      $region14: #{voxception_resnet_forward.13} parent=11 // pred_check_branch
        %174 = sbr.rel (%p172) target = $region16
      $region15: #{voxception_resnet_forward.13} parent=11 // pred_region
        _
      $region16: #{voxception_resnet_forward.13} parent=11 // pred_fallthru
        _
      // Predicated region
      $region17: #{voxception_resnet_forward.13} parent=11 // pred_check
        %p175 = pneg %p79
      $region18: #{voxception_resnet_forward.13} parent=11 // pred_check_branch
        %177 = sbr.rel (%p175) target = $region20
      $region19: #{voxception_resnet_forward.13} parent=11 // pred_region
        _
      $region20: #{voxception_resnet_forward.13} parent=11 // pred_fallthru
        _
    $region12: #{voxception_resnet_forward.13} parent=5 // pred_fallthru
      _
    %p178 = scmp.lt.s32.totalorder %s11, 4
    // Predicated region
    $region21: #{voxception_resnet_forward.13} parent=5 // pred_check
      %p179 = pneg %p178
    $region22: #{voxception_resnet_forward.13} parent=5 // pred_check_branch
      %181 = sbr.rel (%p179) target = $region24
    $region23: #{voxception_resnet_forward.13} parent=5 // pred_region
      // Predicated region
      $region25: #{voxception_resnet_forward.13} parent=23 // pred_check
        %p182 = pneg %p31
      $region26: #{voxception_resnet_forward.13} parent=23 // pred_check_branch
        %184 = sbr.rel (%p182) target = $region28
      $region27: #{voxception_resnet_forward.13} parent=23 // pred_region
        %s185 = smul.u32 4, %s11
        %p186 = scmp.lt.s32.totalorder %s185, 15
        %s187 = scalar_select %p186, %s185, 15
        %s188 = smul.addr %s187, 4
        %s189 = scalar_lea.vmem %s0, %s188
        %s190 = smul.u32 4, %s11
      $region28: #{voxception_resnet_forward.13} parent=23 // pred_fallthru
        _
      // Predicated region
      $region29: #{voxception_resnet_forward.13} parent=23 // pred_check
        %p191 = pneg %p99
      $region30: #{voxception_resnet_forward.13} parent=23 // pred_check_branch
        %193 = sbr.rel (%p191) target = $region32
      $region31: #{voxception_resnet_forward.13} parent=23 // pred_region
        %s194 = smul.u32 4, %s11
        %p195 = scmp.lt.s32.totalorder %s194, 15
        %s196 = scalar_select %p195, %s194, 15
        %s197 = scalar_lea.vmem %s3, %s196
        %s198 = smul.u32 4, %s11
      $region32: #{voxception_resnet_forward.13} parent=23 // pred_fallthru
        _
      // Predicated region
      $region33: #{voxception_resnet_forward.13} parent=23 // pred_check
        %p199 = pneg %p125
      $region34: #{voxception_resnet_forward.13} parent=23 // pred_check_branch
        %201 = sbr.rel (%p199) target = $region36
      $region35: #{voxception_resnet_forward.13} parent=23 // pred_region
        %s202 = smul.u32 4, %s11
        %p203 = scmp.lt.s32.totalorder %s202, 15
        %s204 = scalar_select %p203, %s202, 15
        %s205 = smul.addr %s204, 4
        %s206 = scalar_lea.vmem %s4, %s205
        %s207 = smul.u32 4, %s11
      $region36: #{voxception_resnet_forward.13} parent=23 // pred_fallthru
        _
    $region24: #{voxception_resnet_forward.13} parent=5 // pred_fallthru
      _
    %p208 = scmp.le.s32.totalorder 1, %s11
    %p209 = scmp.lt.s32.totalorder %s11, 5
    %p210 = pnand %p208, %p209
    %p211 = pneg %p210
    // Predicated region
    $region37: #{voxception_resnet_forward.13} parent=5 // pred_check
      _
    $region38: #{voxception_resnet_forward.13} parent=5 // pred_check_branch
      %213 = sbr.rel (%p210) target = $region40
    $region39: #{voxception_resnet_forward.13} parent=5 // pred_region
      %s214 = ssub.s32 %s11, 1
      %s215 = smul.u32 4, %s16
      %p216 = scmp.lt.s32.totalorder %s215, 15
      %s217 = scalar_select %p216, %s215, 15
      %s218 = smul.addr %s217, 4
      %s219 = scalar_lea.vmem %s0, %s218
      %p220 = pneg %p37
      %p221 = pneg %p34
      %p222 = pneg %p58
      %p223 = pneg %p55
      %p224 = pneg %p79
      %p225 = pneg %p76
      %s226 = smul.u32 4, %s16
      %p227 = scmp.lt.s32.totalorder %s226, 15
      %s228 = scalar_select %p227, %s226, 15
      %s229 = scalar_lea.vmem %s3, %s228
      %p230 = pneg %p105
      %p231 = pneg %p102
      %s232 = smul.u32 4, %s16
      %p233 = scmp.lt.s32.totalorder %s232, 15
      %s234 = scalar_select %p233, %s232, 15
      %s235 = smul.addr %s234, 4
      %s236 = scalar_lea.vmem %s4, %s235
      %p237 = pneg %p131
      %p238 = pneg %p128
      %p239 = pneg %p157
      %p240 = pneg %p154
      %s241 = smul.u32 4, %s16
      %p242 = scmp.lt.s32.totalorder %s241, 15
      %s243 = scalar_select %p242, %s241, 15
      %s244 = smul.addr %s243, 4
      %s245 = scalar_lea.vmem %s5, %s244
      %s246 = smul.u32 4, %s16
      %p247 = scmp.lt.s32.totalorder %s246, 15
      %s248 = scalar_select %p247, %s246, 15
      %s249 = smul.addr %s248, 4
      %s250 = scalar_lea.vmem %s0, %s249
      %s251 = smul.u32 4, %s16
      %s252 = smul.u32 4, %s16
      %p253 = scmp.lt.s32.totalorder %s252, 15
      %s254 = scalar_select %p253, %s252, 15
      %s255 = scalar_lea.vmem %s3, %s254
      %s256 = smul.u32 4, %s16
      %s257 = smul.u32 4, %s16
      %p258 = scmp.lt.s32.totalorder %s257, 15
      %s259 = scalar_select %p258, %s257, 15
      %s260 = smul.addr %s259, 4
      %s261 = scalar_lea.vmem %s4, %s260
      %s262 = smul.u32 4, %s16
      %s263 = smul.u32 4, %s16
      %p264 = scmp.lt.s32.totalorder %s263, 15
      %s265 = scalar_select %p264, %s263, 15
      %s266 = smul.addr %s265, 4
      %s267 = scalar_lea.vmem %s5, %s266
      %s268 = smul.u32 4, %s16
      %v269 = vld [vmem:[%s250] sm:$0xff]
      %v270 = vld [vmem:[%s250 + $0x8] sm:$0xff]
      %v271 = vld [vmem:[%s1] sm:$0xf]
      %273 = vset.pattern.permute.xlu0 0
      %274 = vperm.xlu0 %273, %v271
      %v275 = vpop.permute.xlu0 %274
      %v277 = vunpack.c.l.s4 839922192
      %v278 = vunpack.c.0.s8 %v277
      %v279 = vlaneseq
      %v280 = vshrl.u32 %v279, 7
      %v281 = vsub.s32 %v278, %v280
      %v282 = vrot.slane %v275, %v281
      %v284 = vmul.f32 %v269, %v282
      %v285 = vmul.f32 %v270, %v282
      %v286 = vld [vmem:[%s2] sm:$0xf]
      %288 = vset.pattern.permute.xlu0 0
      %289 = vperm.xlu0 %288, %v286
      %v290 = vpop.permute.xlu0 %289
      %v292 = vunpack.c.l.s4 839922192
      %v293 = vunpack.c.0.s8 %v292
      %v294 = vlaneseq
      %v295 = vshrl.u32 %v294, 7
      %v296 = vsub.s32 %v293, %v295
      %v297 = vrot.slane %v290, %v296
      %v299 = vadd.f32 %v284, %v297
      %v300 = vadd.f32 %v285, %v297
      %vm301 = vcmp.gt.f32.partialorder %v299, 0.0
      %vm302 = vcmp.gt.f32.partialorder %v300, 0.0
      %v303 = vmin.f32 %v299, 0.0
      %v304 = vmin.f32 %v300, 0.0
      %v305 = vmul.f32 %v303, 1.442695
      %v306 = vpow.pop %v305
      %v307 = vmul.f32 %v304, 1.442695
      %v308 = vpow.pop %v307
      %v309 = vsub.f32 %v306, 1.0
      %v310 = vsub.f32 %v308, 1.0
      %v311 = vsel %vm301, %v299, %v309
      %v312 = vsel %vm302, %v300, %v310
      %v313 = vld [vmem:[%s261] sm:$0xff]
      %v314 = vld [vmem:[%s261 + $0x8] sm:$0xff]
      %v315 = vadd.f32 %v311, %v313
      %v316 = vadd.f32 %v312, %v314
      %v317 = vld [vmem:[%s255] sm:$0xf]
      %vm318 = vcmp.gt.f32.partialorder %v317, 0.5
      %v319 = vsel %vm318, 1, 0
      %v320 = vlaneseq
      %v321 = vshrl.u32 %v320, 7
      %v322 = vsub.s32 0, %v321
      %v323 = vrot.slane %v319, %v322
      %v324 = vlaneseq
      %v325 = vshrl.u32 %v324, 7
      %v326 = vsub.s32 1, %v325
      %v327 = vrot.slane %v319, %v326
      %v328 = vlaneseq
      %v329 = vshrl.u32 %v328, 7
      %v330 = vsub.s32 2, %v329
      %v331 = vrot.slane %v319, %v330
      %v332 = vlaneseq
      %v333 = vshrl.u32 %v332, 7
      %v334 = vsub.s32 3, %v333
      %v335 = vrot.slane %v319, %v334
      %vm336 = vcmp.eq.s32.totalorder %v323, 1
      %vm337 = vcmp.eq.s32.totalorder %v327, 1
      %vm338 = vcmp.eq.s32.totalorder %v331, 1
      %vm339 = vcmp.eq.s32.totalorder %v335, 1
      %v342 = vcombine.high %v315, %v315
      %v343 = vcombine.high %v316, %v316
      %v346 = vsel %vm336, %v315, 0.0
      %v347 = vsel %vm337, %v342, 0.0
      %v348 = vsel %vm338, %v316, 0.0
      %v349 = vsel %vm339, %v343, 0.0
      %v354 = vcombine.low %v346, %v347
      %v355 = vcombine.low %v348, %v349
      %358 = vst [vmem:[%s267] sm:$0xff] %v354
      %359 = vst [vmem:[%s267 + $0x8] sm:$0xff] %v355
      %s360 = smul.u32 4, %s16
      %p361 = scmp.lt.s32.totalorder %s360, 15
      %s362 = scalar_select %p361, %s360, 15
      %s363 = smul.addr %s362, 4
      %s364 = scalar_lea.vmem %s5, %s363
      // Predicated region
      $region41: #{voxception_resnet_forward.13} parent=39 // pred_check
        %p365 = pneg %p154
      $region42: #{voxception_resnet_forward.13} parent=39 // pred_check_branch
        %367 = sbr.rel (%p365) target = $region44
      $region43: #{voxception_resnet_forward.13} parent=39 // pred_region
        %s368 = smul.u32 4, %s16
      $region44: #{voxception_resnet_forward.13} parent=39 // pred_fallthru
        _
    $region40: #{voxception_resnet_forward.13} parent=5 // pred_fallthru
      _
    %p369 = scmp.le.s32.totalorder 2, %s11
    // Predicated region
    $region45: #{voxception_resnet_forward.13} parent=5 // pred_check
      %p370 = pneg %p369
    $region46: #{voxception_resnet_forward.13} parent=5 // pred_check_branch
      %372 = sbr.rel (%p370) target = $region48
    $region47: #{voxception_resnet_forward.13} parent=5 // pred_region
      %s373 = ssub.s32 %s11, 2
      // Predicated region
      $region49: #{voxception_resnet_forward.13} parent=47 // pred_check
        %p374 = pneg %p160
      $region50: #{voxception_resnet_forward.13} parent=47 // pred_check_branch
        %376 = sbr.rel (%p374) target = $region52
      $region51: #{voxception_resnet_forward.13} parent=47 // pred_region
        %s377 = smul.u32 4, %s17
        %p378 = scmp.lt.s32.totalorder %s377, 15
        %s379 = scalar_select %p378, %s377, 15
        %s380 = smul.addr %s379, 4
        %s381 = scalar_lea.vmem %s5, %s380
      $region52: #{voxception_resnet_forward.13} parent=47 // pred_fallthru
        _
    $region48: #{voxception_resnet_forward.13} parent=5 // pred_fallthru
      _
  $region6: #{voxception_resnet_forward.13} parent=0 // loop_footer
    %s15 = sadd.s32 1, %s11
  $region7: #{voxception_resnet_forward.13} parent=0 // loop_footer_branch
    %10 = sbr.rel target = $region3
  $region8: #{voxception_resnet_forward.13} parent=0 // loop_exit
    _

// kernel: voxception_resnet_forward.10
$region0: #{voxception_resnet_forward.10}
  #allocation0 [shape = 'u32[]', space=smem, size = 0x4, offset = 0x4, fixed_abs, tag = 'smem constant byte address 0x4 - core index']
  #allocation1 [shape = 'u32[144,128]{1,0:T(1,128)}', space=vmem, size = 0x12000, scoped, tag = 'internal scratch']
  %s0 = inlined_call_operand.vmem [shape: f32[8,2048], index: 0, kind: input, shape index: {}]
  %s1 = inlined_call_operand.vmem [shape: f32[4,1], index: 1, kind: input, shape index: {}]
  %s2 = inlined_call_operand.vmem [shape: f32[4,1], index: 2, kind: input, shape index: {}]
  %s3 = inlined_call_operand.vmem [shape: f32[1,2048], index: 3, kind: input, shape index: {}]
  %s4 = inlined_call_operand.vmem [shape: f32[4,2048], index: 4, kind: input, shape index: {}]
  %s5 = inlined_call_operand.vmem [shape: f32[4,2048], index: 5, kind: output, shape index: {}]
  %s6 = sld [smem:[#allocation0]]
  $region53: #{voxception_resnet_forward.10} parent=0
    _
  %s8 = ssub.s32 1, %s6
  %s9 = scalar_select 0, %s8, %s6
  loop: start=0, step=1, limit=6
  $region2: #{voxception_resnet_forward.10} parent=0 // loop_pre_header
    _
  $region3: #{voxception_resnet_forward.10} parent=0 // loop_header
    %s11 = sphi 0, %s15
    %p12 = scmp.ge.s32.totalorder %s11, 6
    %s21 = sphi 0, %s23
    %s24 = sphi 0, %s21
    %s25 = sphi 0, %s24
    %s41 = sphi 0, %s25
    %s45 = sphi 0, %s45
    %s47 = sphi 0, %s45
    %s48 = sphi 0, %s47
    %s62 = sphi 0, %s48
    %s66 = sphi 0, %s66
    %s68 = sphi 0, %s66
    %s69 = sphi 0, %s68
    %s83 = sphi 0, %s69
    %s89 = sphi 0, %s91
    %s92 = sphi 0, %s89
    %s93 = sphi 0, %s92
    %s109 = sphi 0, %s93
    %s115 = sphi 0, %s117
    %s118 = sphi 0, %s115
    %s119 = sphi 0, %s118
    %s135 = sphi 0, %s119
    %s141 = sphi 0, %s143
    %s144 = sphi 0, %s141
    %s145 = sphi 0, %s144
    %s161 = sphi 0, %s145
  $region4: #{voxception_resnet_forward.10} parent=0 // loop_header_branch
    %14 = sbr.rel (%p12) target = $region8
  $region5: #{voxception_resnet_forward.10} parent=0 // loop_body
    %s16 = ssub.s32 %s11, 1
    %s17 = ssub.s32 %s11, 2
    %s18 = sadd.s32 %s11, 1
    %s19 = ssub.s32 %s11, %s18
    %p20 = scmp.eq.s32.totalorder %s19, 0
    %s22 = sadd.s32 %s21, 1
    %s23 = scalar_select %p20, %s21, %s22
    %p26 = pneg %p20
    %p27 = scmp.eq.s32.totalorder %s11, 3
    %p28 = por %p26, %p27
    %p29 = scmp.ne.s32.totalorder %s21, %s24
    %p30 = scmp.eq.s32.totalorder %s11, 0
    %p31 = por %p29, %p30
    %p32 = scmp.ne.s32.totalorder %s21, %s24
    %p33 = scmp.eq.s32.totalorder %s16, 3
    %p34 = por %p32, %p33
    %p35 = scmp.ne.s32.totalorder %s24, %s25
    %p36 = scmp.eq.s32.totalorder %s16, 0
    %p37 = por %p35, %p36
    %p38 = scmp.ne.s32.totalorder %s24, %s25
    %p39 = scmp.eq.s32.totalorder %s17, 3
    %p40 = por %p38, %p39
    %p42 = scmp.ne.s32.totalorder %s25, %s41
    %p43 = scmp.eq.s32.totalorder %s17, 0
    %p44 = por %p42, %p43
    %s46 = sadd.s32 %s45, 1
    %p49 = scmp.eq.s32.totalorder %s11, 3
    %p50 = scmp.ne.s32.totalorder %s45, %s47
    %p51 = scmp.eq.s32.totalorder %s11, 0
    %p52 = por %p50, %p51
    %p53 = scmp.ne.s32.totalorder %s45, %s47
    %p54 = scmp.eq.s32.totalorder %s16, 3
    %p55 = por %p53, %p54
    %p56 = scmp.ne.s32.totalorder %s47, %s48
    %p57 = scmp.eq.s32.totalorder %s16, 0
    %p58 = por %p56, %p57
    %p59 = scmp.ne.s32.totalorder %s47, %s48
    %p60 = scmp.eq.s32.totalorder %s17, 3
    %p61 = por %p59, %p60
    %p63 = scmp.ne.s32.totalorder %s48, %s62
    %p64 = scmp.eq.s32.totalorder %s17, 0
    %p65 = por %p63, %p64
    %s67 = sadd.s32 %s66, 1
    %p70 = scmp.eq.s32.totalorder %s11, 3
    %p71 = scmp.ne.s32.totalorder %s66, %s68
    %p72 = scmp.eq.s32.totalorder %s11, 0
    %p73 = por %p71, %p72
    %p74 = scmp.ne.s32.totalorder %s66, %s68
    %p75 = scmp.eq.s32.totalorder %s16, 3
    %p76 = por %p74, %p75
    %p77 = scmp.ne.s32.totalorder %s68, %s69
    %p78 = scmp.eq.s32.totalorder %s16, 0
    %p79 = por %p77, %p78
    %p80 = scmp.ne.s32.totalorder %s68, %s69
    %p81 = scmp.eq.s32.totalorder %s17, 3
    %p82 = por %p80, %p81
    %p84 = scmp.ne.s32.totalorder %s69, %s83
    %p85 = scmp.eq.s32.totalorder %s17, 0
    %p86 = por %p84, %p85
    %s87 = ssub.s32 %s11, %s18
    %p88 = scmp.eq.s32.totalorder %s87, 0
    %s90 = sadd.s32 %s89, 1
    %s91 = scalar_select %p88, %s89, %s90
    %p94 = pneg %p88
    %p95 = scmp.eq.s32.totalorder %s11, 3
    %p96 = por %p94, %p95
    %p97 = scmp.ne.s32.totalorder %s89, %s92
    %p98 = scmp.eq.s32.totalorder %s11, 0
    %p99 = por %p97, %p98
    %p100 = scmp.ne.s32.totalorder %s89, %s92
    %p101 = scmp.eq.s32.totalorder %s16, 3
    %p102 = por %p100, %p101
    %p103 = scmp.ne.s32.totalorder %s92, %s93
    %p104 = scmp.eq.s32.totalorder %s16, 0
    %p105 = por %p103, %p104
    %p106 = scmp.ne.s32.totalorder %s92, %s93
    %p107 = scmp.eq.s32.totalorder %s17, 3
    %p108 = por %p106, %p107
    %p110 = scmp.ne.s32.totalorder %s93, %s109
    %p111 = scmp.eq.s32.totalorder %s17, 0
    %p112 = por %p110, %p111
    %s113 = ssub.s32 %s11, %s18
    %p114 = scmp.eq.s32.totalorder %s113, 0
    %s116 = sadd.s32 %s115, 1
    %s117 = scalar_select %p114, %s115, %s116
    %p120 = pneg %p114
    %p121 = scmp.eq.s32.totalorder %s11, 3
    %p122 = por %p120, %p121
    %p123 = scmp.ne.s32.totalorder %s115, %s118
    %p124 = scmp.eq.s32.totalorder %s11, 0
    %p125 = por %p123, %p124
    %p126 = scmp.ne.s32.totalorder %s115, %s118
    %p127 = scmp.eq.s32.totalorder %s16, 3
    %p128 = por %p126, %p127
    %p129 = scmp.ne.s32.totalorder %s118, %s119
    %p130 = scmp.eq.s32.totalorder %s16, 0
    %p131 = por %p129, %p130
    %p132 = scmp.ne.s32.totalorder %s118, %s119
    %p133 = scmp.eq.s32.totalorder %s17, 3
    %p134 = por %p132, %p133
    %p136 = scmp.ne.s32.totalorder %s119, %s135
    %p137 = scmp.eq.s32.totalorder %s17, 0
    %p138 = por %p136, %p137
    %s139 = ssub.s32 %s11, %s18
    %p140 = scmp.eq.s32.totalorder %s139, 0
    %s142 = sadd.s32 %s141, 1
    %s143 = scalar_select %p140, %s141, %s142
    %p146 = pneg %p140
    %p147 = scmp.eq.s32.totalorder %s11, 3
    %p148 = por %p146, %p147
    %p149 = scmp.ne.s32.totalorder %s141, %s144
    %p150 = scmp.eq.s32.totalorder %s11, 0
    %p151 = por %p149, %p150
    %p152 = scmp.ne.s32.totalorder %s141, %s144
    %p153 = scmp.eq.s32.totalorder %s16, 3
    %p154 = por %p152, %p153
    %p155 = scmp.ne.s32.totalorder %s144, %s145
    %p156 = scmp.eq.s32.totalorder %s16, 0
    %p157 = por %p155, %p156
    %p158 = scmp.ne.s32.totalorder %s144, %s145
    %p159 = scmp.eq.s32.totalorder %s17, 3
    %p160 = por %p158, %p159
    %p162 = scmp.ne.s32.totalorder %s145, %s161
    %p163 = scmp.eq.s32.totalorder %s17, 0
    %p164 = por %p162, %p163
    %p165 = scmp.le.s32.totalorder 1, %s11
    %p166 = scmp.lt.s32.totalorder %s11, 5
    %p167 = pnand %p165, %p166
    %p168 = pneg %p167
    // Predicated region
    $region9: #{voxception_resnet_forward.10} parent=5 // pred_check
      _
    $region10: #{voxception_resnet_forward.10} parent=5 // pred_check_branch
      %170 = sbr.rel (%p167) target = $region12
    $region11: #{voxception_resnet_forward.10} parent=5 // pred_region
      %s171 = ssub.s32 %s11, 1
      // Predicated region
      $region13: #{voxception_resnet_forward.10} parent=11 // pred_check
        %p172 = pneg %p58
      $region14: #{voxception_resnet_forward.10} parent=11 // pred_check_branch
        %174 = sbr.rel (%p172) target = $region16
      $region15: #{voxception_resnet_forward.10} parent=11 // pred_region
        _
      $region16: #{voxception_resnet_forward.10} parent=11 // pred_fallthru
        _
      // Predicated region
      $region17: #{voxception_resnet_forward.10} parent=11 // pred_check
        %p175 = pneg %p79
      $region18: #{voxception_resnet_forward.10} parent=11 // pred_check_branch
        %177 = sbr.rel (%p175) target = $region20
      $region19: #{voxception_resnet_forward.10} parent=11 // pred_region
        _
      $region20: #{voxception_resnet_forward.10} parent=11 // pred_fallthru
        _
    $region12: #{voxception_resnet_forward.10} parent=5 // pred_fallthru
      _
    %p178 = scmp.lt.s32.totalorder %s11, 4
    // Predicated region
    $region21: #{voxception_resnet_forward.10} parent=5 // pred_check
      %p179 = pneg %p178
    $region22: #{voxception_resnet_forward.10} parent=5 // pred_check_branch
      %181 = sbr.rel (%p179) target = $region24
    $region23: #{voxception_resnet_forward.10} parent=5 // pred_region
      // Predicated region
      $region25: #{voxception_resnet_forward.10} parent=23 // pred_check
        %p182 = pneg %p31
      $region26: #{voxception_resnet_forward.10} parent=23 // pred_check_branch
        %184 = sbr.rel (%p182) target = $region28
      $region27: #{voxception_resnet_forward.10} parent=23 // pred_region
        %s185 = smul.u32 4, %s11
        %p186 = scmp.lt.s32.totalorder %s185, 15
        %s187 = scalar_select %p186, %s185, 15
        %s188 = smul.addr %s187, 8
        %s189 = scalar_lea.vmem %s0, %s188
        %s190 = smul.u32 4, %s11
      $region28: #{voxception_resnet_forward.10} parent=23 // pred_fallthru
        _
      // Predicated region
      $region29: #{voxception_resnet_forward.10} parent=23 // pred_check
        %p191 = pneg %p99
      $region30: #{voxception_resnet_forward.10} parent=23 // pred_check_branch
        %193 = sbr.rel (%p191) target = $region32
      $region31: #{voxception_resnet_forward.10} parent=23 // pred_region
        %s194 = smul.u32 4, %s11
        %p195 = scmp.lt.s32.totalorder %s194, 15
        %s196 = scalar_select %p195, %s194, 15
        %s197 = scalar_lea.vmem %s3, %s196
        %s198 = smul.u32 4, %s11
      $region32: #{voxception_resnet_forward.10} parent=23 // pred_fallthru
        _
      // Predicated region
      $region33: #{voxception_resnet_forward.10} parent=23 // pred_check
        %p199 = pneg %p125
      $region34: #{voxception_resnet_forward.10} parent=23 // pred_check_branch
        %201 = sbr.rel (%p199) target = $region36
      $region35: #{voxception_resnet_forward.10} parent=23 // pred_region
        %s202 = smul.u32 4, %s11
        %p203 = scmp.lt.s32.totalorder %s202, 15
        %s204 = scalar_select %p203, %s202, 15
        %s205 = smul.addr %s204, 4
        %s206 = scalar_lea.vmem %s4, %s205
        %s207 = smul.u32 4, %s11
      $region36: #{voxception_resnet_forward.10} parent=23 // pred_fallthru
        _
    $region24: #{voxception_resnet_forward.10} parent=5 // pred_fallthru
      _
    %p208 = scmp.le.s32.totalorder 1, %s11
    %p209 = scmp.lt.s32.totalorder %s11, 5
    %p210 = pnand %p208, %p209
    %p211 = pneg %p210
    // Predicated region
    $region37: #{voxception_resnet_forward.10} parent=5 // pred_check
      _
    $region38: #{voxception_resnet_forward.10} parent=5 // pred_check_branch
      %213 = sbr.rel (%p210) target = $region40
    $region39: #{voxception_resnet_forward.10} parent=5 // pred_region
      %s214 = ssub.s32 %s11, 1
      %s215 = smul.u32 4, %s16
      %p216 = scmp.lt.s32.totalorder %s215, 15
      %s217 = scalar_select %p216, %s215, 15
      %s218 = smul.addr %s217, 8
      %s219 = scalar_lea.vmem %s0, %s218
      %p220 = pneg %p37
      %p221 = pneg %p34
      %p222 = pneg %p58
      %p223 = pneg %p55
      %p224 = pneg %p79
      %p225 = pneg %p76
      %s226 = smul.u32 4, %s16
      %p227 = scmp.lt.s32.totalorder %s226, 15
      %s228 = scalar_select %p227, %s226, 15
      %s229 = scalar_lea.vmem %s3, %s228
      %p230 = pneg %p105
      %p231 = pneg %p102
      %s232 = smul.u32 4, %s16
      %p233 = scmp.lt.s32.totalorder %s232, 15
      %s234 = scalar_select %p233, %s232, 15
      %s235 = smul.addr %s234, 4
      %s236 = scalar_lea.vmem %s4, %s235
      %p237 = pneg %p131
      %p238 = pneg %p128
      %p239 = pneg %p157
      %p240 = pneg %p154
      %s241 = smul.u32 4, %s16
      %p242 = scmp.lt.s32.totalorder %s241, 15
      %s243 = scalar_select %p242, %s241, 15
      %s244 = smul.addr %s243, 4
      %s245 = scalar_lea.vmem %s5, %s244
      %s246 = smul.u32 4, %s16
      %p247 = scmp.lt.s32.totalorder %s246, 15
      %s248 = scalar_select %p247, %s246, 15
      %s249 = smul.addr %s248, 8
      %s250 = scalar_lea.vmem %s0, %s249
      %s251 = smul.u32 4, %s16
      %s252 = smul.u32 4, %s16
      %p253 = scmp.lt.s32.totalorder %s252, 15
      %s254 = scalar_select %p253, %s252, 15
      %s255 = scalar_lea.vmem %s3, %s254
      %s256 = smul.u32 4, %s16
      %s257 = smul.u32 4, %s16
      %p258 = scmp.lt.s32.totalorder %s257, 15
      %s259 = scalar_select %p258, %s257, 15
      %s260 = smul.addr %s259, 4
      %s261 = scalar_lea.vmem %s4, %s260
      %s262 = smul.u32 4, %s16
      %s263 = smul.u32 4, %s16
      %p264 = scmp.lt.s32.totalorder %s263, 15
      %s265 = scalar_select %p264, %s263, 15
      %s266 = smul.addr %s265, 4
      %s267 = scalar_lea.vmem %s5, %s266
      %s268 = smul.u32 4, %s16
      %v269 = vld [vmem:[%s250] sm:$0xf]
      %v270 = vld [vmem:[%s250 + $0x8] sm:$0xf]
      %v271 = vld [vmem:[%s250 + $0x10] sm:$0xf]
      %v272 = vld [vmem:[%s250 + $0x18] sm:$0xf]
      %v273 = vld [vmem:[%s1] sm:$0xf]
      %275 = vset.pattern.permute.xlu0 0
      %276 = vperm.xlu0 %275, %v273
      %v277 = vpop.permute.xlu0 %276
      %v279 = vmul.f32 %v269, %v277
      %v280 = vmul.f32 %v270, %v277
      %v281 = vmul.f32 %v271, %v277
      %v282 = vmul.f32 %v272, %v277
      %v283 = vld [vmem:[%s2] sm:$0xf]
      %285 = vset.pattern.permute.xlu0 0
      %286 = vperm.xlu0 %285, %v283
      %v287 = vpop.permute.xlu0 %286
      %v289 = vadd.f32 %v279, %v287
      %v290 = vadd.f32 %v280, %v287
      %v291 = vadd.f32 %v281, %v287
      %v292 = vadd.f32 %v282, %v287
      %vm293 = vcmp.gt.f32.partialorder %v289, 0.0
      %vm294 = vcmp.gt.f32.partialorder %v290, 0.0
      %vm295 = vcmp.gt.f32.partialorder %v291, 0.0
      %vm296 = vcmp.gt.f32.partialorder %v292, 0.0
      %v297 = vmin.f32 %v289, 0.0
      %v298 = vmin.f32 %v290, 0.0
      %v299 = vmin.f32 %v291, 0.0
      %v300 = vmin.f32 %v292, 0.0
      %v301 = vmul.f32 %v297, 1.442695
      %v302 = vpow.pop %v301
      %v303 = vmul.f32 %v298, 1.442695
      %v304 = vpow.pop %v303
      %v305 = vmul.f32 %v299, 1.442695
      %v306 = vpow.pop %v305
      %v307 = vmul.f32 %v300, 1.442695
      %v308 = vpow.pop %v307
      %v309 = vsub.f32 %v302, 1.0
      %v310 = vsub.f32 %v304, 1.0
      %v311 = vsub.f32 %v306, 1.0
      %v312 = vsub.f32 %v308, 1.0
      %v313 = vsel %vm293, %v289, %v309
      %v314 = vsel %vm294, %v290, %v310
      %v315 = vsel %vm295, %v291, %v311
      %v316 = vsel %vm296, %v292, %v312
      %v317 = vld [vmem:[%s261] sm:$0xff]
      %v318 = vld [vmem:[%s261 + $0x8] sm:$0xff]
      %v321 = vcombine.high %v317, %v317
      %v322 = vcombine.high %v318, %v318
      %v325 = vadd.f32 %v313, %v317
      %v326 = vadd.f32 %v314, %v321
      %v327 = vadd.f32 %v315, %v318
      %v328 = vadd.f32 %v316, %v322
      %v329 = vld [vmem:[%s255] sm:$0xf]
      %vm330 = vcmp.gt.f32.partialorder %v329, 0.5
      %v331 = vsel %vm330, 1, 0
      %v332 = vlaneseq
      %v333 = vshrl.u32 %v332, 7
      %v334 = vsub.s32 0, %v333
      %v335 = vrot.slane %v331, %v334
      %v336 = vlaneseq
      %v337 = vshrl.u32 %v336, 7
      %v338 = vsub.s32 1, %v337
      %v339 = vrot.slane %v331, %v338
      %v340 = vlaneseq
      %v341 = vshrl.u32 %v340, 7
      %v342 = vsub.s32 2, %v341
      %v343 = vrot.slane %v331, %v342
      %v344 = vlaneseq
      %v345 = vshrl.u32 %v344, 7
      %v346 = vsub.s32 3, %v345
      %v347 = vrot.slane %v331, %v346
      %vm348 = vcmp.eq.s32.totalorder %v335, 1
      %vm349 = vcmp.eq.s32.totalorder %v339, 1
      %vm350 = vcmp.eq.s32.totalorder %v343, 1
      %vm351 = vcmp.eq.s32.totalorder %v347, 1
      %v352 = vsel %vm348, %v325, 0.0
      %v353 = vsel %vm349, %v326, 0.0
      %v354 = vsel %vm350, %v327, 0.0
      %v355 = vsel %vm351, %v328, 0.0
      %v360 = vcombine.low %v352, %v353
      %v361 = vcombine.low %v354, %v355
      %364 = vst [vmem:[%s267] sm:$0xff] %v360
      %365 = vst [vmem:[%s267 + $0x8] sm:$0xff] %v361
      %s366 = smul.u32 4, %s16
      %p367 = scmp.lt.s32.totalorder %s366, 15
      %s368 = scalar_select %p367, %s366, 15
      %s369 = smul.addr %s368, 4
      %s370 = scalar_lea.vmem %s5, %s369
      // Predicated region
      $region41: #{voxception_resnet_forward.10} parent=39 // pred_check
        %p371 = pneg %p154
      $region42: #{voxception_resnet_forward.10} parent=39 // pred_check_branch
        %373 = sbr.rel (%p371) target = $region44
      $region43: #{voxception_resnet_forward.10} parent=39 // pred_region
        %s374 = smul.u32 4, %s16
      $region44: #{voxception_resnet_forward.10} parent=39 // pred_fallthru
        _
    $region40: #{voxception_resnet_forward.10} parent=5 // pred_fallthru
      _
    %p375 = scmp.le.s32.totalorder 2, %s11
    // Predicated region
    $region45: #{voxception_resnet_forward.10} parent=5 // pred_check
      %p376 = pneg %p375
    $region46: #{voxception_resnet_forward.10} parent=5 // pred_check_branch
      %378 = sbr.rel (%p376) target = $region48
    $region47: #{voxception_resnet_forward.10} parent=5 // pred_region
      %s379 = ssub.s32 %s11, 2
      // Predicated region
      $region49: #{voxception_resnet_forward.10} parent=47 // pred_check
        %p380 = pneg %p160
      $region50: #{voxception_resnet_forward.10} parent=47 // pred_check_branch
        %382 = sbr.rel (%p380) target = $region52
      $region51: #{voxception_resnet_forward.10} parent=47 // pred_region
        %s383 = smul.u32 4, %s17
        %p384 = scmp.lt.s32.totalorder %s383, 15
        %s385 = scalar_select %p384, %s383, 15
        %s386 = smul.addr %s385, 4
        %s387 = scalar_lea.vmem %s5, %s386
      $region52: #{voxception_resnet_forward.10} parent=47 // pred_fallthru
        _
    $region48: #{voxception_resnet_forward.10} parent=5 // pred_fallthru
      _
  $region6: #{voxception_resnet_forward.10} parent=0 // loop_footer
    %s15 = sadd.s32 1, %s11
  $region7: #{voxception_resnet_forward.10} parent=0 // loop_footer_branch
    %10 = sbr.rel target = $region3
  $region8: #{voxception_resnet_forward.10} parent=0 // loop_exit
    _

</llo_original>
